<compile_context>
chip_gen: v6e
topology: v6e:2x2x1
jax: 0.10.0
libtpu: 0.0.40
codegen_flags: <defaults>
</compile_context>

<pallas_src>
import jax
import jax.numpy as jnp
from jax.experimental import pallas as pl
from jax.experimental.pallas import tpu as pltpu


def _make_attention_kernel(n_heads: int, head_dim: int, seq_len: int, hid_dim: int):
    inv_scale = 1.0 / (float(head_dim) ** 0.5)

    def kernel(q_ref, k_ref, v_ref,
               wq_ref, bq_ref, wk_ref, bk_ref, wv_ref, bv_ref,
               wo_ref, bo_ref, o_ref):
        # Leading batch dim is squeezed by the BlockSpec: all q/k/v refs are (S, D).
        q = q_ref[...]
        k = k_ref[...]
        v = v_ref[...]

        # --- Q/K/V projections: full-width (S,D)x(D,D) MXU matmuls, f32 accumulate.
        #     1/sqrt(head_dim) is folded into Q here (S*D multiplies once) instead
        #     of dividing the (H,S,S) energy tensor.
        Q = (jnp.dot(q, wq_ref[...], preferred_element_type=jnp.float32)
             + bq_ref[...]) * inv_scale
        K = jnp.dot(k, wk_ref[...], preferred_element_type=jnp.float32) + bk_ref[...]
        V = jnp.dot(v, wv_ref[...], preferred_element_type=jnp.float32) + bv_ref[...]

        # --- Head-major (H, S, dh) stacks: lane slices stacked along the outer
        #     (major-most) axis; cheap, and lets all heads go through a single
        #     batched dot_general instead of H tiny matmuls.
        def to_heads(x):
            return jnp.stack(
                [x[:, h * head_dim:(h + 1) * head_dim] for h in range(n_heads)],
                axis=0)

        Qh = to_heads(Q)
        Kh = to_heads(K)
        Vh = to_heads(V)

        # --- Attention over all heads at once; contraction on head_dim with the
        #     head axis as the dot_general batch dim (no explicit K transpose).
        energy = jnp.einsum("hqd,hkd->hqk", Qh, Kh,
                            preferred_element_type=jnp.float32)        # (H, S, S)

        # Numerically-stable softmax; reciprocal goes to the EUP slot.
        m = jnp.max(energy, axis=-1, keepdims=True)
        e = jnp.exp(energy - m)
        denom = jnp.sum(e, axis=-1, keepdims=True)
        attn = e * pl.reciprocal(denom, approx=True)
        # TODO(synk): dropout on `attn` is identity (eval/inference mode); no RNG drop.

        ctx = jnp.einsum("hqk,hkd->hqd", attn, Vh,
                         preferred_element_type=jnp.float32)           # (H, S, dh)

        # --- Output projection accumulated per head (no lane-dim concatenation):
        #     out += ctx_h @ Wo[h*dh:(h+1)*dh, :]   (extra MXU accumulates).
        Wo = wo_ref[...]                                               # (D, D)
        acc = jnp.zeros((seq_len, hid_dim), jnp.float32)
        for h in range(n_heads):
            lo = h * head_dim
            acc = acc + jnp.dot(ctx[h], Wo[lo:lo + head_dim, :],
                                preferred_element_type=jnp.float32)

        o_ref[...] = (acc + bo_ref[...]).astype(o_ref.dtype)

    return kernel


def _build_pallas_call(B, S, D, n_heads, dtype, single_buffer_weights: bool):
    kernel = _make_attention_kernel(n_heads, D // n_heads, S, D)

    # Grid-invariant weights/biases: single-buffer them (their index_map is
    # constant, so double-buffering only wastes VMEM — matters for real D).
    wkw = dict(pipeline_mode=pl.Buffered(1)) if single_buffer_weights else {}

    # Leading size-1 batch dim squeezed (None) -> kernel refs are (S, D).
    qkv_spec = pl.BlockSpec((None, S, D), lambda b: (b, 0, 0))
    w_spec = pl.BlockSpec((D, D), lambda b: (0, 0), **wkw)
    b_spec = pl.BlockSpec((1, D), lambda b: (0, 0), **wkw)
    out_spec = pl.BlockSpec((None, S, D), lambda b: (b, 0, 0))

    # Advisory cost estimate: 3 in-proj + 1 out-proj + QK^T + attn@V per batch.
    flops = B * (8 * S * D * D + 4 * S * S * D)
    transcendentals = B * n_heads * S * S                # exp in softmax
    bytes_accessed = 4 * (4 * B * S * D + 4 * D * D + 4 * D)

    return pl.pallas_call(
        kernel,
        out_shape=jax.ShapeDtypeStruct((B, S, D), dtype),
        grid_spec=pltpu.PrefetchScalarGridSpec(
            num_scalar_prefetch=0,
            # One batch element per grid step; "parallel" lets the two v7x
            # TensorCores split the batch. For larger B, tile several sequences
            # per step to amortize the ~0.35 us per-step overhead.
            grid=(B,),
            in_specs=[
                qkv_spec, qkv_spec, qkv_spec,
                w_spec, b_spec,   # w_q
                w_spec, b_spec,   # w_k
                w_spec, b_spec,   # w_v
                w_spec, b_spec,   # fc
            ],
            out_specs=out_spec,
        ),
        compiler_params=pltpu.CompilerParams(
            dimension_semantics=("parallel",),
            vmem_limit_bytes=64 * 1024 * 1024),
        cost_estimate=pl.CostEstimate(
            flops=flops,
            transcendentals=transcendentals,
            bytes_accessed=bytes_accessed),
    )


def self_attention_pallas(q, k, v, params, n_heads):
    """q, k, v: [B, S, D].  params: dict of pre-transposed weights / biases."""
    B, S, D = q.shape
    args = (q, k, v,
            params["wq_t"], params["bq"],
            params["wk_t"], params["bk"],
            params["wv_t"], params["bv"],
            params["wo_t"], params["bo"])
    try:
        fn = _build_pallas_call(B, S, D, n_heads, q.dtype, single_buffer_weights=True)
        return jax.block_until_ready(fn(*args))
    except Exception:
        # Fallback: default (double) buffering if pl.Buffered(1) is rejected by
        # this jax build — correctness identical, only weight VMEM footprint grows.
        fn = _build_pallas_call(B, S, D, n_heads, q.dtype, single_buffer_weights=False)
        return jax.block_until_ready(fn(*args))


def self_attention_ref(q, k, v, params, n_heads):
    """Pure-JAX reference mirroring the PyTorch forward (mask=None, eval dropout)."""
    B, S, D = q.shape
    dh = D // n_heads
    scale = jnp.sqrt(jnp.float32(dh))

    def proj(x, w_t, b):
        return x @ w_t + b

    Q = proj(q, params["wq_t"], params["bq"])
    K = proj(k, params["wk_t"], params["bk"])
    V = proj(v, params["wv_t"], params["bv"])

    Q = Q.reshape(B, S, n_heads, dh).transpose(0, 2, 1, 3)
    K = K.reshape(B, S, n_heads, dh).transpose(0, 2, 1, 3)
    V = V.reshape(B, S, n_heads, dh).transpose(0, 2, 1, 3)

    energy = jnp.einsum("bhqd,bhkd->bhqk", Q, K) / scale
    attn = jax.nn.softmax(energy, axis=-1)
    x = jnp.einsum("bhqk,bhkd->bhqd", attn, V)
    x = x.transpose(0, 2, 1, 3).reshape(B, S, D)
    return x @ params["wo_t"] + params["bo"]


def init_params(key, hid_dim):
    """Deterministic init matching nn.Linear shapes (weight: [out,in], bias: [out])."""
    ks = jax.random.split(key, 8)
    bound = 1.0 / (hid_dim ** 0.5)

    def lin(kw, kb):
        w = jax.random.uniform(kw, (hid_dim, hid_dim), jnp.float32, -bound, bound)
        b = jax.random.uniform(kb, (hid_dim,), jnp.float32, -bound, bound)
        return w, b

    wq, bq = lin(ks[0], ks[1])
    wk, bk = lin(ks[2], ks[3])
    wv, bv = lin(ks[4], ks[5])
    wo, bo = lin(ks[6], ks[7])
    return {
        "wq_t": wq.T, "bq": bq.reshape(1, hid_dim),
        "wk_t": wk.T, "bk": bk.reshape(1, hid_dim),
        "wv_t": wv.T, "bv": bv.reshape(1, hid_dim),
        "wo_t": wo.T, "bo": bo.reshape(1, hid_dim),
    }


if __name__ == "__main__":
    B, S, D = 2, 8, 32
    N_HEADS = 4

    key = jax.random.PRNGKey(0)
    kq, kk, kv, kp = jax.random.split(key, 4)
    q = jax.random.normal(kq, (B, S, D), jnp.float32)
    k = jax.random.normal(kk, (B, S, D), jnp.float32)
    v = jax.random.normal(kv, (B, S, D), jnp.float32)
    params = init_params(kp, D)

    out = self_attention_pallas(q, k, v, params, N_HEADS)
    out = jax.block_until_ready(out)

    ref = self_attention_ref(q, k, v, params, N_HEADS)
    assert out.shape == (B, S, D)
    # Tolerance accounts for the EUP approximate reciprocal in the softmax.
    assert jnp.allclose(out, ref, atol=2e-3, rtol=2e-3), "mismatch vs reference"

    print("KERNEL_OK")
</pallas_src>

<mosaic_0001>
module attributes {stable_mosaic.version = 11 : i64} {
  func.func @kernel(%arg0: i32, %arg1: memref<1x8x32xf32, #tpu.memory_space<vmem>>, %arg2: memref<1x8x32xf32, #tpu.memory_space<vmem>>, %arg3: memref<1x8x32xf32, #tpu.memory_space<vmem>>, %arg4: memref<32x32xf32, #tpu.memory_space<vmem>>, %arg5: memref<1x32xf32, #tpu.memory_space<vmem>>, %arg6: memref<32x32xf32, #tpu.memory_space<vmem>>, %arg7: memref<1x32xf32, #tpu.memory_space<vmem>>, %arg8: memref<32x32xf32, #tpu.memory_space<vmem>>, %arg9: memref<1x32xf32, #tpu.memory_space<vmem>>, %arg10: memref<32x32xf32, #tpu.memory_space<vmem>>, %arg11: memref<1x32xf32, #tpu.memory_space<vmem>>, %arg12: memref<1x8x32xf32, #tpu.memory_space<vmem>>) attributes {dimension_semantics = [#tpu.dimension_semantics<parallel>], iteration_bounds = array<i64: 2>, scalar_prefetch = 0 : i64, scratch_operands = 0 : i64, tpu.core_type = #tpu.core_type<tc>, window_params = [{transform_indices = @transform_0, window_bounds = array<i64: 1, 8, 32>}, {transform_indices = @transform_1, window_bounds = array<i64: 1, 8, 32>}, {transform_indices = @transform_2, window_bounds = array<i64: 1, 8, 32>}, {pipeline_mode = #tpu.pipeline_mode<synchronous>, transform_indices = @transform_3, window_bounds = array<i64: 32, 32>}, {pipeline_mode = #tpu.pipeline_mode<synchronous>, transform_indices = @transform_4, window_bounds = array<i64: 1, 32>}, {pipeline_mode = #tpu.pipeline_mode<synchronous>, transform_indices = @transform_5, window_bounds = array<i64: 32, 32>}, {pipeline_mode = #tpu.pipeline_mode<synchronous>, transform_indices = @transform_6, window_bounds = array<i64: 1, 32>}, {pipeline_mode = #tpu.pipeline_mode<synchronous>, transform_indices = @transform_7, window_bounds = array<i64: 32, 32>}, {pipeline_mode = #tpu.pipeline_mode<synchronous>, transform_indices = @transform_8, window_bounds = array<i64: 1, 32>}, {pipeline_mode = #tpu.pipeline_mode<synchronous>, transform_indices = @transform_9, window_bounds = array<i64: 32, 32>}, {pipeline_mode = #tpu.pipeline_mode<synchronous>, transform_indices = @transform_10, window_bounds = array<i64: 1, 32>}, {transform_indices = @transform_11, window_bounds = array<i64: 1, 8, 32>}]} {
    %c0 = arith.constant 0 : index
    %c0_0 = arith.constant 0 : index
    %c0_1 = arith.constant 0 : index
    %0 = vector.load %arg1[%c0, %c0_0, %c0_1] : memref<1x8x32xf32, #tpu.memory_space<vmem>>, vector<1x8x32xf32>
    %1 = vector.shape_cast %0 : vector<1x8x32xf32> to vector<8x32xf32>
    %c0_2 = arith.constant 0 : index
    %c0_3 = arith.constant 0 : index
    %c0_4 = arith.constant 0 : index
    %2 = vector.load %arg2[%c0_2, %c0_3, %c0_4] : memref<1x8x32xf32, #tpu.memory_space<vmem>>, vector<1x8x32xf32>
    %3 = vector.shape_cast %2 : vector<1x8x32xf32> to vector<8x32xf32>
    %c0_5 = arith.constant 0 : index
    %c0_6 = arith.constant 0 : index
    %c0_7 = arith.constant 0 : index
    %4 = vector.load %arg3[%c0_5, %c0_6, %c0_7] : memref<1x8x32xf32, #tpu.memory_space<vmem>>, vector<1x8x32xf32>
    %5 = vector.shape_cast %4 : vector<1x8x32xf32> to vector<8x32xf32>
    %c0_8 = arith.constant 0 : index
    %c0_9 = arith.constant 0 : index
    %6 = vector.load %arg4[%c0_8, %c0_9] : memref<32x32xf32, #tpu.memory_space<vmem>>, vector<32x32xf32>
    %cst = arith.constant dense<0.000000e+00> : vector<8x32xf32>
    %7 = tpu.matmul %1, %6, %cst {dimension_numbers = #tpu.dot_dimension_numbers<[1], [0], [0], [1], [0, 0, 1, 1], [], []>} : vector<8x32xf32>, vector<32x32xf32>, vector<8x32xf32> -> vector<8x32xf32>
    %c0_10 = arith.constant 0 : index
    %c0_11 = arith.constant 0 : index
    %8 = vector.load %arg5[%c0_10, %c0_11] : memref<1x32xf32, #tpu.memory_space<vmem>>, vector<1x32xf32>
    %9 = vector.broadcast %8 : vector<1x32xf32> to vector<8x32xf32>
    %10 = arith.addf %7, %9 : vector<8x32xf32>
    %cst_12 = arith.constant 0.353553385 : f32
    %11 = vector.broadcast %cst_12 : f32 to vector<8x32xf32>
    %12 = arith.mulf %10, %11 : vector<8x32xf32>
    %c0_13 = arith.constant 0 : index
    %c0_14 = arith.constant 0 : index
    %13 = vector.load %arg6[%c0_13, %c0_14] : memref<32x32xf32, #tpu.memory_space<vmem>>, vector<32x32xf32>
    %cst_15 = arith.constant dense<0.000000e+00> : vector<8x32xf32>
    %14 = tpu.matmul %3, %13, %cst_15 {dimension_numbers = #tpu.dot_dimension_numbers<[1], [0], [0], [1], [0, 0, 1, 1], [], []>} : vector<8x32xf32>, vector<32x32xf32>, vector<8x32xf32> -> vector<8x32xf32>
    %c0_16 = arith.constant 0 : index
    %c0_17 = arith.constant 0 : index
    %15 = vector.load %arg7[%c0_16, %c0_17] : memref<1x32xf32, #tpu.memory_space<vmem>>, vector<1x32xf32>
    %16 = vector.broadcast %15 : vector<1x32xf32> to vector<8x32xf32>
    %17 = arith.addf %14, %16 : vector<8x32xf32>
    %c0_18 = arith.constant 0 : index
    %c0_19 = arith.constant 0 : index
    %18 = vector.load %arg8[%c0_18, %c0_19] : memref<32x32xf32, #tpu.memory_space<vmem>>, vector<32x32xf32>
    %cst_20 = arith.constant dense<0.000000e+00> : vector<8x32xf32>
    %19 = tpu.matmul %5, %18, %cst_20 {dimension_numbers = #tpu.dot_dimension_numbers<[1], [0], [0], [1], [0, 0, 1, 1], [], []>} : vector<8x32xf32>, vector<32x32xf32>, vector<8x32xf32> -> vector<8x32xf32>
    %c0_21 = arith.constant 0 : index
    %c0_22 = arith.constant 0 : index
    %20 = vector.load %arg9[%c0_21, %c0_22] : memref<1x32xf32, #tpu.memory_space<vmem>>, vector<1x32xf32>
    %21 = vector.broadcast %20 : vector<1x32xf32> to vector<8x32xf32>
    %22 = arith.addf %19, %21 : vector<8x32xf32>
    %23 = vector.extract_strided_slice %12 {offsets = [0, 0], sizes = [8, 8], strides = [1, 1]} : vector<8x32xf32> to vector<8x8xf32>
    %24 = vector.extract_strided_slice %12 {offsets = [0, 8], sizes = [8, 8], strides = [1, 1]} : vector<8x32xf32> to vector<8x8xf32>
    %25 = vector.extract_strided_slice %12 {offsets = [0, 16], sizes = [8, 8], strides = [1, 1]} : vector<8x32xf32> to vector<8x8xf32>
    %26 = vector.extract_strided_slice %12 {offsets = [0, 24], sizes = [8, 8], strides = [1, 1]} : vector<8x32xf32> to vector<8x8xf32>
    %27 = vector.shape_cast %23 : vector<8x8xf32> to vector<1x8x8xf32>
    %28 = vector.shape_cast %24 : vector<8x8xf32> to vector<1x8x8xf32>
    %29 = vector.shape_cast %25 : vector<8x8xf32> to vector<1x8x8xf32>
    %30 = vector.shape_cast %26 : vector<8x8xf32> to vector<1x8x8xf32>
    %31 = tpu.concatenate %27, %28, %29, %30 in 0 : vector<1x8x8xf32>, vector<1x8x8xf32>, vector<1x8x8xf32>, vector<1x8x8xf32> -> vector<4x8x8xf32>
    %32 = vector.extract_strided_slice %17 {offsets = [0, 0], sizes = [8, 8], strides = [1, 1]} : vector<8x32xf32> to vector<8x8xf32>
    %33 = vector.extract_strided_slice %17 {offsets = [0, 8], sizes = [8, 8], strides = [1, 1]} : vector<8x32xf32> to vector<8x8xf32>
    %34 = vector.extract_strided_slice %17 {offsets = [0, 16], sizes = [8, 8], strides = [1, 1]} : vector<8x32xf32> to vector<8x8xf32>
    %35 = vector.extract_strided_slice %17 {offsets = [0, 24], sizes = [8, 8], strides = [1, 1]} : vector<8x32xf32> to vector<8x8xf32>
    %36 = vector.shape_cast %32 : vector<8x8xf32> to vector<1x8x8xf32>
    %37 = vector.shape_cast %33 : vector<8x8xf32> to vector<1x8x8xf32>
    %38 = vector.shape_cast %34 : vector<8x8xf32> to vector<1x8x8xf32>
    %39 = vector.shape_cast %35 : vector<8x8xf32> to vector<1x8x8xf32>
    %40 = tpu.concatenate %36, %37, %38, %39 in 0 : vector<1x8x8xf32>, vector<1x8x8xf32>, vector<1x8x8xf32>, vector<1x8x8xf32> -> vector<4x8x8xf32>
    %41 = vector.extract_strided_slice %22 {offsets = [0, 0], sizes = [8, 8], strides = [1, 1]} : vector<8x32xf32> to vector<8x8xf32>
    %42 = vector.extract_strided_slice %22 {offsets = [0, 8], sizes = [8, 8], strides = [1, 1]} : vector<8x32xf32> to vector<8x8xf32>
    %43 = vector.extract_strided_slice %22 {offsets = [0, 16], sizes = [8, 8], strides = [1, 1]} : vector<8x32xf32> to vector<8x8xf32>
    %44 = vector.extract_strided_slice %22 {offsets = [0, 24], sizes = [8, 8], strides = [1, 1]} : vector<8x32xf32> to vector<8x8xf32>
    %45 = vector.shape_cast %41 : vector<8x8xf32> to vector<1x8x8xf32>
    %46 = vector.shape_cast %42 : vector<8x8xf32> to vector<1x8x8xf32>
    %47 = vector.shape_cast %43 : vector<8x8xf32> to vector<1x8x8xf32>
    %48 = vector.shape_cast %44 : vector<8x8xf32> to vector<1x8x8xf32>
    %49 = tpu.concatenate %45, %46, %47, %48 in 0 : vector<1x8x8xf32>, vector<1x8x8xf32>, vector<1x8x8xf32>, vector<1x8x8xf32> -> vector<4x8x8xf32>
    "tpu.trace_start"() <{level = 10 : i32, message = "hqd,hkd->hqk"}> : () -> ()
    %cst_23 = arith.constant dense<0.000000e+00> : vector<4x8x8xf32>
    %50 = tpu.matmul %31, %40, %cst_23 {dimension_numbers = #tpu.dot_dimension_numbers<[2], [2], [1], [1], [0, 0, 0, 1, 1, 1], [0], [0]>} : vector<4x8x8xf32>, vector<4x8x8xf32>, vector<4x8x8xf32> -> vector<4x8x8xf32>
    "tpu.trace_stop"() : () -> ()
    %cst_24 = arith.constant dense<0xFF800000> : vector<4x8xf32>
    %51 = vector.multi_reduction <maximumf>, %50, %cst_24 [2] : vector<4x8x8xf32> to vector<4x8xf32>
    %52 = vector.shape_cast %51 : vector<4x8xf32> to vector<4x8x1xf32>
    %53 = vector.broadcast %52 : vector<4x8x1xf32> to vector<4x8x8xf32>
    %54 = arith.subf %50, %53 : vector<4x8x8xf32>
    %55 = math.exp %54 : vector<4x8x8xf32>
    %cst_25 = arith.constant dense<0.000000e+00> : vector<4x8xf32>
    %56 = vector.multi_reduction <add>, %55, %cst_25 [2] : vector<4x8x8xf32> to vector<4x8xf32>
    %57 = vector.shape_cast %56 : vector<4x8xf32> to vector<4x8x1xf32>
    %58 = tpu.reciprocal %57 {approx = true} : vector<4x8x1xf32> -> vector<4x8x1xf32>
    %59 = vector.broadcast %58 : vector<4x8x1xf32> to vector<4x8x8xf32>
    %60 = arith.mulf %55, %59 : vector<4x8x8xf32>
    "tpu.trace_start"() <{level = 10 : i32, message = "hqk,hkd->hqd"}> : () -> ()
    %cst_26 = arith.constant dense<0.000000e+00> : vector<4x8x8xf32>
    %61 = tpu.matmul %60, %49, %cst_26 {dimension_numbers = #tpu.dot_dimension_numbers<[2], [1], [1], [2], [0, 0, 0, 1, 1, 2], [0], [0]>} : vector<4x8x8xf32>, vector<4x8x8xf32>, vector<4x8x8xf32> -> vector<4x8x8xf32>
    "tpu.trace_stop"() : () -> ()
    %c0_27 = arith.constant 0 : index
    %c0_28 = arith.constant 0 : index
    %62 = vector.load %arg10[%c0_27, %c0_28] : memref<32x32xf32, #tpu.memory_space<vmem>>, vector<32x32xf32>
    %cst_29 = arith.constant 0.000000e+00 : f32
    %63 = vector.broadcast %cst_29 : f32 to vector<8x32xf32>
    %64 = vector.extract_strided_slice %61 {offsets = [0, 0, 0], sizes = [1, 8, 8], strides = [1, 1, 1]} : vector<4x8x8xf32> to vector<1x8x8xf32>
    %65 = vector.shape_cast %64 : vector<1x8x8xf32> to vector<8x8xf32>
    %66 = vector.extract_strided_slice %62 {offsets = [0, 0], sizes = [8, 32], strides = [1, 1]} : vector<32x32xf32> to vector<8x32xf32>
    %cst_30 = arith.constant dense<0.000000e+00> : vector<8x32xf32>
    %67 = tpu.matmul %65, %66, %cst_30 {dimension_numbers = #tpu.dot_dimension_numbers<[1], [0], [0], [1], [0, 0, 1, 1], [], []>} : vector<8x8xf32>, vector<8x32xf32>, vector<8x32xf32> -> vector<8x32xf32>
    %68 = arith.addf %63, %67 : vector<8x32xf32>
    %69 = vector.extract_strided_slice %61 {offsets = [1, 0, 0], sizes = [1, 8, 8], strides = [1, 1, 1]} : vector<4x8x8xf32> to vector<1x8x8xf32>
    %70 = vector.shape_cast %69 : vector<1x8x8xf32> to vector<8x8xf32>
    %71 = vector.extract_strided_slice %62 {offsets = [8, 0], sizes = [8, 32], strides = [1, 1]} : vector<32x32xf32> to vector<8x32xf32>
    %cst_31 = arith.constant dense<0.000000e+00> : vector<8x32xf32>
    %72 = tpu.matmul %70, %71, %cst_31 {dimension_numbers = #tpu.dot_dimension_numbers<[1], [0], [0], [1], [0, 0, 1, 1], [], []>} : vector<8x8xf32>, vector<8x32xf32>, vector<8x32xf32> -> vector<8x32xf32>
    %73 = arith.addf %68, %72 : vector<8x32xf32>
    %74 = vector.extract_strided_slice %61 {offsets = [2, 0, 0], sizes = [1, 8, 8], strides = [1, 1, 1]} : vector<4x8x8xf32> to vector<1x8x8xf32>
    %75 = vector.shape_cast %74 : vector<1x8x8xf32> to vector<8x8xf32>
    %76 = vector.extract_strided_slice %62 {offsets = [16, 0], sizes = [8, 32], strides = [1, 1]} : vector<32x32xf32> to vector<8x32xf32>
    %cst_32 = arith.constant dense<0.000000e+00> : vector<8x32xf32>
    %77 = tpu.matmul %75, %76, %cst_32 {dimension_numbers = #tpu.dot_dimension_numbers<[1], [0], [0], [1], [0, 0, 1, 1], [], []>} : vector<8x8xf32>, vector<8x32xf32>, vector<8x32xf32> -> vector<8x32xf32>
    %78 = arith.addf %73, %77 : vector<8x32xf32>
    %79 = vector.extract_strided_slice %61 {offsets = [3, 0, 0], sizes = [1, 8, 8], strides = [1, 1, 1]} : vector<4x8x8xf32> to vector<1x8x8xf32>
    %80 = vector.shape_cast %79 : vector<1x8x8xf32> to vector<8x8xf32>
    %81 = vector.extract_strided_slice %62 {offsets = [24, 0], sizes = [8, 32], strides = [1, 1]} : vector<32x32xf32> to vector<8x32xf32>
    %cst_33 = arith.constant dense<0.000000e+00> : vector<8x32xf32>
    %82 = tpu.matmul %80, %81, %cst_33 {dimension_numbers = #tpu.dot_dimension_numbers<[1], [0], [0], [1], [0, 0, 1, 1], [], []>} : vector<8x8xf32>, vector<8x32xf32>, vector<8x32xf32> -> vector<8x32xf32>
    %83 = arith.addf %78, %82 : vector<8x32xf32>
    %c0_34 = arith.constant 0 : index
    %c0_35 = arith.constant 0 : index
    %84 = vector.load %arg11[%c0_34, %c0_35] : memref<1x32xf32, #tpu.memory_space<vmem>>, vector<1x32xf32>
    %85 = vector.broadcast %84 : vector<1x32xf32> to vector<8x32xf32>
    %86 = arith.addf %83, %85 : vector<8x32xf32>
    %c0_36 = arith.constant 0 : index
    %c0_37 = arith.constant 0 : index
    %c0_38 = arith.constant 0 : index
    %87 = vector.load %arg12[%c0_36, %c0_37, %c0_38] : memref<1x8x32xf32, #tpu.memory_space<vmem>>, vector<1x8x32xf32>
    %88 = vector.shape_cast %87 : vector<1x8x32xf32> to vector<8x32xf32>
    %89 = vector.shape_cast %86 : vector<8x32xf32> to vector<1x8x32xf32>
    tpu.vector_store %arg12[%c0_36, %c0_37, %c0_38], %89 {strides = array<i32>} : memref<1x8x32xf32, #tpu.memory_space<vmem>>, vector<1x8x32xf32>,
    return
  }
  func.func @transform_0(%arg0: i32) -> (i32, i32, i32) {
    %c0_i32 = arith.constant 0 : i32
    %c0_i32_0 = arith.constant 0 : i32
    %c0_i32_1 = arith.constant 0 : i32
    return %arg0, %c0_i32, %c0_i32_0 : i32, i32, i32
  }
  func.func @transform_1(%arg0: i32) -> (i32, i32, i32) {
    %c0_i32 = arith.constant 0 : i32
    %c0_i32_0 = arith.constant 0 : i32
    %c0_i32_1 = arith.constant 0 : i32
    return %arg0, %c0_i32, %c0_i32_0 : i32, i32, i32
  }
  func.func @transform_2(%arg0: i32) -> (i32, i32, i32) {
    %c0_i32 = arith.constant 0 : i32
    %c0_i32_0 = arith.constant 0 : i32
    %c0_i32_1 = arith.constant 0 : i32
    return %arg0, %c0_i32, %c0_i32_0 : i32, i32, i32
  }
  func.func @transform_3(%arg0: i32) -> (i32, i32) {
    %c0_i32 = arith.constant 0 : i32
    %c0_i32_0 = arith.constant 0 : i32
    %c0_i32_1 = arith.constant 0 : i32
    return %c0_i32, %c0_i32_0 : i32, i32
  }
  func.func @transform_4(%arg0: i32) -> (i32, i32) {
    %c0_i32 = arith.constant 0 : i32
    %c0_i32_0 = arith.constant 0 : i32
    %c0_i32_1 = arith.constant 0 : i32
    return %c0_i32, %c0_i32_0 : i32, i32
  }
  func.func @transform_5(%arg0: i32) -> (i32, i32) {
    %c0_i32 = arith.constant 0 : i32
    %c0_i32_0 = arith.constant 0 : i32
    %c0_i32_1 = arith.constant 0 : i32
    return %c0_i32, %c0_i32_0 : i32, i32
  }
  func.func @transform_6(%arg0: i32) -> (i32, i32) {
    %c0_i32 = arith.constant 0 : i32
    %c0_i32_0 = arith.constant 0 : i32
    %c0_i32_1 = arith.constant 0 : i32
    return %c0_i32, %c0_i32_0 : i32, i32
  }
  func.func @transform_7(%arg0: i32) -> (i32, i32) {
    %c0_i32 = arith.constant 0 : i32
    %c0_i32_0 = arith.constant 0 : i32
    %c0_i32_1 = arith.constant 0 : i32
    return %c0_i32, %c0_i32_0 : i32, i32
  }
  func.func @transform_8(%arg0: i32) -> (i32, i32) {
    %c0_i32 = arith.constant 0 : i32
    %c0_i32_0 = arith.constant 0 : i32
    %c0_i32_1 = arith.constant 0 : i32
    return %c0_i32, %c0_i32_0 : i32, i32
  }
  func.func @transform_9(%arg0: i32) -> (i32, i32) {
    %c0_i32 = arith.constant 0 : i32
    %c0_i32_0 = arith.constant 0 : i32
    %c0_i32_1 = arith.constant 0 : i32
    return %c0_i32, %c0_i32_0 : i32, i32
  }
  func.func @transform_10(%arg0: i32) -> (i32, i32) {
    %c0_i32 = arith.constant 0 : i32
    %c0_i32_0 = arith.constant 0 : i32
    %c0_i32_1 = arith.constant 0 : i32
    return %c0_i32, %c0_i32_0 : i32, i32
  }
  func.func @transform_11(%arg0: i32) -> (i32, i32, i32) {
    %c0_i32 = arith.constant 0 : i32
    %c0_i32_0 = arith.constant 0 : i32
    %c0_i32_1 = arith.constant 0 : i32
    return %arg0, %c0_i32, %c0_i32_0 : i32, i32, i32
  }
}

module attributes {stable_mosaic.version = 11 : i64} {
  func.func @kernel(%arg0: i32, %arg1: memref<1x8x32xf32, #tpu.memory_space<vmem>>, %arg2: memref<1x8x32xf32, #tpu.memory_space<vmem>>, %arg3: memref<1x8x32xf32, #tpu.memory_space<vmem>>, %arg4: memref<32x32xf32, #tpu.memory_space<vmem>>, %arg5: memref<1x32xf32, #tpu.memory_space<vmem>>, %arg6: memref<32x32xf32, #tpu.memory_space<vmem>>, %arg7: memref<1x32xf32, #tpu.memory_space<vmem>>, %arg8: memref<32x32xf32, #tpu.memory_space<vmem>>, %arg9: memref<1x32xf32, #tpu.memory_space<vmem>>, %arg10: memref<32x32xf32, #tpu.memory_space<vmem>>, %arg11: memref<1x32xf32, #tpu.memory_space<vmem>>, %arg12: memref<1x8x32xf32, #tpu.memory_space<vmem>>) attributes {dimension_semantics = [#tpu.dimension_semantics<parallel>], iteration_bounds = array<i64: 2>, scalar_prefetch = 0 : i64, scratch_operands = 0 : i64, tpu.core_type = #tpu.core_type<tc>, window_params = [{transform_indices = @transform_0, window_bounds = array<i64: 1, 8, 32>}, {transform_indices = @transform_1, window_bounds = array<i64: 1, 8, 32>}, {transform_indices = @transform_2, window_bounds = array<i64: 1, 8, 32>}, {pipeline_mode = #tpu.pipeline_mode<synchronous>, transform_indices = @transform_3, window_bounds = array<i64: 32, 32>}, {pipeline_mode = #tpu.pipeline_mode<synchronous>, transform_indices = @transform_4, window_bounds = array<i64: 1, 32>}, {pipeline_mode = #tpu.pipeline_mode<synchronous>, transform_indices = @transform_5, window_bounds = array<i64: 32, 32>}, {pipeline_mode = #tpu.pipeline_mode<synchronous>, transform_indices = @transform_6, window_bounds = array<i64: 1, 32>}, {pipeline_mode = #tpu.pipeline_mode<synchronous>, transform_indices = @transform_7, window_bounds = array<i64: 32, 32>}, {pipeline_mode = #tpu.pipeline_mode<synchronous>, transform_indices = @transform_8, window_bounds = array<i64: 1, 32>}, {pipeline_mode = #tpu.pipeline_mode<synchronous>, transform_indices = @transform_9, window_bounds = array<i64: 32, 32>}, {pipeline_mode = #tpu.pipeline_mode<synchronous>, transform_indices = @transform_10, window_bounds = array<i64: 1, 32>}, {transform_indices = @transform_11, window_bounds = array<i64: 1, 8, 32>}]} {
    %c0 = arith.constant 0 : index
    %c0_0 = arith.constant 0 : index
    %c0_1 = arith.constant 0 : index
    %0 = vector.load %arg1[%c0, %c0_0, %c0_1] : memref<1x8x32xf32, #tpu.memory_space<vmem>>, vector<1x8x32xf32>
    %1 = vector.shape_cast %0 : vector<1x8x32xf32> to vector<8x32xf32>
    %c0_2 = arith.constant 0 : index
    %c0_3 = arith.constant 0 : index
    %c0_4 = arith.constant 0 : index
    %2 = vector.load %arg2[%c0_2, %c0_3, %c0_4] : memref<1x8x32xf32, #tpu.memory_space<vmem>>, vector<1x8x32xf32>
    %3 = vector.shape_cast %2 : vector<1x8x32xf32> to vector<8x32xf32>
    %c0_5 = arith.constant 0 : index
    %c0_6 = arith.constant 0 : index
    %c0_7 = arith.constant 0 : index
    %4 = vector.load %arg3[%c0_5, %c0_6, %c0_7] : memref<1x8x32xf32, #tpu.memory_space<vmem>>, vector<1x8x32xf32>
    %5 = vector.shape_cast %4 : vector<1x8x32xf32> to vector<8x32xf32>
    %c0_8 = arith.constant 0 : index
    %c0_9 = arith.constant 0 : index
    %6 = vector.load %arg4[%c0_8, %c0_9] : memref<32x32xf32, #tpu.memory_space<vmem>>, vector<32x32xf32>
    %cst = arith.constant dense<0.000000e+00> : vector<8x32xf32>
    %7 = tpu.matmul %1, %6, %cst {dimension_numbers = #tpu.dot_dimension_numbers<[1], [0], [0], [1], [0, 0, 1, 1], [], []>} : vector<8x32xf32>, vector<32x32xf32>, vector<8x32xf32> -> vector<8x32xf32>
    %c0_10 = arith.constant 0 : index
    %c0_11 = arith.constant 0 : index
    %8 = vector.load %arg5[%c0_10, %c0_11] : memref<1x32xf32, #tpu.memory_space<vmem>>, vector<1x32xf32>
    %9 = vector.broadcast %8 : vector<1x32xf32> to vector<8x32xf32>
    %10 = arith.addf %7, %9 : vector<8x32xf32>
    %cst_12 = arith.constant 0.353553385 : f32
    %11 = vector.broadcast %cst_12 : f32 to vector<8x32xf32>
    %12 = arith.mulf %10, %11 : vector<8x32xf32>
    %c0_13 = arith.constant 0 : index
    %c0_14 = arith.constant 0 : index
    %13 = vector.load %arg6[%c0_13, %c0_14] : memref<32x32xf32, #tpu.memory_space<vmem>>, vector<32x32xf32>
    %cst_15 = arith.constant dense<0.000000e+00> : vector<8x32xf32>
    %14 = tpu.matmul %3, %13, %cst_15 {dimension_numbers = #tpu.dot_dimension_numbers<[1], [0], [0], [1], [0, 0, 1, 1], [], []>} : vector<8x32xf32>, vector<32x32xf32>, vector<8x32xf32> -> vector<8x32xf32>
    %c0_16 = arith.constant 0 : index
    %c0_17 = arith.constant 0 : index
    %15 = vector.load %arg7[%c0_16, %c0_17] : memref<1x32xf32, #tpu.memory_space<vmem>>, vector<1x32xf32>
    %16 = vector.broadcast %15 : vector<1x32xf32> to vector<8x32xf32>
    %17 = arith.addf %14, %16 : vector<8x32xf32>
    %c0_18 = arith.constant 0 : index
    %c0_19 = arith.constant 0 : index
    %18 = vector.load %arg8[%c0_18, %c0_19] : memref<32x32xf32, #tpu.memory_space<vmem>>, vector<32x32xf32>
    %cst_20 = arith.constant dense<0.000000e+00> : vector<8x32xf32>
    %19 = tpu.matmul %5, %18, %cst_20 {dimension_numbers = #tpu.dot_dimension_numbers<[1], [0], [0], [1], [0, 0, 1, 1], [], []>} : vector<8x32xf32>, vector<32x32xf32>, vector<8x32xf32> -> vector<8x32xf32>
    %c0_21 = arith.constant 0 : index
    %c0_22 = arith.constant 0 : index
    %20 = vector.load %arg9[%c0_21, %c0_22] : memref<1x32xf32, #tpu.memory_space<vmem>>, vector<1x32xf32>
    %21 = vector.broadcast %20 : vector<1x32xf32> to vector<8x32xf32>
    %22 = arith.addf %19, %21 : vector<8x32xf32>
    %23 = vector.extract_strided_slice %12 {offsets = [0, 0], sizes = [8, 8], strides = [1, 1]} : vector<8x32xf32> to vector<8x8xf32>
    %24 = vector.extract_strided_slice %12 {offsets = [0, 8], sizes = [8, 8], strides = [1, 1]} : vector<8x32xf32> to vector<8x8xf32>
    %25 = vector.extract_strided_slice %12 {offsets = [0, 16], sizes = [8, 8], strides = [1, 1]} : vector<8x32xf32> to vector<8x8xf32>
    %26 = vector.extract_strided_slice %12 {offsets = [0, 24], sizes = [8, 8], strides = [1, 1]} : vector<8x32xf32> to vector<8x8xf32>
    %27 = vector.shape_cast %23 : vector<8x8xf32> to vector<1x8x8xf32>
    %28 = vector.shape_cast %24 : vector<8x8xf32> to vector<1x8x8xf32>
    %29 = vector.shape_cast %25 : vector<8x8xf32> to vector<1x8x8xf32>
    %30 = vector.shape_cast %26 : vector<8x8xf32> to vector<1x8x8xf32>
    %31 = tpu.concatenate %27, %28, %29, %30 in 0 : vector<1x8x8xf32>, vector<1x8x8xf32>, vector<1x8x8xf32>, vector<1x8x8xf32> -> vector<4x8x8xf32>
    %32 = vector.extract_strided_slice %17 {offsets = [0, 0], sizes = [8, 8], strides = [1, 1]} : vector<8x32xf32> to vector<8x8xf32>
    %33 = vector.extract_strided_slice %17 {offsets = [0, 8], sizes = [8, 8], strides = [1, 1]} : vector<8x32xf32> to vector<8x8xf32>
    %34 = vector.extract_strided_slice %17 {offsets = [0, 16], sizes = [8, 8], strides = [1, 1]} : vector<8x32xf32> to vector<8x8xf32>
    %35 = vector.extract_strided_slice %17 {offsets = [0, 24], sizes = [8, 8], strides = [1, 1]} : vector<8x32xf32> to vector<8x8xf32>
    %36 = vector.shape_cast %32 : vector<8x8xf32> to vector<1x8x8xf32>
    %37 = vector.shape_cast %33 : vector<8x8xf32> to vector<1x8x8xf32>
    %38 = vector.shape_cast %34 : vector<8x8xf32> to vector<1x8x8xf32>
    %39 = vector.shape_cast %35 : vector<8x8xf32> to vector<1x8x8xf32>
    %40 = tpu.concatenate %36, %37, %38, %39 in 0 : vector<1x8x8xf32>, vector<1x8x8xf32>, vector<1x8x8xf32>, vector<1x8x8xf32> -> vector<4x8x8xf32>
    %41 = vector.extract_strided_slice %22 {offsets = [0, 0], sizes = [8, 8], strides = [1, 1]} : vector<8x32xf32> to vector<8x8xf32>
    %42 = vector.extract_strided_slice %22 {offsets = [0, 8], sizes = [8, 8], strides = [1, 1]} : vector<8x32xf32> to vector<8x8xf32>
    %43 = vector.extract_strided_slice %22 {offsets = [0, 16], sizes = [8, 8], strides = [1, 1]} : vector<8x32xf32> to vector<8x8xf32>
    %44 = vector.extract_strided_slice %22 {offsets = [0, 24], sizes = [8, 8], strides = [1, 1]} : vector<8x32xf32> to vector<8x8xf32>
    %45 = vector.shape_cast %41 : vector<8x8xf32> to vector<1x8x8xf32>
    %46 = vector.shape_cast %42 : vector<8x8xf32> to vector<1x8x8xf32>
    %47 = vector.shape_cast %43 : vector<8x8xf32> to vector<1x8x8xf32>
    %48 = vector.shape_cast %44 : vector<8x8xf32> to vector<1x8x8xf32>
    %49 = tpu.concatenate %45, %46, %47, %48 in 0 : vector<1x8x8xf32>, vector<1x8x8xf32>, vector<1x8x8xf32>, vector<1x8x8xf32> -> vector<4x8x8xf32>
    "tpu.trace_start"() <{level = 10 : i32, message = "hqd,hkd->hqk"}> : () -> ()
    %cst_23 = arith.constant dense<0.000000e+00> : vector<4x8x8xf32>
    %50 = tpu.matmul %31, %40, %cst_23 {dimension_numbers = #tpu.dot_dimension_numbers<[2], [2], [1], [1], [0, 0, 0, 1, 1, 1], [0], [0]>} : vector<4x8x8xf32>, vector<4x8x8xf32>, vector<4x8x8xf32> -> vector<4x8x8xf32>
    "tpu.trace_stop"() : () -> ()
    %cst_24 = arith.constant dense<0xFF800000> : vector<4x8xf32>
    %51 = vector.multi_reduction <maximumf>, %50, %cst_24 [2] : vector<4x8x8xf32> to vector<4x8xf32>
    %52 = vector.shape_cast %51 : vector<4x8xf32> to vector<4x8x1xf32>
    %53 = vector.broadcast %52 : vector<4x8x1xf32> to vector<4x8x8xf32>
    %54 = arith.subf %50, %53 : vector<4x8x8xf32>
    %55 = math.exp %54 : vector<4x8x8xf32>
    %cst_25 = arith.constant dense<0.000000e+00> : vector<4x8xf32>
    %56 = vector.multi_reduction <add>, %55, %cst_25 [2] : vector<4x8x8xf32> to vector<4x8xf32>
    %57 = vector.shape_cast %56 : vector<4x8xf32> to vector<4x8x1xf32>
    %58 = tpu.reciprocal %57 {approx = true} : vector<4x8x1xf32> -> vector<4x8x1xf32>
    %59 = vector.broadcast %58 : vector<4x8x1xf32> to vector<4x8x8xf32>
    %60 = arith.mulf %55, %59 : vector<4x8x8xf32>
    "tpu.trace_start"() <{level = 10 : i32, message = "hqk,hkd->hqd"}> : () -> ()
    %cst_26 = arith.constant dense<0.000000e+00> : vector<4x8x8xf32>
    %61 = tpu.matmul %60, %49, %cst_26 {dimension_numbers = #tpu.dot_dimension_numbers<[2], [1], [1], [2], [0, 0, 0, 1, 1, 2], [0], [0]>} : vector<4x8x8xf32>, vector<4x8x8xf32>, vector<4x8x8xf32> -> vector<4x8x8xf32>
    "tpu.trace_stop"() : () -> ()
    %c0_27 = arith.constant 0 : index
    %c0_28 = arith.constant 0 : index
    %62 = vector.load %arg10[%c0_27, %c0_28] : memref<32x32xf32, #tpu.memory_space<vmem>>, vector<32x32xf32>
    %cst_29 = arith.constant 0.000000e+00 : f32
    %63 = vector.broadcast %cst_29 : f32 to vector<8x32xf32>
    %64 = vector.extract_strided_slice %61 {offsets = [0, 0, 0], sizes = [1, 8, 8], strides = [1, 1, 1]} : vector<4x8x8xf32> to vector<1x8x8xf32>
    %65 = vector.shape_cast %64 : vector<1x8x8xf32> to vector<8x8xf32>
    %66 = vector.extract_strided_slice %62 {offsets = [0, 0], sizes = [8, 32], strides = [1, 1]} : vector<32x32xf32> to vector<8x32xf32>
    %cst_30 = arith.constant dense<0.000000e+00> : vector<8x32xf32>
    %67 = tpu.matmul %65, %66, %cst_30 {dimension_numbers = #tpu.dot_dimension_numbers<[1], [0], [0], [1], [0, 0, 1, 1], [], []>} : vector<8x8xf32>, vector<8x32xf32>, vector<8x32xf32> -> vector<8x32xf32>
    %68 = arith.addf %63, %67 : vector<8x32xf32>
    %69 = vector.extract_strided_slice %61 {offsets = [1, 0, 0], sizes = [1, 8, 8], strides = [1, 1, 1]} : vector<4x8x8xf32> to vector<1x8x8xf32>
    %70 = vector.shape_cast %69 : vector<1x8x8xf32> to vector<8x8xf32>
    %71 = vector.extract_strided_slice %62 {offsets = [8, 0], sizes = [8, 32], strides = [1, 1]} : vector<32x32xf32> to vector<8x32xf32>
    %cst_31 = arith.constant dense<0.000000e+00> : vector<8x32xf32>
    %72 = tpu.matmul %70, %71, %cst_31 {dimension_numbers = #tpu.dot_dimension_numbers<[1], [0], [0], [1], [0, 0, 1, 1], [], []>} : vector<8x8xf32>, vector<8x32xf32>, vector<8x32xf32> -> vector<8x32xf32>
    %73 = arith.addf %68, %72 : vector<8x32xf32>
    %74 = vector.extract_strided_slice %61 {offsets = [2, 0, 0], sizes = [1, 8, 8], strides = [1, 1, 1]} : vector<4x8x8xf32> to vector<1x8x8xf32>
    %75 = vector.shape_cast %74 : vector<1x8x8xf32> to vector<8x8xf32>
    %76 = vector.extract_strided_slice %62 {offsets = [16, 0], sizes = [8, 32], strides = [1, 1]} : vector<32x32xf32> to vector<8x32xf32>
    %cst_32 = arith.constant dense<0.000000e+00> : vector<8x32xf32>
    %77 = tpu.matmul %75, %76, %cst_32 {dimension_numbers = #tpu.dot_dimension_numbers<[1], [0], [0], [1], [0, 0, 1, 1], [], []>} : vector<8x8xf32>, vector<8x32xf32>, vector<8x32xf32> -> vector<8x32xf32>
    %78 = arith.addf %73, %77 : vector<8x32xf32>
    %79 = vector.extract_strided_slice %61 {offsets = [3, 0, 0], sizes = [1, 8, 8], strides = [1, 1, 1]} : vector<4x8x8xf32> to vector<1x8x8xf32>
    %80 = vector.shape_cast %79 : vector<1x8x8xf32> to vector<8x8xf32>
    %81 = vector.extract_strided_slice %62 {offsets = [24, 0], sizes = [8, 32], strides = [1, 1]} : vector<32x32xf32> to vector<8x32xf32>
    %cst_33 = arith.constant dense<0.000000e+00> : vector<8x32xf32>
    %82 = tpu.matmul %80, %81, %cst_33 {dimension_numbers = #tpu.dot_dimension_numbers<[1], [0], [0], [1], [0, 0, 1, 1], [], []>} : vector<8x8xf32>, vector<8x32xf32>, vector<8x32xf32> -> vector<8x32xf32>
    %83 = arith.addf %78, %82 : vector<8x32xf32>
    %c0_34 = arith.constant 0 : index
    %c0_35 = arith.constant 0 : index
    %84 = vector.load %arg11[%c0_34, %c0_35] : memref<1x32xf32, #tpu.memory_space<vmem>>, vector<1x32xf32>
    %85 = vector.broadcast %84 : vector<1x32xf32> to vector<8x32xf32>
    %86 = arith.addf %83, %85 : vector<8x32xf32>
    %c0_36 = arith.constant 0 : index
    %c0_37 = arith.constant 0 : index
    %c0_38 = arith.constant 0 : index
    %87 = vector.load %arg12[%c0_36, %c0_37, %c0_38] : memref<1x8x32xf32, #tpu.memory_space<vmem>>, vector<1x8x32xf32>
    %88 = vector.shape_cast %87 : vector<1x8x32xf32> to vector<8x32xf32>
    %89 = vector.shape_cast %86 : vector<8x32xf32> to vector<1x8x32xf32>
    tpu.vector_store %arg12[%c0_36, %c0_37, %c0_38], %89 {strides = array<i32>} : memref<1x8x32xf32, #tpu.memory_space<vmem>>, vector<1x8x32xf32>,
    return
  }
  func.func @transform_0(%arg0: i32) -> (i32, i32, i32) {
    %c0_i32 = arith.constant 0 : i32
    %c0_i32_0 = arith.constant 0 : i32
    %c0_i32_1 = arith.constant 0 : i32
    return %arg0, %c0_i32, %c0_i32_0 : i32, i32, i32
  }
  func.func @transform_1(%arg0: i32) -> (i32, i32, i32) {
    %c0_i32 = arith.constant 0 : i32
    %c0_i32_0 = arith.constant 0 : i32
    %c0_i32_1 = arith.constant 0 : i32
    return %arg0, %c0_i32, %c0_i32_0 : i32, i32, i32
  }
  func.func @transform_2(%arg0: i32) -> (i32, i32, i32) {
    %c0_i32 = arith.constant 0 : i32
    %c0_i32_0 = arith.constant 0 : i32
    %c0_i32_1 = arith.constant 0 : i32
    return %arg0, %c0_i32, %c0_i32_0 : i32, i32, i32
  }
  func.func @transform_3(%arg0: i32) -> (i32, i32) {
    %c0_i32 = arith.constant 0 : i32
    %c0_i32_0 = arith.constant 0 : i32
    %c0_i32_1 = arith.constant 0 : i32
    return %c0_i32, %c0_i32_0 : i32, i32
  }
  func.func @transform_4(%arg0: i32) -> (i32, i32) {
    %c0_i32 = arith.constant 0 : i32
    %c0_i32_0 = arith.constant 0 : i32
    %c0_i32_1 = arith.constant 0 : i32
    return %c0_i32, %c0_i32_0 : i32, i32
  }
  func.func @transform_5(%arg0: i32) -> (i32, i32) {
    %c0_i32 = arith.constant 0 : i32
    %c0_i32_0 = arith.constant 0 : i32
    %c0_i32_1 = arith.constant 0 : i32
    return %c0_i32, %c0_i32_0 : i32, i32
  }
  func.func @transform_6(%arg0: i32) -> (i32, i32) {
    %c0_i32 = arith.constant 0 : i32
    %c0_i32_0 = arith.constant 0 : i32
    %c0_i32_1 = arith.constant 0 : i32
    return %c0_i32, %c0_i32_0 : i32, i32
  }
  func.func @transform_7(%arg0: i32) -> (i32, i32) {
    %c0_i32 = arith.constant 0 : i32
    %c0_i32_0 = arith.constant 0 : i32
    %c0_i32_1 = arith.constant 0 : i32
    return %c0_i32, %c0_i32_0 : i32, i32
  }
  func.func @transform_8(%arg0: i32) -> (i32, i32) {
    %c0_i32 = arith.constant 0 : i32
    %c0_i32_0 = arith.constant 0 : i32
    %c0_i32_1 = arith.constant 0 : i32
    return %c0_i32, %c0_i32_0 : i32, i32
  }
  func.func @transform_9(%arg0: i32) -> (i32, i32) {
    %c0_i32 = arith.constant 0 : i32
    %c0_i32_0 = arith.constant 0 : i32
    %c0_i32_1 = arith.constant 0 : i32
    return %c0_i32, %c0_i32_0 : i32, i32
  }
  func.func @transform_10(%arg0: i32) -> (i32, i32) {
    %c0_i32 = arith.constant 0 : i32
    %c0_i32_0 = arith.constant 0 : i32
    %c0_i32_1 = arith.constant 0 : i32
    return %c0_i32, %c0_i32_0 : i32, i32
  }
  func.func @transform_11(%arg0: i32) -> (i32, i32, i32) {
    %c0_i32 = arith.constant 0 : i32
    %c0_i32_0 = arith.constant 0 : i32
    %c0_i32_1 = arith.constant 0 : i32
    return %arg0, %c0_i32, %c0_i32_0 : i32, i32, i32
  }
}

</mosaic_0001>

<llo_original>
// kernel: tpu_custom_call.1
$region0: #{tpu_custom_call.1}
  #allocation0 [shape = 'u32[]', space=smem, size = 0x4, offset = 0x4, fixed_abs, tag = 'smem constant byte address 0x4 - core index']
  #allocation1 [shape = 'u32[144,128]{1,0:T(1,128)}', space=vmem, size = 0x12000, scoped, tag = 'internal scratch']
  %s0 = inlined_call_operand.hbm [shape: f32[2,8,32], index: 0, kind: input, shape index: {}]
  %s1 = inlined_call_operand.hbm [shape: f32[2,8,32], index: 1, kind: input, shape index: {}]
  %s2 = inlined_call_operand.hbm [shape: f32[2,8,32], index: 2, kind: input, shape index: {}]
  %s3 = inlined_call_operand.hbm [shape: f32[32,32], index: 3, kind: input, shape index: {}]
  %s4 = inlined_call_operand.vmem [shape: f32[1,32], index: 4, kind: input, shape index: {}]
  %s5 = inlined_call_operand.hbm [shape: f32[32,32], index: 5, kind: input, shape index: {}]
  %s6 = inlined_call_operand.vmem [shape: f32[1,32], index: 6, kind: input, shape index: {}]
  %s7 = inlined_call_operand.hbm [shape: f32[32,32], index: 7, kind: input, shape index: {}]
  %s8 = inlined_call_operand.vmem [shape: f32[1,32], index: 8, kind: input, shape index: {}]
  %s9 = inlined_call_operand.hbm [shape: f32[32,32], index: 9, kind: input, shape index: {}]
  %s10 = inlined_call_operand.vmem [shape: f32[1,32], index: 10, kind: input, shape index: {}]
  %s11 = inlined_call_operand.hbm [shape: f32[2,8,32], index: 11, kind: output, shape index: {}]
  %s12 = sld [smem:[#allocation0]]
  $region105: #{tpu_custom_call.1} parent=0
    _
  %s14 = ssub.s32 1, %s12
  %s15 = scalar_select 0, %s14, %s12
  $region1: #{tpu_custom_call.1} parent=0
    #allocation2 [shape = 'u8[8192]{0}', space=vmem, size = 0x2000, scoped, tag = 'input window, operand 0']
    #allocation3 [shape = 's32[2]{0}', space=sflag, size = 0x8, scoped, tag = 'scoped memory for tpu_custom_call.1']
    #allocation4 [shape = 's32[2]{0}', space=sflag, size = 0x8, scoped, tag = 'scoped memory for tpu_custom_call.1']
    #allocation5 [shape = 'u8[8192]{0}', space=vmem, size = 0x2000, scoped, tag = 'input window, operand 1']
    #allocation6 [shape = 's32[2]{0}', space=sflag, size = 0x8, scoped, tag = 'scoped memory for tpu_custom_call.1']
    #allocation7 [shape = 'u8[8192]{0}', space=vmem, size = 0x2000, scoped, tag = 'input window, operand 2']
    #allocation8 [shape = 'u8[16384]{0}', space=vmem, size = 0x4000, scoped, tag = 'input window, operand 3, single buffered']
    #allocation9 [shape = 's32[1]{0}', space=sflag, size = 0x4, scoped, tag = 'scoped memory for tpu_custom_call.1']
    #allocation10 [shape = 'u8[16384]{0}', space=vmem, size = 0x4000, scoped, tag = 'input window, operand 5, single buffered']
    #allocation11 [shape = 'u8[16384]{0}', space=vmem, size = 0x4000, scoped, tag = 'input window, operand 7, single buffered']
    #allocation12 [shape = 's32[1]{0}', space=sflag, size = 0x4, scoped, tag = 'scoped memory for tpu_custom_call.1']
    #allocation13 [shape = 'u8[16384]{0}', space=vmem, size = 0x4000, scoped, tag = 'input window, operand 9, single buffered']
    #allocation14 [shape = 'u8[8192]{0}', space=vmem, size = 0x2000, scoped, tag = 'output window, operand 0']
    %16 = vsyncpa [#allocation3], 0
    %s17 = scalar_lea.sflag [#allocation3], 1
    %18 = vsyncpa %s17, 0
    %19 = vsyncpa [#allocation6], 0
    %s20 = scalar_lea.sflag [#allocation6], 1
    %21 = vsyncpa %s20, 0
    %22 = vsyncpa [#allocation9], 0
    %23 = vsyncpa [#allocation12], 0
    %24 = vsyncpa [#allocation4], 0
    %s25 = scalar_lea.sflag [#allocation4], 1
    %26 = vsyncpa %s25, 0
    loop: start=0, step=1, limit=4
    $region2: #{tpu_custom_call.1} parent=1 // loop_pre_header
      _
    $region3: #{tpu_custom_call.1} parent=1 // loop_header
      %s28 = sphi 0, %s32
      %p29 = scmp.ge.s32.totalorder %s28, 4
      %s38 = sphi 0, %s40
      %s41 = sphi 0, %s38
      %s42 = sphi 0, %s41
      %s58 = sphi 0, %s42
      %s64 = sphi 0, %s66
      %s67 = sphi 0, %s64
      %s68 = sphi 0, %s67
      %s84 = sphi 0, %s68
      %s90 = sphi 0, %s92
      %s93 = sphi 0, %s90
      %s94 = sphi 0, %s93
      %s110 = sphi 0, %s94
      %s114 = sphi 0, %s114
      %s116 = sphi 0, %s114
      %s117 = sphi 0, %s116
      %s131 = sphi 0, %s117
      %s135 = sphi 0, %s135
      %s137 = sphi 0, %s135
      %s138 = sphi 0, %s137
      %s152 = sphi 0, %s138
      %s156 = sphi 0, %s156
      %s158 = sphi 0, %s156
      %s159 = sphi 0, %s158
      %s173 = sphi 0, %s159
      %s177 = sphi 0, %s177
      %s179 = sphi 0, %s177
      %s180 = sphi 0, %s179
      %s194 = sphi 0, %s180
      %s198 = sphi 0, %s198
      %s200 = sphi 0, %s198
      %s201 = sphi 0, %s200
      %s215 = sphi 0, %s201
      %s219 = sphi 0, %s219
      %s221 = sphi 0, %s219
      %s222 = sphi 0, %s221
      %s236 = sphi 0, %s222
      %s240 = sphi 0, %s240
      %s242 = sphi 0, %s240
      %s243 = sphi 0, %s242
      %s257 = sphi 0, %s243
      %s261 = sphi 0, %s261
      %s263 = sphi 0, %s261
      %s264 = sphi 0, %s263
      %s278 = sphi 0, %s264
      %s284 = sphi 0, %s286
      %s287 = sphi 0, %s284
      %s288 = sphi 0, %s287
      %s304 = sphi 0, %s288
    $region4: #{tpu_custom_call.1} parent=1 // loop_header_branch
      %31 = sbr.rel (%p29) target = $region8
    $region5: #{tpu_custom_call.1} parent=1 // loop_body
      %s33 = ssub.s32 %s28, 1
      %s34 = ssub.s32 %s28, 2
      %s35 = sadd.s32 %s28, 1
      %s36 = ssub.s32 %s28, %s35
      %p37 = scmp.eq.s32.totalorder %s36, 0
      %s39 = sadd.s32 %s38, 1
      %s40 = scalar_select %p37, %s38, %s39
      %p43 = pneg %p37
      %p44 = scmp.eq.s32.totalorder %s28, 1
      %p45 = por %p43, %p44
      %p46 = scmp.ne.s32.totalorder %s38, %s41
      %p47 = scmp.eq.s32.totalorder %s28, 0
      %p48 = por %p46, %p47
      %p49 = scmp.ne.s32.totalorder %s38, %s41
      %p50 = scmp.eq.s32.totalorder %s33, 1
      %p51 = por %p49, %p50
      %p52 = scmp.ne.s32.totalorder %s41, %s42
      %p53 = scmp.eq.s32.totalorder %s33, 0
      %p54 = por %p52, %p53
      %p55 = scmp.ne.s32.totalorder %s41, %s42
      %p56 = scmp.eq.s32.totalorder %s34, 1
      %p57 = por %p55, %p56
      %p59 = scmp.ne.s32.totalorder %s42, %s58
      %p60 = scmp.eq.s32.totalorder %s34, 0
      %p61 = por %p59, %p60
      %s62 = ssub.s32 %s28, %s35
      %p63 = scmp.eq.s32.totalorder %s62, 0
      %s65 = sadd.s32 %s64, 1
      %s66 = scalar_select %p63, %s64, %s65
      %p69 = pneg %p63
      %p70 = scmp.eq.s32.totalorder %s28, 1
      %p71 = por %p69, %p70
      %p72 = scmp.ne.s32.totalorder %s64, %s67
      %p73 = scmp.eq.s32.totalorder %s28, 0
      %p74 = por %p72, %p73
      %p75 = scmp.ne.s32.totalorder %s64, %s67
      %p76 = scmp.eq.s32.totalorder %s33, 1
      %p77 = por %p75, %p76
      %p78 = scmp.ne.s32.totalorder %s67, %s68
      %p79 = scmp.eq.s32.totalorder %s33, 0
      %p80 = por %p78, %p79
      %p81 = scmp.ne.s32.totalorder %s67, %s68
      %p82 = scmp.eq.s32.totalorder %s34, 1
      %p83 = por %p81, %p82
      %p85 = scmp.ne.s32.totalorder %s68, %s84
      %p86 = scmp.eq.s32.totalorder %s34, 0
      %p87 = por %p85, %p86
      %s88 = ssub.s32 %s28, %s35
      %p89 = scmp.eq.s32.totalorder %s88, 0
      %s91 = sadd.s32 %s90, 1
      %s92 = scalar_select %p89, %s90, %s91
      %p95 = pneg %p89
      %p96 = scmp.eq.s32.totalorder %s28, 1
      %p97 = por %p95, %p96
      %p98 = scmp.ne.s32.totalorder %s90, %s93
      %p99 = scmp.eq.s32.totalorder %s28, 0
      %p100 = por %p98, %p99
      %p101 = scmp.ne.s32.totalorder %s90, %s93
      %p102 = scmp.eq.s32.totalorder %s33, 1
      %p103 = por %p101, %p102
      %p104 = scmp.ne.s32.totalorder %s93, %s94
      %p105 = scmp.eq.s32.totalorder %s33, 0
      %p106 = por %p104, %p105
      %p107 = scmp.ne.s32.totalorder %s93, %s94
      %p108 = scmp.eq.s32.totalorder %s34, 1
      %p109 = por %p107, %p108
      %p111 = scmp.ne.s32.totalorder %s94, %s110
      %p112 = scmp.eq.s32.totalorder %s34, 0
      %p113 = por %p111, %p112
      %s115 = sadd.s32 %s114, 1
      %p118 = scmp.eq.s32.totalorder %s28, 1
      %p119 = scmp.ne.s32.totalorder %s114, %s116
      %p120 = scmp.eq.s32.totalorder %s28, 0
      %p121 = por %p119, %p120
      %p122 = scmp.ne.s32.totalorder %s114, %s116
      %p123 = scmp.eq.s32.totalorder %s33, 1
      %p124 = por %p122, %p123
      %p125 = scmp.ne.s32.totalorder %s116, %s117
      %p126 = scmp.eq.s32.totalorder %s33, 0
      %p127 = por %p125, %p126
      %p128 = scmp.ne.s32.totalorder %s116, %s117
      %p129 = scmp.eq.s32.totalorder %s34, 1
      %p130 = por %p128, %p129
      %p132 = scmp.ne.s32.totalorder %s117, %s131
      %p133 = scmp.eq.s32.totalorder %s34, 0
      %p134 = por %p132, %p133
      %s136 = sadd.s32 %s135, 1
      %p139 = scmp.eq.s32.totalorder %s28, 1
      %p140 = scmp.ne.s32.totalorder %s135, %s137
      %p141 = scmp.eq.s32.totalorder %s28, 0
      %p142 = por %p140, %p141
      %p143 = scmp.ne.s32.totalorder %s135, %s137
      %p144 = scmp.eq.s32.totalorder %s33, 1
      %p145 = por %p143, %p144
      %p146 = scmp.ne.s32.totalorder %s137, %s138
      %p147 = scmp.eq.s32.totalorder %s33, 0
      %p148 = por %p146, %p147
      %p149 = scmp.ne.s32.totalorder %s137, %s138
      %p150 = scmp.eq.s32.totalorder %s34, 1
      %p151 = por %p149, %p150
      %p153 = scmp.ne.s32.totalorder %s138, %s152
      %p154 = scmp.eq.s32.totalorder %s34, 0
      %p155 = por %p153, %p154
      %s157 = sadd.s32 %s156, 1
      %p160 = scmp.eq.s32.totalorder %s28, 1
      %p161 = scmp.ne.s32.totalorder %s156, %s158
      %p162 = scmp.eq.s32.totalorder %s28, 0
      %p163 = por %p161, %p162
      %p164 = scmp.ne.s32.totalorder %s156, %s158
      %p165 = scmp.eq.s32.totalorder %s33, 1
      %p166 = por %p164, %p165
      %p167 = scmp.ne.s32.totalorder %s158, %s159
      %p168 = scmp.eq.s32.totalorder %s33, 0
      %p169 = por %p167, %p168
      %p170 = scmp.ne.s32.totalorder %s158, %s159
      %p171 = scmp.eq.s32.totalorder %s34, 1
      %p172 = por %p170, %p171
      %p174 = scmp.ne.s32.totalorder %s159, %s173
      %p175 = scmp.eq.s32.totalorder %s34, 0
      %p176 = por %p174, %p175
      %s178 = sadd.s32 %s177, 1
      %p181 = scmp.eq.s32.totalorder %s28, 1
      %p182 = scmp.ne.s32.totalorder %s177, %s179
      %p183 = scmp.eq.s32.totalorder %s28, 0
      %p184 = por %p182, %p183
      %p185 = scmp.ne.s32.totalorder %s177, %s179
      %p186 = scmp.eq.s32.totalorder %s33, 1
      %p187 = por %p185, %p186
      %p188 = scmp.ne.s32.totalorder %s179, %s180
      %p189 = scmp.eq.s32.totalorder %s33, 0
      %p190 = por %p188, %p189
      %p191 = scmp.ne.s32.totalorder %s179, %s180
      %p192 = scmp.eq.s32.totalorder %s34, 1
      %p193 = por %p191, %p192
      %p195 = scmp.ne.s32.totalorder %s180, %s194
      %p196 = scmp.eq.s32.totalorder %s34, 0
      %p197 = por %p195, %p196
      %s199 = sadd.s32 %s198, 1
      %p202 = scmp.eq.s32.totalorder %s28, 1
      %p203 = scmp.ne.s32.totalorder %s198, %s200
      %p204 = scmp.eq.s32.totalorder %s28, 0
      %p205 = por %p203, %p204
      %p206 = scmp.ne.s32.totalorder %s198, %s200
      %p207 = scmp.eq.s32.totalorder %s33, 1
      %p208 = por %p206, %p207
      %p209 = scmp.ne.s32.totalorder %s200, %s201
      %p210 = scmp.eq.s32.totalorder %s33, 0
      %p211 = por %p209, %p210
      %p212 = scmp.ne.s32.totalorder %s200, %s201
      %p213 = scmp.eq.s32.totalorder %s34, 1
      %p214 = por %p212, %p213
      %p216 = scmp.ne.s32.totalorder %s201, %s215
      %p217 = scmp.eq.s32.totalorder %s34, 0
      %p218 = por %p216, %p217
      %s220 = sadd.s32 %s219, 1
      %p223 = scmp.eq.s32.totalorder %s28, 1
      %p224 = scmp.ne.s32.totalorder %s219, %s221
      %p225 = scmp.eq.s32.totalorder %s28, 0
      %p226 = por %p224, %p225
      %p227 = scmp.ne.s32.totalorder %s219, %s221
      %p228 = scmp.eq.s32.totalorder %s33, 1
      %p229 = por %p227, %p228
      %p230 = scmp.ne.s32.totalorder %s221, %s222
      %p231 = scmp.eq.s32.totalorder %s33, 0
      %p232 = por %p230, %p231
      %p233 = scmp.ne.s32.totalorder %s221, %s222
      %p234 = scmp.eq.s32.totalorder %s34, 1
      %p235 = por %p233, %p234
      %p237 = scmp.ne.s32.totalorder %s222, %s236
      %p238 = scmp.eq.s32.totalorder %s34, 0
      %p239 = por %p237, %p238
      %s241 = sadd.s32 %s240, 1
      %p244 = scmp.eq.s32.totalorder %s28, 1
      %p245 = scmp.ne.s32.totalorder %s240, %s242
      %p246 = scmp.eq.s32.totalorder %s28, 0
      %p247 = por %p245, %p246
      %p248 = scmp.ne.s32.totalorder %s240, %s242
      %p249 = scmp.eq.s32.totalorder %s33, 1
      %p250 = por %p248, %p249
      %p251 = scmp.ne.s32.totalorder %s242, %s243
      %p252 = scmp.eq.s32.totalorder %s33, 0
      %p253 = por %p251, %p252
      %p254 = scmp.ne.s32.totalorder %s242, %s243
      %p255 = scmp.eq.s32.totalorder %s34, 1
      %p256 = por %p254, %p255
      %p258 = scmp.ne.s32.totalorder %s243, %s257
      %p259 = scmp.eq.s32.totalorder %s34, 0
      %p260 = por %p258, %p259
      %s262 = sadd.s32 %s261, 1
      %p265 = scmp.eq.s32.totalorder %s28, 1
      %p266 = scmp.ne.s32.totalorder %s261, %s263
      %p267 = scmp.eq.s32.totalorder %s28, 0
      %p268 = por %p266, %p267
      %p269 = scmp.ne.s32.totalorder %s261, %s263
      %p270 = scmp.eq.s32.totalorder %s33, 1
      %p271 = por %p269, %p270
      %p272 = scmp.ne.s32.totalorder %s263, %s264
      %p273 = scmp.eq.s32.totalorder %s33, 0
      %p274 = por %p272, %p273
      %p275 = scmp.ne.s32.totalorder %s263, %s264
      %p276 = scmp.eq.s32.totalorder %s34, 1
      %p277 = por %p275, %p276
      %p279 = scmp.ne.s32.totalorder %s264, %s278
      %p280 = scmp.eq.s32.totalorder %s34, 0
      %p281 = por %p279, %p280
      %s282 = ssub.s32 %s28, %s35
      %p283 = scmp.eq.s32.totalorder %s282, 0
      %s285 = sadd.s32 %s284, 1
      %s286 = scalar_select %p283, %s284, %s285
      %p289 = pneg %p283
      %p290 = scmp.eq.s32.totalorder %s28, 1
      %p291 = por %p289, %p290
      %p292 = scmp.ne.s32.totalorder %s284, %s287
      %p293 = scmp.eq.s32.totalorder %s28, 0
      %p294 = por %p292, %p293
      %p295 = scmp.ne.s32.totalorder %s284, %s287
      %p296 = scmp.eq.s32.totalorder %s33, 1
      %p297 = por %p295, %p296
      %p298 = scmp.ne.s32.totalorder %s287, %s288
      %p299 = scmp.eq.s32.totalorder %s33, 0
      %p300 = por %p298, %p299
      %p301 = scmp.ne.s32.totalorder %s287, %s288
      %p302 = scmp.eq.s32.totalorder %s34, 1
      %p303 = por %p301, %p302
      %p305 = scmp.ne.s32.totalorder %s288, %s304
      %p306 = scmp.eq.s32.totalorder %s34, 0
      %p307 = por %p305, %p306
      %p308 = scmp.le.s32.totalorder 1, %s28
      %p309 = scmp.lt.s32.totalorder %s28, 3
      %p310 = pnand %p308, %p309
      %p311 = pneg %p310
      // Predicated region
      $region9: #{tpu_custom_call.1} parent=5 // pred_check
        _
      $region10: #{tpu_custom_call.1} parent=5 // pred_check_branch
        %313 = sbr.rel (%p310) target = $region12
      $region11: #{tpu_custom_call.1} parent=5 // pred_region
        %s314 = ssub.s32 %s28, 1
        // Predicated region
        $region13: #{tpu_custom_call.1} parent=11 // pred_check
          %p315 = pneg %p127
        $region14: #{tpu_custom_call.1} parent=11 // pred_check_branch
          %317 = sbr.rel (%p315) target = $region16
        $region15: #{tpu_custom_call.1} parent=11 // pred_region
          %s319 = ssub.s32 512, 512
          %320 = vsyncadd [#allocation9], %s319
          %s321 = sshll.u32 [#allocation8], 4
          %s322 = int_to_ptr.vmem [resolvable:$true] %s321
          %327 = dma.hbm_to_vmem [thread:$0]  %s3, 512, %s322, [#allocation9], 128, 128, 8
        $region16: #{tpu_custom_call.1} parent=11 // pred_fallthru
          _
        // Predicated region
        $region17: #{tpu_custom_call.1} parent=11 // pred_check
          %p328 = pneg %p148
        $region18: #{tpu_custom_call.1} parent=11 // pred_check_branch
          %330 = sbr.rel (%p328) target = $region20
        $region19: #{tpu_custom_call.1} parent=11 // pred_region
          _
        $region20: #{tpu_custom_call.1} parent=11 // pred_fallthru
          _
        // Predicated region
        $region21: #{tpu_custom_call.1} parent=11 // pred_check
          %p331 = pneg %p169
        $region22: #{tpu_custom_call.1} parent=11 // pred_check_branch
          %333 = sbr.rel (%p331) target = $region24
        $region23: #{tpu_custom_call.1} parent=11 // pred_region
          %s335 = ssub.s32 512, 512
          %336 = vsyncadd [#allocation9], %s335
          %s337 = sshll.u32 [#allocation10], 4
          %s338 = int_to_ptr.vmem [resolvable:$true] %s337
          %343 = dma.hbm_to_vmem [thread:$0]  %s5, 512, %s338, [#allocation9], 128, 128, 8
        $region24: #{tpu_custom_call.1} parent=11 // pred_fallthru
          _
        // Predicated region
        $region25: #{tpu_custom_call.1} parent=11 // pred_check
          %p344 = pneg %p190
        $region26: #{tpu_custom_call.1} parent=11 // pred_check_branch
          %346 = sbr.rel (%p344) target = $region28
        $region27: #{tpu_custom_call.1} parent=11 // pred_region
          _
        $region28: #{tpu_custom_call.1} parent=11 // pred_fallthru
          _
        // Predicated region
        $region29: #{tpu_custom_call.1} parent=11 // pred_check
          %p347 = pneg %p211
        $region30: #{tpu_custom_call.1} parent=11 // pred_check_branch
          %349 = sbr.rel (%p347) target = $region32
        $region31: #{tpu_custom_call.1} parent=11 // pred_region
          %s351 = ssub.s32 512, 512
          %352 = vsyncadd [#allocation12], %s351
          %s353 = sshll.u32 [#allocation11], 4
          %s354 = int_to_ptr.vmem [resolvable:$true] %s353
          %359 = dma.hbm_to_vmem [thread:$0]  %s7, 512, %s354, [#allocation12], 128, 128, 8
        $region32: #{tpu_custom_call.1} parent=11 // pred_fallthru
          _
        // Predicated region
        $region33: #{tpu_custom_call.1} parent=11 // pred_check
          %p360 = pneg %p232
        $region34: #{tpu_custom_call.1} parent=11 // pred_check_branch
          %362 = sbr.rel (%p360) target = $region36
        $region35: #{tpu_custom_call.1} parent=11 // pred_region
          _
        $region36: #{tpu_custom_call.1} parent=11 // pred_fallthru
          _
        // Predicated region
        $region37: #{tpu_custom_call.1} parent=11 // pred_check
          %p363 = pneg %p253
        $region38: #{tpu_custom_call.1} parent=11 // pred_check_branch
          %365 = sbr.rel (%p363) target = $region40
        $region39: #{tpu_custom_call.1} parent=11 // pred_region
          %s367 = ssub.s32 512, 512
          %368 = vsyncadd [#allocation12], %s367
          %s369 = sshll.u32 [#allocation13], 4
          %s370 = int_to_ptr.vmem [resolvable:$true] %s369
          %375 = dma.hbm_to_vmem [thread:$0]  %s9, 512, %s370, [#allocation12], 128, 128, 8
        $region40: #{tpu_custom_call.1} parent=11 // pred_fallthru
          _
        // Predicated region
        $region41: #{tpu_custom_call.1} parent=11 // pred_check
          %p376 = pneg %p274
        $region42: #{tpu_custom_call.1} parent=11 // pred_check_branch
          %378 = sbr.rel (%p376) target = $region44
        $region43: #{tpu_custom_call.1} parent=11 // pred_region
          _
        $region44: #{tpu_custom_call.1} parent=11 // pred_fallthru
          _
      $region12: #{tpu_custom_call.1} parent=5 // pred_fallthru
        _
      %p379 = scmp.lt.s32.totalorder %s28, 2
      // Predicated region
      $region45: #{tpu_custom_call.1} parent=5 // pred_check
        %p380 = pneg %p379
      $region46: #{tpu_custom_call.1} parent=5 // pred_check_branch
        %382 = sbr.rel (%p380) target = $region48
      $region47: #{tpu_custom_call.1} parent=5 // pred_region
        // Predicated region
        $region49: #{tpu_custom_call.1} parent=47 // pred_check
          %p383 = pneg %p48
        $region50: #{tpu_custom_call.1} parent=47 // pred_check_branch
          %385 = sbr.rel (%p383) target = $region52
        $region51: #{tpu_custom_call.1} parent=47 // pred_region
          %s386 = sand.u32 %s38, 1
          %s387 = scalar_lea.sflag [#allocation3], %s386
          %s388 = sand.u32 %s38, 1
          %s389 = smul.addr %s388, 8
          %s390 = scalar_lea.vmem [#allocation2], %s389
          %s392 = ssub.s32 128, 128
          %393 = vsyncadd %s387, %s392
          %s394 = smul.addr %s28, 128
          %s395 = scalar_lea.hbm %s0, %s394
          %s397 = sshll.u32 %s390, 4
          %s398 = int_to_ptr.vmem [resolvable:$true] %s397
          %400 = dma.hbm_to_vmem [thread:$0]  %s395, 128, %s398, %s387
        $region52: #{tpu_custom_call.1} parent=47 // pred_fallthru
          _
        // Predicated region
        $region53: #{tpu_custom_call.1} parent=47 // pred_check
          %p401 = pneg %p74
        $region54: #{tpu_custom_call.1} parent=47 // pred_check_branch
          %403 = sbr.rel (%p401) target = $region56
        $region55: #{tpu_custom_call.1} parent=47 // pred_region
          %s404 = sand.u32 %s28, 1
          %s405 = scalar_lea.sflag [#allocation6], %s404
          %s406 = sand.u32 %s64, 1
          %s407 = smul.addr %s406, 8
          %s408 = scalar_lea.vmem [#allocation5], %s407
          %s410 = ssub.s32 128, 128
          %411 = vsyncadd %s405, %s410
          %s412 = smul.addr %s28, 128
          %s413 = scalar_lea.hbm %s1, %s412
          %s415 = sshll.u32 %s408, 4
          %s416 = int_to_ptr.vmem [resolvable:$true] %s415
          %418 = dma.hbm_to_vmem [thread:$0]  %s413, 128, %s416, %s405
        $region56: #{tpu_custom_call.1} parent=47 // pred_fallthru
          _
        // Predicated region
        $region57: #{tpu_custom_call.1} parent=47 // pred_check
          %p419 = pneg %p100
        $region58: #{tpu_custom_call.1} parent=47 // pred_check_branch
          %421 = sbr.rel (%p419) target = $region60
        $region59: #{tpu_custom_call.1} parent=47 // pred_region
          %s422 = sand.u32 %s28, 1
          %s423 = scalar_lea.sflag [#allocation6], %s422
          %s424 = sand.u32 %s90, 1
          %s425 = smul.addr %s424, 8
          %s426 = scalar_lea.vmem [#allocation7], %s425
          %s428 = ssub.s32 128, 128
          %429 = vsyncadd %s423, %s428
          %s430 = smul.addr %s28, 128
          %s431 = scalar_lea.hbm %s2, %s430
          %s433 = sshll.u32 %s426, 4
          %s434 = int_to_ptr.vmem [resolvable:$true] %s433
          %436 = dma.hbm_to_vmem [thread:$0]  %s431, 128, %s434, %s423
        $region60: #{tpu_custom_call.1} parent=47 // pred_fallthru
          _
      $region48: #{tpu_custom_call.1} parent=5 // pred_fallthru
        _
      %p437 = scmp.le.s32.totalorder 1, %s28
      %p438 = scmp.lt.s32.totalorder %s28, 3
      %p439 = pnand %p437, %p438
      %p440 = pneg %p439
      // Predicated region
      $region61: #{tpu_custom_call.1} parent=5 // pred_check
        _
      $region62: #{tpu_custom_call.1} parent=5 // pred_check_branch
        %442 = sbr.rel (%p439) target = $region64
      $region63: #{tpu_custom_call.1} parent=5 // pred_region
        %s443 = ssub.s32 %s28, 1
        %s444 = sand.u32 %s41, 1
        %s445 = scalar_lea.sflag [#allocation3], %s444
        %s446 = sand.u32 %s41, 1
        %s447 = smul.addr %s446, 8
        %s448 = scalar_lea.vmem [#allocation2], %s447
        // Predicated region
        $region65: #{tpu_custom_call.1} parent=63 // pred_check
          %p449 = pneg %p54
        $region66: #{tpu_custom_call.1} parent=63 // pred_check_branch
          %451 = sbr.rel (%p449) target = $region68
        $region67: #{tpu_custom_call.1} parent=63 // pred_region
          %452 = dma.done %s445, 128
        $region68: #{tpu_custom_call.1} parent=63 // pred_fallthru
          _
        %s453 = sand.u32 %s33, 1
        %s454 = scalar_lea.sflag [#allocation6], %s453
        %s455 = sand.u32 %s67, 1
        %s456 = smul.addr %s455, 8
        %s457 = scalar_lea.vmem [#allocation5], %s456
        // Predicated region
        $region69: #{tpu_custom_call.1} parent=63 // pred_check
          %p458 = pneg %p80
        $region70: #{tpu_custom_call.1} parent=63 // pred_check_branch
          %460 = sbr.rel (%p458) target = $region72
        $region71: #{tpu_custom_call.1} parent=63 // pred_region
          %461 = dma.done %s454, 128
        $region72: #{tpu_custom_call.1} parent=63 // pred_fallthru
          _
        %s462 = sand.u32 %s33, 1
        %s463 = scalar_lea.sflag [#allocation6], %s462
        %s464 = sand.u32 %s93, 1
        %s465 = smul.addr %s464, 8
        %s466 = scalar_lea.vmem [#allocation7], %s465
        // Predicated region
        $region73: #{tpu_custom_call.1} parent=63 // pred_check
          %p467 = pneg %p106
        $region74: #{tpu_custom_call.1} parent=63 // pred_check_branch
          %469 = sbr.rel (%p467) target = $region76
        $region75: #{tpu_custom_call.1} parent=63 // pred_region
          %470 = dma.done %s463, 128
        $region76: #{tpu_custom_call.1} parent=63 // pred_fallthru
          _
        // Predicated region
        $region77: #{tpu_custom_call.1} parent=63 // pred_check
          %p471 = pneg %p127
        $region78: #{tpu_custom_call.1} parent=63 // pred_check_branch
          %473 = sbr.rel (%p471) target = $region80
        $region79: #{tpu_custom_call.1} parent=63 // pred_region
          %474 = dma.done [#allocation9], 512
        $region80: #{tpu_custom_call.1} parent=63 // pred_fallthru
          _
        // Predicated region
        $region81: #{tpu_custom_call.1} parent=63 // pred_check
          %p475 = pneg %p169
        $region82: #{tpu_custom_call.1} parent=63 // pred_check_branch
          %477 = sbr.rel (%p475) target = $region84
        $region83: #{tpu_custom_call.1} parent=63 // pred_region
          %478 = dma.done [#allocation9], 512
        $region84: #{tpu_custom_call.1} parent=63 // pred_fallthru
          _
        // Predicated region
        $region85: #{tpu_custom_call.1} parent=63 // pred_check
          %p479 = pneg %p211
        $region86: #{tpu_custom_call.1} parent=63 // pred_check_branch
          %481 = sbr.rel (%p479) target = $region88
        $region87: #{tpu_custom_call.1} parent=63 // pred_region
          %482 = dma.done [#allocation12], 512
        $region88: #{tpu_custom_call.1} parent=63 // pred_fallthru
          _
        // Predicated region
        $region89: #{tpu_custom_call.1} parent=63 // pred_check
          %p483 = pneg %p253
        $region90: #{tpu_custom_call.1} parent=63 // pred_check_branch
          %485 = sbr.rel (%p483) target = $region92
        $region91: #{tpu_custom_call.1} parent=63 // pred_region
          %486 = dma.done [#allocation12], 512
        $region92: #{tpu_custom_call.1} parent=63 // pred_fallthru
          _
        %s487 = sand.u32 %s41, 1
        %s488 = scalar_lea.sflag [#allocation3], %s487
        %s489 = sand.u32 %s41, 1
        %s490 = smul.addr %s489, 8
        %s491 = scalar_lea.vmem [#allocation2], %s490
        %p492 = pneg %p54
        %p493 = pneg %p51
        %s494 = sand.u32 %s33, 1
        %s495 = scalar_lea.sflag [#allocation6], %s494
        %s496 = sand.u32 %s67, 1
        %s497 = smul.addr %s496, 8
        %s498 = scalar_lea.vmem [#allocation5], %s497
        %p499 = pneg %p80
        %p500 = pneg %p77
        %s501 = sand.u32 %s33, 1
        %s502 = scalar_lea.sflag [#allocation6], %s501
        %s503 = sand.u32 %s93, 1
        %s504 = smul.addr %s503, 8
        %s505 = scalar_lea.vmem [#allocation7], %s504
        %p506 = pneg %p106
        %p507 = pneg %p103
        %p508 = pneg %p127
        %p509 = pneg %p124
        %p510 = pneg %p148
        %p511 = pneg %p145
        %p512 = pneg %p169
        %p513 = pneg %p166
        %p514 = pneg %p190
        %p515 = pneg %p187
        %p516 = pneg %p211
        %p517 = pneg %p208
        %p518 = pneg %p232
        %p519 = pneg %p229
        %p520 = pneg %p253
        %p521 = pneg %p250
        %p522 = pneg %p274
        %p523 = pneg %p271
        %p524 = pneg %p300
        %p525 = pneg %p297
        %s526 = sand.u32 %s287, 1
        %s527 = scalar_lea.sflag [#allocation4], %s526
        %s528 = sand.u32 %s287, 1
        %s529 = smul.addr %s528, 8
        %s530 = scalar_lea.vmem [#allocation14], %s529
        %v531 = vld [vmem:[%s448] sm:$0xff]
        %v532 = vld [vmem:[%s457] sm:$0xff]
        %v533 = vld [vmem:[%s466] sm:$0xff]
        %v534 = vld [vmem:[#allocation8] sm:$0xff]
        %v535 = vld [vmem:[#allocation8 + $0x8] sm:$0xff]
        %v536 = vld [vmem:[#allocation8 + $0x10] sm:$0xff]
        %v537 = vld [vmem:[#allocation8 + $0x18] sm:$0xff]
        %v538 = vld [vmem:[%s4] sm:$0x1]
        %v540 = vlaneseq
        %v541 = vshrl.u32 %v540, 7
        %v542 = vsub.s32 0, %v541
        %v543 = vrot.slane %v538, %v542
        %vm545 = vcmask 261120
        %v547 = vsel %vm545, %v531, 0
        %549 = vmatprep.subr.mxu0 0.0
        %550 = vmatpush1.msra.mxu0 0.0
        %551 = vmatprep.subr.mxu0 0.0
        %552 = vmatpush1.msra.mxu0 0.0
        %553 = vmatprep.subr.mxu0 0.0
        %554 = vmatpush1.msra.mxu0 0.0
        %555 = vmatprep.subr.mxu0 0.0
        %556 = vmatpush1.msra.mxu0 0.0
        %557 = vmatprep.subr.mxu0 0.0
        %558 = vmatpush1.msra.mxu0 0.0
        %559 = vmatprep.subr.mxu0 0.0
        %560 = vmatpush1.msra.mxu0 0.0
        %561 = vmatprep.subr.mxu0 0.0
        %562 = vmatpush1.msra.mxu0 0.0
        %563 = vmatprep.subr.mxu0 0.0
        %564 = vmatpush1.msra.mxu0 0.0
        %565 = vmatprep.subr.mxu0 0.0
        %566 = vmatpush1.msra.mxu0 0.0
        %567 = vmatprep.subr.mxu0 0.0
        %568 = vmatpush1.msra.mxu0 0.0
        %569 = vmatprep.subr.mxu0 0.0
        %570 = vmatpush1.msra.mxu0 0.0
        %571 = vmatprep.subr.mxu0 0.0
        %572 = vmatpush1.msra.mxu0 0.0
        %573 = vmatprep.subr.mxu0 0.0
        %574 = vmatpush1.msra.mxu0 %v537
        %575 = vmatprep.subr.mxu0 0.0
        %576 = vmatpush1.msra.mxu0 %v536
        %577 = vmatprep.subr.mxu0 0.0
        %578 = vmatpush1.msra.mxu0 %v535
        %579 = vmatprep.subr.mxu0 0.0
        %580 = vmatpush1.msra.mxu0 %v534
        %581 = vmatprep.subr.mxu0 0.0
        %582 = vmatpush2.msra.mxu0 0.0
        %583 = vmatprep.subr.mxu0 0.0
        %584 = vmatpush2.msra.mxu0 0.0
        %585 = vmatprep.subr.mxu0 0.0
        %586 = vmatpush2.msra.mxu0 0.0
        %587 = vmatprep.subr.mxu0 0.0
        %588 = vmatpush2.msra.mxu0 0.0
        %589 = vmatprep.subr.mxu0 0.0
        %590 = vmatpush2.msra.mxu0 0.0
        %591 = vmatprep.subr.mxu0 0.0
        %592 = vmatpush2.msra.mxu0 0.0
        %593 = vmatprep.subr.mxu0 0.0
        %594 = vmatpush2.msra.mxu0 0.0
        %595 = vmatprep.subr.mxu0 0.0
        %596 = vmatpush2.msra.mxu0 0.0
        %597 = vmatprep.subr.mxu0 0.0
        %598 = vmatpush2.msra.mxu0 0.0
        %599 = vmatprep.subr.mxu0 0.0
        %600 = vmatpush2.msra.mxu0 0.0
        %601 = vmatprep.subr.mxu0 0.0
        %602 = vmatpush2.msra.mxu0 0.0
        %603 = vmatprep.subr.mxu0 0.0
        %604 = vmatpush2.msra.mxu0 0.0
        %605 = vmatprep.subr.mxu0 0.0
        %606 = vmatpush2.msra.mxu0 0.0
        %607 = vmatprep.subr.mxu0 0.0
        %608 = vmatpush2.msra.mxu0 0.0
        %609 = vmatprep.subr.mxu0 0.0
        %610 = vmatpush2.msra.mxu0 0.0
        %611 = vmatprep.subr.mxu0 0.0
        %612 = vmatpush2.msra.mxu0 0.0
        %613 = vmatprep.mubr.f32.mxu0 0.0
        %614 = vmatmul.mubr.f32.gmra.mxu0 %v547
        %v615 = vpop.f32.mrf.mxu0
        %v616 = vadd.f32 %v543, %v615
        %v617 = vpop.f32.mrf.mxu0
        %618 = vdwg.mxu0
        %v619 = vmul.f32 %v616, 0.35355338
        %v620 = vld [vmem:[#allocation10] sm:$0xff]
        %v621 = vld [vmem:[#allocation10 + $0x8] sm:$0xff]
        %v622 = vld [vmem:[#allocation10 + $0x10] sm:$0xff]
        %v623 = vld [vmem:[#allocation10 + $0x18] sm:$0xff]
        %v624 = vld [vmem:[%s6] sm:$0x1]
        %v626 = vlaneseq
        %v627 = vshrl.u32 %v626, 7
        %v628 = vsub.s32 0, %v627
        %v629 = vrot.slane %v624, %v628
        %v632 = vsel %vm545, %v532, 0
        %634 = vmatprep.subr.mxu0 0.0
        %635 = vmatpush1.msra.mxu0 0.0
        %636 = vmatprep.subr.mxu0 0.0
        %637 = vmatpush1.msra.mxu0 0.0
        %638 = vmatprep.subr.mxu0 0.0
        %639 = vmatpush1.msra.mxu0 0.0
        %640 = vmatprep.subr.mxu0 0.0
        %641 = vmatpush1.msra.mxu0 0.0
        %642 = vmatprep.subr.mxu0 0.0
        %643 = vmatpush1.msra.mxu0 0.0
        %644 = vmatprep.subr.mxu0 0.0
        %645 = vmatpush1.msra.mxu0 0.0
        %646 = vmatprep.subr.mxu0 0.0
        %647 = vmatpush1.msra.mxu0 0.0
        %648 = vmatprep.subr.mxu0 0.0
        %649 = vmatpush1.msra.mxu0 0.0
        %650 = vmatprep.subr.mxu0 0.0
        %651 = vmatpush1.msra.mxu0 0.0
        %652 = vmatprep.subr.mxu0 0.0
        %653 = vmatpush1.msra.mxu0 0.0
        %654 = vmatprep.subr.mxu0 0.0
        %655 = vmatpush1.msra.mxu0 0.0
        %656 = vmatprep.subr.mxu0 0.0
        %657 = vmatpush1.msra.mxu0 0.0
        %658 = vmatprep.subr.mxu0 0.0
        %659 = vmatpush1.msra.mxu0 %v623
        %660 = vmatprep.subr.mxu0 0.0
        %661 = vmatpush1.msra.mxu0 %v622
        %662 = vmatprep.subr.mxu0 0.0
        %663 = vmatpush1.msra.mxu0 %v621
        %664 = vmatprep.subr.mxu0 0.0
        %665 = vmatpush1.msra.mxu0 %v620
        %666 = vmatprep.subr.mxu0 0.0
        %667 = vmatpush2.msra.mxu0 0.0
        %668 = vmatprep.subr.mxu0 0.0
        %669 = vmatpush2.msra.mxu0 0.0
        %670 = vmatprep.subr.mxu0 0.0
        %671 = vmatpush2.msra.mxu0 0.0
        %672 = vmatprep.subr.mxu0 0.0
        %673 = vmatpush2.msra.mxu0 0.0
        %674 = vmatprep.subr.mxu0 0.0
        %675 = vmatpush2.msra.mxu0 0.0
        %676 = vmatprep.subr.mxu0 0.0
        %677 = vmatpush2.msra.mxu0 0.0
        %678 = vmatprep.subr.mxu0 0.0
        %679 = vmatpush2.msra.mxu0 0.0
        %680 = vmatprep.subr.mxu0 0.0
        %681 = vmatpush2.msra.mxu0 0.0
        %682 = vmatprep.subr.mxu0 0.0
        %683 = vmatpush2.msra.mxu0 0.0
        %684 = vmatprep.subr.mxu0 0.0
        %685 = vmatpush2.msra.mxu0 0.0
        %686 = vmatprep.subr.mxu0 0.0
        %687 = vmatpush2.msra.mxu0 0.0
        %688 = vmatprep.subr.mxu0 0.0
        %689 = vmatpush2.msra.mxu0 0.0
        %690 = vmatprep.subr.mxu0 0.0
        %691 = vmatpush2.msra.mxu0 0.0
        %692 = vmatprep.subr.mxu0 0.0
        %693 = vmatpush2.msra.mxu0 0.0
        %694 = vmatprep.subr.mxu0 0.0
        %695 = vmatpush2.msra.mxu0 0.0
        %696 = vmatprep.subr.mxu0 0.0
        %697 = vmatpush2.msra.mxu0 0.0
        %698 = vmatprep.mubr.f32.mxu0 0.0
        %699 = vmatmul.mubr.f32.gmra.mxu0 %v632
        %v700 = vpop.f32.mrf.mxu0
        %v701 = vadd.f32 %v629, %v700
        %v702 = vpop.f32.mrf.mxu0
        %703 = vdwg.mxu0
        %v704 = vld [vmem:[#allocation11] sm:$0xff]
        %v705 = vld [vmem:[#allocation11 + $0x8] sm:$0xff]
        %v706 = vld [vmem:[#allocation11 + $0x10] sm:$0xff]
        %v707 = vld [vmem:[#allocation11 + $0x18] sm:$0xff]
        %v708 = vld [vmem:[%s8] sm:$0x1]
        %v710 = vlaneseq
        %v711 = vshrl.u32 %v710, 7
        %v712 = vsub.s32 0, %v711
        %v713 = vrot.slane %v708, %v712
        %v716 = vsel %vm545, %v533, 0
        %718 = vmatprep.subr.mxu0 0.0
        %719 = vmatpush1.msra.mxu0 0.0
        %720 = vmatprep.subr.mxu0 0.0
        %721 = vmatpush1.msra.mxu0 0.0
        %722 = vmatprep.subr.mxu0 0.0
        %723 = vmatpush1.msra.mxu0 0.0
        %724 = vmatprep.subr.mxu0 0.0
        %725 = vmatpush1.msra.mxu0 0.0
        %726 = vmatprep.subr.mxu0 0.0
        %727 = vmatpush1.msra.mxu0 0.0
        %728 = vmatprep.subr.mxu0 0.0
        %729 = vmatpush1.msra.mxu0 0.0
        %730 = vmatprep.subr.mxu0 0.0
        %731 = vmatpush1.msra.mxu0 0.0
        %732 = vmatprep.subr.mxu0 0.0
        %733 = vmatpush1.msra.mxu0 0.0
        %734 = vmatprep.subr.mxu0 0.0
        %735 = vmatpush1.msra.mxu0 0.0
        %736 = vmatprep.subr.mxu0 0.0
        %737 = vmatpush1.msra.mxu0 0.0
        %738 = vmatprep.subr.mxu0 0.0
        %739 = vmatpush1.msra.mxu0 0.0
        %740 = vmatprep.subr.mxu0 0.0
        %741 = vmatpush1.msra.mxu0 0.0
        %742 = vmatprep.subr.mxu0 0.0
        %743 = vmatpush1.msra.mxu0 %v707
        %744 = vmatprep.subr.mxu0 0.0
        %745 = vmatpush1.msra.mxu0 %v706
        %746 = vmatprep.subr.mxu0 0.0
        %747 = vmatpush1.msra.mxu0 %v705
        %748 = vmatprep.subr.mxu0 0.0
        %749 = vmatpush1.msra.mxu0 %v704
        %750 = vmatprep.subr.mxu0 0.0
        %751 = vmatpush2.msra.mxu0 0.0
        %752 = vmatprep.subr.mxu0 0.0
        %753 = vmatpush2.msra.mxu0 0.0
        %754 = vmatprep.subr.mxu0 0.0
        %755 = vmatpush2.msra.mxu0 0.0
        %756 = vmatprep.subr.mxu0 0.0
        %757 = vmatpush2.msra.mxu0 0.0
        %758 = vmatprep.subr.mxu0 0.0
        %759 = vmatpush2.msra.mxu0 0.0
        %760 = vmatprep.subr.mxu0 0.0
        %761 = vmatpush2.msra.mxu0 0.0
        %762 = vmatprep.subr.mxu0 0.0
        %763 = vmatpush2.msra.mxu0 0.0
        %764 = vmatprep.subr.mxu0 0.0
        %765 = vmatpush2.msra.mxu0 0.0
        %766 = vmatprep.subr.mxu0 0.0
        %767 = vmatpush2.msra.mxu0 0.0
        %768 = vmatprep.subr.mxu0 0.0
        %769 = vmatpush2.msra.mxu0 0.0
        %770 = vmatprep.subr.mxu0 0.0
        %771 = vmatpush2.msra.mxu0 0.0
        %772 = vmatprep.subr.mxu0 0.0
        %773 = vmatpush2.msra.mxu0 0.0
        %774 = vmatprep.subr.mxu0 0.0
        %775 = vmatpush2.msra.mxu0 0.0
        %776 = vmatprep.subr.mxu0 0.0
        %777 = vmatpush2.msra.mxu0 0.0
        %778 = vmatprep.subr.mxu0 0.0
        %779 = vmatpush2.msra.mxu0 0.0
        %780 = vmatprep.subr.mxu0 0.0
        %781 = vmatpush2.msra.mxu0 0.0
        %782 = vmatprep.mubr.f32.mxu0 0.0
        %783 = vmatmul.mubr.f32.gmra.mxu0 %v716
        %v784 = vpop.f32.mrf.mxu0
        %v785 = vadd.f32 %v713, %v784
        %v786 = vpop.f32.mrf.mxu0
        %787 = vdwg.mxu0
        %789 = vrot.lane.b32.xlu0 %v619, 120
        %v790 = vpop.permute.xlu0 %789
        %791 = vrot.lane.b32.xlu0 %v619, 112
        %v792 = vpop.permute.xlu0 %791
        %793 = vrot.lane.b32.xlu0 %v619, 104
        %v794 = vpop.permute.xlu0 %793
        %796 = vrot.lane.b32.xlu0 %v701, 120
        %v797 = vpop.permute.xlu0 %796
        %798 = vrot.lane.b32.xlu0 %v701, 112
        %v799 = vpop.permute.xlu0 %798
        %800 = vrot.lane.b32.xlu0 %v701, 104
        %v801 = vpop.permute.xlu0 %800
        %803 = vrot.lane.b32.xlu0 %v785, 120
        %v804 = vpop.permute.xlu0 %803
        %806 = vrot.lane.b32.xlu0 %v785, 112
        %v807 = vpop.permute.xlu0 %806
        %809 = vrot.lane.b32.xlu0 %v785, 104
        %v810 = vpop.permute.xlu0 %809
        %vm812 = vcmask 64512
        %v813 = vsel %vm812, %v619, 0
        %v815 = vsel %vm812, %v701, 0
        %817 = vmatprep.subr.mxu0 0.0
        %818 = vmatpush1.xpose.msra.mxu0 0.0
        %819 = vmatprep.subr.mxu0 0.0
        %820 = vmatpush1.xpose.msra.mxu0 0.0
        %821 = vmatprep.subr.mxu0 0.0
        %822 = vmatpush1.xpose.msra.mxu0 0.0
        %823 = vmatprep.subr.mxu0 0.0
        %824 = vmatpush1.xpose.msra.mxu0 0.0
        %825 = vmatprep.subr.mxu0 0.0
        %826 = vmatpush1.xpose.msra.mxu0 0.0
        %827 = vmatprep.subr.mxu0 0.0
        %828 = vmatpush1.xpose.msra.mxu0 0.0
        %829 = vmatprep.subr.mxu0 0.0
        %830 = vmatpush1.xpose.msra.mxu0 0.0
        %831 = vmatprep.subr.mxu0 0.0
        %832 = vmatpush1.xpose.msra.mxu0 0.0
        %833 = vmatprep.subr.mxu0 0.0
        %834 = vmatpush1.xpose.msra.mxu0 0.0
        %835 = vmatprep.subr.mxu0 0.0
        %836 = vmatpush1.xpose.msra.mxu0 0.0
        %837 = vmatprep.subr.mxu0 0.0
        %838 = vmatpush1.xpose.msra.mxu0 0.0
        %839 = vmatprep.subr.mxu0 0.0
        %840 = vmatpush1.xpose.msra.mxu0 0.0
        %841 = vmatprep.subr.mxu0 0.0
        %842 = vmatpush1.xpose.msra.mxu0 0.0
        %843 = vmatprep.subr.mxu0 0.0
        %844 = vmatpush1.xpose.msra.mxu0 0.0
        %845 = vmatprep.subr.mxu0 0.0
        %846 = vmatpush1.xpose.msra.mxu0 0.0
        %847 = vmatprep.subr.mxu0 0.0
        %848 = vmatpush1.xpose.msra.mxu0 %v815
        %849 = vmatprep.subr.mxu0 0.0
        %850 = vmatpush2.xpose.msra.mxu0 0.0
        %851 = vmatprep.subr.mxu0 0.0
        %852 = vmatpush2.xpose.msra.mxu0 0.0
        %853 = vmatprep.subr.mxu0 0.0
        %854 = vmatpush2.xpose.msra.mxu0 0.0
        %855 = vmatprep.subr.mxu0 0.0
        %856 = vmatpush2.xpose.msra.mxu0 0.0
        %857 = vmatprep.subr.mxu0 0.0
        %858 = vmatpush2.xpose.msra.mxu0 0.0
        %859 = vmatprep.subr.mxu0 0.0
        %860 = vmatpush2.xpose.msra.mxu0 0.0
        %861 = vmatprep.subr.mxu0 0.0
        %862 = vmatpush2.xpose.msra.mxu0 0.0
        %863 = vmatprep.subr.mxu0 0.0
        %864 = vmatpush2.xpose.msra.mxu0 0.0
        %865 = vmatprep.subr.mxu0 0.0
        %866 = vmatpush2.xpose.msra.mxu0 0.0
        %867 = vmatprep.subr.mxu0 0.0
        %868 = vmatpush2.xpose.msra.mxu0 0.0
        %869 = vmatprep.subr.mxu0 0.0
        %870 = vmatpush2.xpose.msra.mxu0 0.0
        %871 = vmatprep.subr.mxu0 0.0
        %872 = vmatpush2.xpose.msra.mxu0 0.0
        %873 = vmatprep.subr.mxu0 0.0
        %874 = vmatpush2.xpose.msra.mxu0 0.0
        %875 = vmatprep.subr.mxu0 0.0
        %876 = vmatpush2.xpose.msra.mxu0 0.0
        %877 = vmatprep.subr.mxu0 0.0
        %878 = vmatpush2.xpose.msra.mxu0 0.0
        %879 = vmatprep.subr.mxu0 0.0
        %880 = vmatpush2.xpose.msra.mxu0 0.0
        %881 = vmatprep.mubr.f32.mxu0 0.0
        %882 = vmatmul.mubr.f32.gmra.mxu0 %v813
        %v883 = vpop.f32.mrf.mxu0
        %v884 = vadd.f32 0.0, %v883
        %v885 = vpop.f32.mrf.mxu0
        %886 = vdwg.mxu0
        %v887 = vsel %vm812, %v790, 0
        %v889 = vsel %vm812, %v797, 0
        %891 = vmatprep.subr.mxu0 0.0
        %892 = vmatpush1.xpose.msra.mxu0 0.0
        %893 = vmatprep.subr.mxu0 0.0
        %894 = vmatpush1.xpose.msra.mxu0 0.0
        %895 = vmatprep.subr.mxu0 0.0
        %896 = vmatpush1.xpose.msra.mxu0 0.0
        %897 = vmatprep.subr.mxu0 0.0
        %898 = vmatpush1.xpose.msra.mxu0 0.0
        %899 = vmatprep.subr.mxu0 0.0
        %900 = vmatpush1.xpose.msra.mxu0 0.0
        %901 = vmatprep.subr.mxu0 0.0
        %902 = vmatpush1.xpose.msra.mxu0 0.0
        %903 = vmatprep.subr.mxu0 0.0
        %904 = vmatpush1.xpose.msra.mxu0 0.0
        %905 = vmatprep.subr.mxu0 0.0
        %906 = vmatpush1.xpose.msra.mxu0 0.0
        %907 = vmatprep.subr.mxu0 0.0
        %908 = vmatpush1.xpose.msra.mxu0 0.0
        %909 = vmatprep.subr.mxu0 0.0
        %910 = vmatpush1.xpose.msra.mxu0 0.0
        %911 = vmatprep.subr.mxu0 0.0
        %912 = vmatpush1.xpose.msra.mxu0 0.0
        %913 = vmatprep.subr.mxu0 0.0
        %914 = vmatpush1.xpose.msra.mxu0 0.0
        %915 = vmatprep.subr.mxu0 0.0
        %916 = vmatpush1.xpose.msra.mxu0 0.0
        %917 = vmatprep.subr.mxu0 0.0
        %918 = vmatpush1.xpose.msra.mxu0 0.0
        %919 = vmatprep.subr.mxu0 0.0
        %920 = vmatpush1.xpose.msra.mxu0 0.0
        %921 = vmatprep.subr.mxu0 0.0
        %922 = vmatpush1.xpose.msra.mxu0 %v889
        %923 = vmatprep.subr.mxu0 0.0
        %924 = vmatpush2.xpose.msra.mxu0 0.0
        %925 = vmatprep.subr.mxu0 0.0
        %926 = vmatpush2.xpose.msra.mxu0 0.0
        %927 = vmatprep.subr.mxu0 0.0
        %928 = vmatpush2.xpose.msra.mxu0 0.0
        %929 = vmatprep.subr.mxu0 0.0
        %930 = vmatpush2.xpose.msra.mxu0 0.0
        %931 = vmatprep.subr.mxu0 0.0
        %932 = vmatpush2.xpose.msra.mxu0 0.0
        %933 = vmatprep.subr.mxu0 0.0
        %934 = vmatpush2.xpose.msra.mxu0 0.0
        %935 = vmatprep.subr.mxu0 0.0
        %936 = vmatpush2.xpose.msra.mxu0 0.0
        %937 = vmatprep.subr.mxu0 0.0
        %938 = vmatpush2.xpose.msra.mxu0 0.0
        %939 = vmatprep.subr.mxu0 0.0
        %940 = vmatpush2.xpose.msra.mxu0 0.0
        %941 = vmatprep.subr.mxu0 0.0
        %942 = vmatpush2.xpose.msra.mxu0 0.0
        %943 = vmatprep.subr.mxu0 0.0
        %944 = vmatpush2.xpose.msra.mxu0 0.0
        %945 = vmatprep.subr.mxu0 0.0
        %946 = vmatpush2.xpose.msra.mxu0 0.0
        %947 = vmatprep.subr.mxu0 0.0
        %948 = vmatpush2.xpose.msra.mxu0 0.0
        %949 = vmatprep.subr.mxu0 0.0
        %950 = vmatpush2.xpose.msra.mxu0 0.0
        %951 = vmatprep.subr.mxu0 0.0
        %952 = vmatpush2.xpose.msra.mxu0 0.0
        %953 = vmatprep.subr.mxu0 0.0
        %954 = vmatpush2.xpose.msra.mxu0 0.0
        %955 = vmatprep.mubr.f32.mxu0 0.0
        %956 = vmatmul.mubr.f32.gmra.mxu0 %v887
        %v957 = vpop.f32.mrf.mxu0
        %v958 = vadd.f32 0.0, %v957
        %v959 = vpop.f32.mrf.mxu0
        %960 = vdwg.mxu0
        %v961 = vsel %vm812, %v792, 0
        %v963 = vsel %vm812, %v799, 0
        %965 = vmatprep.subr.mxu0 0.0
        %966 = vmatpush1.xpose.msra.mxu0 0.0
        %967 = vmatprep.subr.mxu0 0.0
        %968 = vmatpush1.xpose.msra.mxu0 0.0
        %969 = vmatprep.subr.mxu0 0.0
        %970 = vmatpush1.xpose.msra.mxu0 0.0
        %971 = vmatprep.subr.mxu0 0.0
        %972 = vmatpush1.xpose.msra.mxu0 0.0
        %973 = vmatprep.subr.mxu0 0.0
        %974 = vmatpush1.xpose.msra.mxu0 0.0
        %975 = vmatprep.subr.mxu0 0.0
        %976 = vmatpush1.xpose.msra.mxu0 0.0
        %977 = vmatprep.subr.mxu0 0.0
        %978 = vmatpush1.xpose.msra.mxu0 0.0
        %979 = vmatprep.subr.mxu0 0.0
        %980 = vmatpush1.xpose.msra.mxu0 0.0
        %981 = vmatprep.subr.mxu0 0.0
        %982 = vmatpush1.xpose.msra.mxu0 0.0
        %983 = vmatprep.subr.mxu0 0.0
        %984 = vmatpush1.xpose.msra.mxu0 0.0
        %985 = vmatprep.subr.mxu0 0.0
        %986 = vmatpush1.xpose.msra.mxu0 0.0
        %987 = vmatprep.subr.mxu0 0.0
        %988 = vmatpush1.xpose.msra.mxu0 0.0
        %989 = vmatprep.subr.mxu0 0.0
        %990 = vmatpush1.xpose.msra.mxu0 0.0
        %991 = vmatprep.subr.mxu0 0.0
        %992 = vmatpush1.xpose.msra.mxu0 0.0
        %993 = vmatprep.subr.mxu0 0.0
        %994 = vmatpush1.xpose.msra.mxu0 0.0
        %995 = vmatprep.subr.mxu0 0.0
        %996 = vmatpush1.xpose.msra.mxu0 %v963
        %997 = vmatprep.subr.mxu0 0.0
        %998 = vmatpush2.xpose.msra.mxu0 0.0
        %999 = vmatprep.subr.mxu0 0.0
        %1000 = vmatpush2.xpose.msra.mxu0 0.0
        %1001 = vmatprep.subr.mxu0 0.0
        %1002 = vmatpush2.xpose.msra.mxu0 0.0
        %1003 = vmatprep.subr.mxu0 0.0
        %1004 = vmatpush2.xpose.msra.mxu0 0.0
        %1005 = vmatprep.subr.mxu0 0.0
        %1006 = vmatpush2.xpose.msra.mxu0 0.0
        %1007 = vmatprep.subr.mxu0 0.0
        %1008 = vmatpush2.xpose.msra.mxu0 0.0
        %1009 = vmatprep.subr.mxu0 0.0
        %1010 = vmatpush2.xpose.msra.mxu0 0.0
        %1011 = vmatprep.subr.mxu0 0.0
        %1012 = vmatpush2.xpose.msra.mxu0 0.0
        %1013 = vmatprep.subr.mxu0 0.0
        %1014 = vmatpush2.xpose.msra.mxu0 0.0
        %1015 = vmatprep.subr.mxu0 0.0
        %1016 = vmatpush2.xpose.msra.mxu0 0.0
        %1017 = vmatprep.subr.mxu0 0.0
        %1018 = vmatpush2.xpose.msra.mxu0 0.0
        %1019 = vmatprep.subr.mxu0 0.0
        %1020 = vmatpush2.xpose.msra.mxu0 0.0
        %1021 = vmatprep.subr.mxu0 0.0
        %1022 = vmatpush2.xpose.msra.mxu0 0.0
        %1023 = vmatprep.subr.mxu0 0.0
        %1024 = vmatpush2.xpose.msra.mxu0 0.0
        %1025 = vmatprep.subr.mxu0 0.0
        %1026 = vmatpush2.xpose.msra.mxu0 0.0
        %1027 = vmatprep.subr.mxu0 0.0
        %1028 = vmatpush2.xpose.msra.mxu0 0.0
        %1029 = vmatprep.mubr.f32.mxu0 0.0
        %1030 = vmatmul.mubr.f32.gmra.mxu0 %v961
        %v1031 = vpop.f32.mrf.mxu0
        %v1032 = vadd.f32 0.0, %v1031
        %v1033 = vpop.f32.mrf.mxu0
        %1034 = vdwg.mxu0
        %v1035 = vsel %vm812, %v794, 0
        %v1037 = vsel %vm812, %v801, 0
        %1039 = vmatprep.subr.mxu0 0.0
        %1040 = vmatpush1.xpose.msra.mxu0 0.0
        %1041 = vmatprep.subr.mxu0 0.0
        %1042 = vmatpush1.xpose.msra.mxu0 0.0
        %1043 = vmatprep.subr.mxu0 0.0
        %1044 = vmatpush1.xpose.msra.mxu0 0.0
        %1045 = vmatprep.subr.mxu0 0.0
        %1046 = vmatpush1.xpose.msra.mxu0 0.0
        %1047 = vmatprep.subr.mxu0 0.0
        %1048 = vmatpush1.xpose.msra.mxu0 0.0
        %1049 = vmatprep.subr.mxu0 0.0
        %1050 = vmatpush1.xpose.msra.mxu0 0.0
        %1051 = vmatprep.subr.mxu0 0.0
        %1052 = vmatpush1.xpose.msra.mxu0 0.0
        %1053 = vmatprep.subr.mxu0 0.0
        %1054 = vmatpush1.xpose.msra.mxu0 0.0
        %1055 = vmatprep.subr.mxu0 0.0
        %1056 = vmatpush1.xpose.msra.mxu0 0.0
        %1057 = vmatprep.subr.mxu0 0.0
        %1058 = vmatpush1.xpose.msra.mxu0 0.0
        %1059 = vmatprep.subr.mxu0 0.0
        %1060 = vmatpush1.xpose.msra.mxu0 0.0
        %1061 = vmatprep.subr.mxu0 0.0
        %1062 = vmatpush1.xpose.msra.mxu0 0.0
        %1063 = vmatprep.subr.mxu0 0.0
        %1064 = vmatpush1.xpose.msra.mxu0 0.0
        %1065 = vmatprep.subr.mxu0 0.0
        %1066 = vmatpush1.xpose.msra.mxu0 0.0
        %1067 = vmatprep.subr.mxu0 0.0
        %1068 = vmatpush1.xpose.msra.mxu0 0.0
        %1069 = vmatprep.subr.mxu0 0.0
        %1070 = vmatpush1.xpose.msra.mxu0 %v1037
        %1071 = vmatprep.subr.mxu0 0.0
        %1072 = vmatpush2.xpose.msra.mxu0 0.0
        %1073 = vmatprep.subr.mxu0 0.0
        %1074 = vmatpush2.xpose.msra.mxu0 0.0
        %1075 = vmatprep.subr.mxu0 0.0
        %1076 = vmatpush2.xpose.msra.mxu0 0.0
        %1077 = vmatprep.subr.mxu0 0.0
        %1078 = vmatpush2.xpose.msra.mxu0 0.0
        %1079 = vmatprep.subr.mxu0 0.0
        %1080 = vmatpush2.xpose.msra.mxu0 0.0
        %1081 = vmatprep.subr.mxu0 0.0
        %1082 = vmatpush2.xpose.msra.mxu0 0.0
        %1083 = vmatprep.subr.mxu0 0.0
        %1084 = vmatpush2.xpose.msra.mxu0 0.0
        %1085 = vmatprep.subr.mxu0 0.0
        %1086 = vmatpush2.xpose.msra.mxu0 0.0
        %1087 = vmatprep.subr.mxu0 0.0
        %1088 = vmatpush2.xpose.msra.mxu0 0.0
        %1089 = vmatprep.subr.mxu0 0.0
        %1090 = vmatpush2.xpose.msra.mxu0 0.0
        %1091 = vmatprep.subr.mxu0 0.0
        %1092 = vmatpush2.xpose.msra.mxu0 0.0
        %1093 = vmatprep.subr.mxu0 0.0
        %1094 = vmatpush2.xpose.msra.mxu0 0.0
        %1095 = vmatprep.subr.mxu0 0.0
        %1096 = vmatpush2.xpose.msra.mxu0 0.0
        %1097 = vmatprep.subr.mxu0 0.0
        %1098 = vmatpush2.xpose.msra.mxu0 0.0
        %1099 = vmatprep.subr.mxu0 0.0
        %1100 = vmatpush2.xpose.msra.mxu0 0.0
        %1101 = vmatprep.subr.mxu0 0.0
        %1102 = vmatpush2.xpose.msra.mxu0 0.0
        %1103 = vmatprep.mubr.f32.mxu0 0.0
        %1104 = vmatmul.mubr.f32.gmra.mxu0 %v1035
        %v1105 = vpop.f32.mrf.mxu0
        %v1106 = vadd.f32 0.0, %v1105
        %v1107 = vpop.f32.mrf.mxu0
        %1108 = vdwg.mxu0
        %v1109 = vsel %vm812, %v884, -inf
        %1110 = vmax.xlane.f32.xlu0 %v1109
        %v1111 = vpop.xlane.xlu0 %1110
        %v1112 = vsel %vm812, %v958, -inf
        %1113 = vmax.xlane.f32.xlu0 %v1112
        %v1114 = vpop.xlane.xlu0 %1113
        %v1115 = vsel %vm812, %v1032, -inf
        %1116 = vmax.xlane.f32.xlu0 %v1115
        %v1117 = vpop.xlane.xlu0 %1116
        %v1118 = vsel %vm812, %v1106, -inf
        %1119 = vmax.xlane.f32.xlu0 %v1118
        %v1120 = vpop.xlane.xlu0 %1119
        %v1121 = vsub.f32 %v884, %v1111
        %v1122 = vsub.f32 %v958, %v1114
        %v1123 = vsub.f32 %v1032, %v1117
        %v1124 = vsub.f32 %v1106, %v1120
        %v1125 = vmul.f32 %v1121, 1.442695
        %v1126 = vpow.pop %v1125
        %v1127 = vmul.f32 %v1122, 1.442695
        %v1128 = vpow.pop %v1127
        %v1129 = vmul.f32 %v1123, 1.442695
        %v1130 = vpow.pop %v1129
        %v1131 = vmul.f32 %v1124, 1.442695
        %v1132 = vpow.pop %v1131
        %v1133 = vsel %vm812, %v1126, 0.0
        %1134 = vadd.xlane.f32.xlu0 %v1133
        %v1135 = vpop.xlane.xlu0 %1134
        %v1136 = vsel %vm812, %v1128, 0.0
        %1137 = vadd.xlane.f32.xlu0 %v1136
        %v1138 = vpop.xlane.xlu0 %1137
        %v1139 = vsel %vm812, %v1130, 0.0
        %1140 = vadd.xlane.f32.xlu0 %v1139
        %v1141 = vpop.xlane.xlu0 %1140
        %v1142 = vsel %vm812, %v1132, 0.0
        %1143 = vadd.xlane.f32.xlu0 %v1142
        %v1144 = vpop.xlane.xlu0 %1143
        %v1145 = vrcp.pop %v1135
        %v1146 = vrcp.pop %v1138
        %v1147 = vrcp.pop %v1141
        %v1148 = vrcp.pop %v1144
        %v1149 = vmul.f32 %v1126, %v1145
        %v1150 = vmul.f32 %v1128, %v1146
        %v1151 = vmul.f32 %v1130, %v1147
        %v1152 = vmul.f32 %v1132, %v1148
        %v1154 = vsel %vm812, %v1149, 0
        %1156 = vmatprep.subr.mxu0 0.0
        %1157 = vmatpush1.msra.mxu0 0.0
        %1158 = vmatprep.subr.mxu0 0.0
        %1159 = vmatpush1.msra.mxu0 0.0
        %1160 = vmatprep.subr.mxu0 0.0
        %1161 = vmatpush1.msra.mxu0 0.0
        %1162 = vmatprep.subr.mxu0 0.0
        %1163 = vmatpush1.msra.mxu0 0.0
        %1164 = vmatprep.subr.mxu0 0.0
        %1165 = vmatpush1.msra.mxu0 0.0
        %1166 = vmatprep.subr.mxu0 0.0
        %1167 = vmatpush1.msra.mxu0 0.0
        %1168 = vmatprep.subr.mxu0 0.0
        %1169 = vmatpush1.msra.mxu0 0.0
        %1170 = vmatprep.subr.mxu0 0.0
        %1171 = vmatpush1.msra.mxu0 0.0
        %1172 = vmatprep.subr.mxu0 0.0
        %1173 = vmatpush1.msra.mxu0 0.0
        %1174 = vmatprep.subr.mxu0 0.0
        %1175 = vmatpush1.msra.mxu0 0.0
        %1176 = vmatprep.subr.mxu0 0.0
        %1177 = vmatpush1.msra.mxu0 0.0
        %1178 = vmatprep.subr.mxu0 0.0
        %1179 = vmatpush1.msra.mxu0 0.0
        %1180 = vmatprep.subr.mxu0 0.0
        %1181 = vmatpush1.msra.mxu0 0.0
        %1182 = vmatprep.subr.mxu0 0.0
        %1183 = vmatpush1.msra.mxu0 0.0
        %1184 = vmatprep.subr.mxu0 0.0
        %1185 = vmatpush1.msra.mxu0 0.0
        %1186 = vmatprep.subr.mxu0 0.0
        %1187 = vmatpush1.msra.mxu0 %v785
        %1188 = vmatprep.subr.mxu0 0.0
        %1189 = vmatpush2.msra.mxu0 0.0
        %1190 = vmatprep.subr.mxu0 0.0
        %1191 = vmatpush2.msra.mxu0 0.0
        %1192 = vmatprep.subr.mxu0 0.0
        %1193 = vmatpush2.msra.mxu0 0.0
        %1194 = vmatprep.subr.mxu0 0.0
        %1195 = vmatpush2.msra.mxu0 0.0
        %1196 = vmatprep.subr.mxu0 0.0
        %1197 = vmatpush2.msra.mxu0 0.0
        %1198 = vmatprep.subr.mxu0 0.0
        %1199 = vmatpush2.msra.mxu0 0.0
        %1200 = vmatprep.subr.mxu0 0.0
        %1201 = vmatpush2.msra.mxu0 0.0
        %1202 = vmatprep.subr.mxu0 0.0
        %1203 = vmatpush2.msra.mxu0 0.0
        %1204 = vmatprep.subr.mxu0 0.0
        %1205 = vmatpush2.msra.mxu0 0.0
        %1206 = vmatprep.subr.mxu0 0.0
        %1207 = vmatpush2.msra.mxu0 0.0
        %1208 = vmatprep.subr.mxu0 0.0
        %1209 = vmatpush2.msra.mxu0 0.0
        %1210 = vmatprep.subr.mxu0 0.0
        %1211 = vmatpush2.msra.mxu0 0.0
        %1212 = vmatprep.subr.mxu0 0.0
        %1213 = vmatpush2.msra.mxu0 0.0
        %1214 = vmatprep.subr.mxu0 0.0
        %1215 = vmatpush2.msra.mxu0 0.0
        %1216 = vmatprep.subr.mxu0 0.0
        %1217 = vmatpush2.msra.mxu0 0.0
        %1218 = vmatprep.subr.mxu0 0.0
        %1219 = vmatpush2.msra.mxu0 0.0
        %1220 = vmatprep.mubr.f32.mxu0 0.0
        %1221 = vmatmul.mubr.f32.gmra.mxu0 %v1154
        %v1222 = vpop.f32.mrf.mxu0
        %v1223 = vadd.f32 0.0, %v1222
        %v1224 = vpop.f32.mrf.mxu0
        %1225 = vdwg.mxu0
        %v1227 = vsel %vm812, %v1150, 0
        %1229 = vmatprep.subr.mxu0 0.0
        %1230 = vmatpush1.msra.mxu0 0.0
        %1231 = vmatprep.subr.mxu0 0.0
        %1232 = vmatpush1.msra.mxu0 0.0
        %1233 = vmatprep.subr.mxu0 0.0
        %1234 = vmatpush1.msra.mxu0 0.0
        %1235 = vmatprep.subr.mxu0 0.0
        %1236 = vmatpush1.msra.mxu0 0.0
        %1237 = vmatprep.subr.mxu0 0.0
        %1238 = vmatpush1.msra.mxu0 0.0
        %1239 = vmatprep.subr.mxu0 0.0
        %1240 = vmatpush1.msra.mxu0 0.0
        %1241 = vmatprep.subr.mxu0 0.0
        %1242 = vmatpush1.msra.mxu0 0.0
        %1243 = vmatprep.subr.mxu0 0.0
        %1244 = vmatpush1.msra.mxu0 0.0
        %1245 = vmatprep.subr.mxu0 0.0
        %1246 = vmatpush1.msra.mxu0 0.0
        %1247 = vmatprep.subr.mxu0 0.0
        %1248 = vmatpush1.msra.mxu0 0.0
        %1249 = vmatprep.subr.mxu0 0.0
        %1250 = vmatpush1.msra.mxu0 0.0
        %1251 = vmatprep.subr.mxu0 0.0
        %1252 = vmatpush1.msra.mxu0 0.0
        %1253 = vmatprep.subr.mxu0 0.0
        %1254 = vmatpush1.msra.mxu0 0.0
        %1255 = vmatprep.subr.mxu0 0.0
        %1256 = vmatpush1.msra.mxu0 0.0
        %1257 = vmatprep.subr.mxu0 0.0
        %1258 = vmatpush1.msra.mxu0 0.0
        %1259 = vmatprep.subr.mxu0 0.0
        %1260 = vmatpush1.msra.mxu0 %v804
        %1261 = vmatprep.subr.mxu0 0.0
        %1262 = vmatpush2.msra.mxu0 0.0
        %1263 = vmatprep.subr.mxu0 0.0
        %1264 = vmatpush2.msra.mxu0 0.0
        %1265 = vmatprep.subr.mxu0 0.0
        %1266 = vmatpush2.msra.mxu0 0.0
        %1267 = vmatprep.subr.mxu0 0.0
        %1268 = vmatpush2.msra.mxu0 0.0
        %1269 = vmatprep.subr.mxu0 0.0
        %1270 = vmatpush2.msra.mxu0 0.0
        %1271 = vmatprep.subr.mxu0 0.0
        %1272 = vmatpush2.msra.mxu0 0.0
        %1273 = vmatprep.subr.mxu0 0.0
        %1274 = vmatpush2.msra.mxu0 0.0
        %1275 = vmatprep.subr.mxu0 0.0
        %1276 = vmatpush2.msra.mxu0 0.0
        %1277 = vmatprep.subr.mxu0 0.0
        %1278 = vmatpush2.msra.mxu0 0.0
        %1279 = vmatprep.subr.mxu0 0.0
        %1280 = vmatpush2.msra.mxu0 0.0
        %1281 = vmatprep.subr.mxu0 0.0
        %1282 = vmatpush2.msra.mxu0 0.0
        %1283 = vmatprep.subr.mxu0 0.0
        %1284 = vmatpush2.msra.mxu0 0.0
        %1285 = vmatprep.subr.mxu0 0.0
        %1286 = vmatpush2.msra.mxu0 0.0
        %1287 = vmatprep.subr.mxu0 0.0
        %1288 = vmatpush2.msra.mxu0 0.0
        %1289 = vmatprep.subr.mxu0 0.0
        %1290 = vmatpush2.msra.mxu0 0.0
        %1291 = vmatprep.subr.mxu0 0.0
        %1292 = vmatpush2.msra.mxu0 0.0
        %1293 = vmatprep.mubr.f32.mxu0 0.0
        %1294 = vmatmul.mubr.f32.gmra.mxu0 %v1227
        %v1295 = vpop.f32.mrf.mxu0
        %v1296 = vadd.f32 0.0, %v1295
        %v1297 = vpop.f32.mrf.mxu0
        %1298 = vdwg.mxu0
        %v1300 = vsel %vm812, %v1151, 0
        %1302 = vmatprep.subr.mxu0 0.0
        %1303 = vmatpush1.msra.mxu0 0.0
        %1304 = vmatprep.subr.mxu0 0.0
        %1305 = vmatpush1.msra.mxu0 0.0
        %1306 = vmatprep.subr.mxu0 0.0
        %1307 = vmatpush1.msra.mxu0 0.0
        %1308 = vmatprep.subr.mxu0 0.0
        %1309 = vmatpush1.msra.mxu0 0.0
        %1310 = vmatprep.subr.mxu0 0.0
        %1311 = vmatpush1.msra.mxu0 0.0
        %1312 = vmatprep.subr.mxu0 0.0
        %1313 = vmatpush1.msra.mxu0 0.0
        %1314 = vmatprep.subr.mxu0 0.0
        %1315 = vmatpush1.msra.mxu0 0.0
        %1316 = vmatprep.subr.mxu0 0.0
        %1317 = vmatpush1.msra.mxu0 0.0
        %1318 = vmatprep.subr.mxu0 0.0
        %1319 = vmatpush1.msra.mxu0 0.0
        %1320 = vmatprep.subr.mxu0 0.0
        %1321 = vmatpush1.msra.mxu0 0.0
        %1322 = vmatprep.subr.mxu0 0.0
        %1323 = vmatpush1.msra.mxu0 0.0
        %1324 = vmatprep.subr.mxu0 0.0
        %1325 = vmatpush1.msra.mxu0 0.0
        %1326 = vmatprep.subr.mxu0 0.0
        %1327 = vmatpush1.msra.mxu0 0.0
        %1328 = vmatprep.subr.mxu0 0.0
        %1329 = vmatpush1.msra.mxu0 0.0
        %1330 = vmatprep.subr.mxu0 0.0
        %1331 = vmatpush1.msra.mxu0 0.0
        %1332 = vmatprep.subr.mxu0 0.0
        %1333 = vmatpush1.msra.mxu0 %v807
        %1334 = vmatprep.subr.mxu0 0.0
        %1335 = vmatpush2.msra.mxu0 0.0
        %1336 = vmatprep.subr.mxu0 0.0
        %1337 = vmatpush2.msra.mxu0 0.0
        %1338 = vmatprep.subr.mxu0 0.0
        %1339 = vmatpush2.msra.mxu0 0.0
        %1340 = vmatprep.subr.mxu0 0.0
        %1341 = vmatpush2.msra.mxu0 0.0
        %1342 = vmatprep.subr.mxu0 0.0
        %1343 = vmatpush2.msra.mxu0 0.0
        %1344 = vmatprep.subr.mxu0 0.0
        %1345 = vmatpush2.msra.mxu0 0.0
        %1346 = vmatprep.subr.mxu0 0.0
        %1347 = vmatpush2.msra.mxu0 0.0
        %1348 = vmatprep.subr.mxu0 0.0
        %1349 = vmatpush2.msra.mxu0 0.0
        %1350 = vmatprep.subr.mxu0 0.0
        %1351 = vmatpush2.msra.mxu0 0.0
        %1352 = vmatprep.subr.mxu0 0.0
        %1353 = vmatpush2.msra.mxu0 0.0
        %1354 = vmatprep.subr.mxu0 0.0
        %1355 = vmatpush2.msra.mxu0 0.0
        %1356 = vmatprep.subr.mxu0 0.0
        %1357 = vmatpush2.msra.mxu0 0.0
        %1358 = vmatprep.subr.mxu0 0.0
        %1359 = vmatpush2.msra.mxu0 0.0
        %1360 = vmatprep.subr.mxu0 0.0
        %1361 = vmatpush2.msra.mxu0 0.0
        %1362 = vmatprep.subr.mxu0 0.0
        %1363 = vmatpush2.msra.mxu0 0.0
        %1364 = vmatprep.subr.mxu0 0.0
        %1365 = vmatpush2.msra.mxu0 0.0
        %1366 = vmatprep.mubr.f32.mxu0 0.0
        %1367 = vmatmul.mubr.f32.gmra.mxu0 %v1300
        %v1368 = vpop.f32.mrf.mxu0
        %v1369 = vadd.f32 0.0, %v1368
        %v1370 = vpop.f32.mrf.mxu0
        %1371 = vdwg.mxu0
        %v1373 = vsel %vm812, %v1152, 0
        %1375 = vmatprep.subr.mxu0 0.0
        %1376 = vmatpush1.msra.mxu0 0.0
        %1377 = vmatprep.subr.mxu0 0.0
        %1378 = vmatpush1.msra.mxu0 0.0
        %1379 = vmatprep.subr.mxu0 0.0
        %1380 = vmatpush1.msra.mxu0 0.0
        %1381 = vmatprep.subr.mxu0 0.0
        %1382 = vmatpush1.msra.mxu0 0.0
        %1383 = vmatprep.subr.mxu0 0.0
        %1384 = vmatpush1.msra.mxu0 0.0
        %1385 = vmatprep.subr.mxu0 0.0
        %1386 = vmatpush1.msra.mxu0 0.0
        %1387 = vmatprep.subr.mxu0 0.0
        %1388 = vmatpush1.msra.mxu0 0.0
        %1389 = vmatprep.subr.mxu0 0.0
        %1390 = vmatpush1.msra.mxu0 0.0
        %1391 = vmatprep.subr.mxu0 0.0
        %1392 = vmatpush1.msra.mxu0 0.0
        %1393 = vmatprep.subr.mxu0 0.0
        %1394 = vmatpush1.msra.mxu0 0.0
        %1395 = vmatprep.subr.mxu0 0.0
        %1396 = vmatpush1.msra.mxu0 0.0
        %1397 = vmatprep.subr.mxu0 0.0
        %1398 = vmatpush1.msra.mxu0 0.0
        %1399 = vmatprep.subr.mxu0 0.0
        %1400 = vmatpush1.msra.mxu0 0.0
        %1401 = vmatprep.subr.mxu0 0.0
        %1402 = vmatpush1.msra.mxu0 0.0
        %1403 = vmatprep.subr.mxu0 0.0
        %1404 = vmatpush1.msra.mxu0 0.0
        %1405 = vmatprep.subr.mxu0 0.0
        %1406 = vmatpush1.msra.mxu0 %v810
        %1407 = vmatprep.subr.mxu0 0.0
        %1408 = vmatpush2.msra.mxu0 0.0
        %1409 = vmatprep.subr.mxu0 0.0
        %1410 = vmatpush2.msra.mxu0 0.0
        %1411 = vmatprep.subr.mxu0 0.0
        %1412 = vmatpush2.msra.mxu0 0.0
        %1413 = vmatprep.subr.mxu0 0.0
        %1414 = vmatpush2.msra.mxu0 0.0
        %1415 = vmatprep.subr.mxu0 0.0
        %1416 = vmatpush2.msra.mxu0 0.0
        %1417 = vmatprep.subr.mxu0 0.0
        %1418 = vmatpush2.msra.mxu0 0.0
        %1419 = vmatprep.subr.mxu0 0.0
        %1420 = vmatpush2.msra.mxu0 0.0
        %1421 = vmatprep.subr.mxu0 0.0
        %1422 = vmatpush2.msra.mxu0 0.0
        %1423 = vmatprep.subr.mxu0 0.0
        %1424 = vmatpush2.msra.mxu0 0.0
        %1425 = vmatprep.subr.mxu0 0.0
        %1426 = vmatpush2.msra.mxu0 0.0
        %1427 = vmatprep.subr.mxu0 0.0
        %1428 = vmatpush2.msra.mxu0 0.0
        %1429 = vmatprep.subr.mxu0 0.0
        %1430 = vmatpush2.msra.mxu0 0.0
        %1431 = vmatprep.subr.mxu0 0.0
        %1432 = vmatpush2.msra.mxu0 0.0
        %1433 = vmatprep.subr.mxu0 0.0
        %1434 = vmatpush2.msra.mxu0 0.0
        %1435 = vmatprep.subr.mxu0 0.0
        %1436 = vmatpush2.msra.mxu0 0.0
        %1437 = vmatprep.subr.mxu0 0.0
        %1438 = vmatpush2.msra.mxu0 0.0
        %1439 = vmatprep.mubr.f32.mxu0 0.0
        %1440 = vmatmul.mubr.f32.gmra.mxu0 %v1373
        %v1441 = vpop.f32.mrf.mxu0
        %v1442 = vadd.f32 0.0, %v1441
        %v1443 = vpop.f32.mrf.mxu0
        %1444 = vdwg.mxu0
        %v1445 = vld [vmem:[#allocation13] sm:$0xff]
        %v1446 = vld [vmem:[#allocation13 + $0x8] sm:$0xff]
        %v1447 = vld [vmem:[#allocation13 + $0x10] sm:$0xff]
        %v1448 = vld [vmem:[#allocation13 + $0x18] sm:$0xff]
        %v1450 = vsel %vm812, %v1296, 0
        %1452 = vmatprep.subr.mxu0 0.0
        %1453 = vmatpush1.msra.mxu0 0.0
        %1454 = vmatprep.subr.mxu0 0.0
        %1455 = vmatpush1.msra.mxu0 0.0
        %1456 = vmatprep.subr.mxu0 0.0
        %1457 = vmatpush1.msra.mxu0 0.0
        %1458 = vmatprep.subr.mxu0 0.0
        %1459 = vmatpush1.msra.mxu0 0.0
        %1460 = vmatprep.subr.mxu0 0.0
        %1461 = vmatpush1.msra.mxu0 0.0
        %1462 = vmatprep.subr.mxu0 0.0
        %1463 = vmatpush1.msra.mxu0 0.0
        %1464 = vmatprep.subr.mxu0 0.0
        %1465 = vmatpush1.msra.mxu0 0.0
        %1466 = vmatprep.subr.mxu0 0.0
        %1467 = vmatpush1.msra.mxu0 0.0
        %1468 = vmatprep.subr.mxu0 0.0
        %1469 = vmatpush1.msra.mxu0 0.0
        %1470 = vmatprep.subr.mxu0 0.0
        %1471 = vmatpush1.msra.mxu0 0.0
        %1472 = vmatprep.subr.mxu0 0.0
        %1473 = vmatpush1.msra.mxu0 0.0
        %1474 = vmatprep.subr.mxu0 0.0
        %1475 = vmatpush1.msra.mxu0 0.0
        %1476 = vmatprep.subr.mxu0 0.0
        %1477 = vmatpush1.msra.mxu0 0.0
        %1478 = vmatprep.subr.mxu0 0.0
        %1479 = vmatpush1.msra.mxu0 0.0
        %1480 = vmatprep.subr.mxu0 0.0
        %1481 = vmatpush1.msra.mxu0 0.0
        %1482 = vmatprep.subr.mxu0 0.0
        %1483 = vmatpush1.msra.mxu0 %v1446
        %1484 = vmatprep.subr.mxu0 0.0
        %1485 = vmatpush2.msra.mxu0 0.0
        %1486 = vmatprep.subr.mxu0 0.0
        %1487 = vmatpush2.msra.mxu0 0.0
        %1488 = vmatprep.subr.mxu0 0.0
        %1489 = vmatpush2.msra.mxu0 0.0
        %1490 = vmatprep.subr.mxu0 0.0
        %1491 = vmatpush2.msra.mxu0 0.0
        %1492 = vmatprep.subr.mxu0 0.0
        %1493 = vmatpush2.msra.mxu0 0.0
        %1494 = vmatprep.subr.mxu0 0.0
        %1495 = vmatpush2.msra.mxu0 0.0
        %1496 = vmatprep.subr.mxu0 0.0
        %1497 = vmatpush2.msra.mxu0 0.0
        %1498 = vmatprep.subr.mxu0 0.0
        %1499 = vmatpush2.msra.mxu0 0.0
        %1500 = vmatprep.subr.mxu0 0.0
        %1501 = vmatpush2.msra.mxu0 0.0
        %1502 = vmatprep.subr.mxu0 0.0
        %1503 = vmatpush2.msra.mxu0 0.0
        %1504 = vmatprep.subr.mxu0 0.0
        %1505 = vmatpush2.msra.mxu0 0.0
        %1506 = vmatprep.subr.mxu0 0.0
        %1507 = vmatpush2.msra.mxu0 0.0
        %1508 = vmatprep.subr.mxu0 0.0
        %1509 = vmatpush2.msra.mxu0 0.0
        %1510 = vmatprep.subr.mxu0 0.0
        %1511 = vmatpush2.msra.mxu0 0.0
        %1512 = vmatprep.subr.mxu0 0.0
        %1513 = vmatpush2.msra.mxu0 0.0
        %1514 = vmatprep.subr.mxu0 0.0
        %1515 = vmatpush2.msra.mxu0 0.0
        %1516 = vmatprep.mubr.f32.mxu0 0.0
        %1517 = vmatmul.mubr.f32.gmra.mxu0 %v1450
        %v1518 = vpop.f32.mrf.mxu0
        %v1519 = vadd.f32 0.0, %v1518
        %v1520 = vpop.f32.mrf.mxu0
        %1521 = vdwg.mxu0
        %v1523 = vsel %vm812, %v1223, 0
        %1525 = vmatprep.subr.mxu0 0.0
        %1526 = vmatpush1.msra.mxu0 0.0
        %1527 = vmatprep.subr.mxu0 0.0
        %1528 = vmatpush1.msra.mxu0 0.0
        %1529 = vmatprep.subr.mxu0 0.0
        %1530 = vmatpush1.msra.mxu0 0.0
        %1531 = vmatprep.subr.mxu0 0.0
        %1532 = vmatpush1.msra.mxu0 0.0
        %1533 = vmatprep.subr.mxu0 0.0
        %1534 = vmatpush1.msra.mxu0 0.0
        %1535 = vmatprep.subr.mxu0 0.0
        %1536 = vmatpush1.msra.mxu0 0.0
        %1537 = vmatprep.subr.mxu0 0.0
        %1538 = vmatpush1.msra.mxu0 0.0
        %1539 = vmatprep.subr.mxu0 0.0
        %1540 = vmatpush1.msra.mxu0 0.0
        %1541 = vmatprep.subr.mxu0 0.0
        %1542 = vmatpush1.msra.mxu0 0.0
        %1543 = vmatprep.subr.mxu0 0.0
        %1544 = vmatpush1.msra.mxu0 0.0
        %1545 = vmatprep.subr.mxu0 0.0
        %1546 = vmatpush1.msra.mxu0 0.0
        %1547 = vmatprep.subr.mxu0 0.0
        %1548 = vmatpush1.msra.mxu0 0.0
        %1549 = vmatprep.subr.mxu0 0.0
        %1550 = vmatpush1.msra.mxu0 0.0
        %1551 = vmatprep.subr.mxu0 0.0
        %1552 = vmatpush1.msra.mxu0 0.0
        %1553 = vmatprep.subr.mxu0 0.0
        %1554 = vmatpush1.msra.mxu0 0.0
        %1555 = vmatprep.subr.mxu0 0.0
        %1556 = vmatpush1.msra.mxu0 %v1445
        %1557 = vmatprep.subr.mxu0 0.0
        %1558 = vmatpush2.msra.mxu0 0.0
        %1559 = vmatprep.subr.mxu0 0.0
        %1560 = vmatpush2.msra.mxu0 0.0
        %1561 = vmatprep.subr.mxu0 0.0
        %1562 = vmatpush2.msra.mxu0 0.0
        %1563 = vmatprep.subr.mxu0 0.0
        %1564 = vmatpush2.msra.mxu0 0.0
        %1565 = vmatprep.subr.mxu0 0.0
        %1566 = vmatpush2.msra.mxu0 0.0
        %1567 = vmatprep.subr.mxu0 0.0
        %1568 = vmatpush2.msra.mxu0 0.0
        %1569 = vmatprep.subr.mxu0 0.0
        %1570 = vmatpush2.msra.mxu0 0.0
        %1571 = vmatprep.subr.mxu0 0.0
        %1572 = vmatpush2.msra.mxu0 0.0
        %1573 = vmatprep.subr.mxu0 0.0
        %1574 = vmatpush2.msra.mxu0 0.0
        %1575 = vmatprep.subr.mxu0 0.0
        %1576 = vmatpush2.msra.mxu0 0.0
        %1577 = vmatprep.subr.mxu0 0.0
        %1578 = vmatpush2.msra.mxu0 0.0
        %1579 = vmatprep.subr.mxu0 0.0
        %1580 = vmatpush2.msra.mxu0 0.0
        %1581 = vmatprep.subr.mxu0 0.0
        %1582 = vmatpush2.msra.mxu0 0.0
        %1583 = vmatprep.subr.mxu0 0.0
        %1584 = vmatpush2.msra.mxu0 0.0
        %1585 = vmatprep.subr.mxu0 0.0
        %1586 = vmatpush2.msra.mxu0 0.0
        %1587 = vmatprep.subr.mxu0 0.0
        %1588 = vmatpush2.msra.mxu0 0.0
        %1589 = vmatprep.mubr.f32.mxu0 0.0
        %1590 = vmatmul.mubr.f32.gmra.mxu0 %v1523
        %v1591 = vpop.f32.mrf.mxu0
        %v1592 = vadd.f32 %v1519, %v1591
        %v1593 = vpop.f32.mrf.mxu0
        %1594 = vdwg.mxu0
        %v1596 = vsel %vm812, %v1369, 0
        %1598 = vmatprep.subr.mxu0 0.0
        %1599 = vmatpush1.msra.mxu0 0.0
        %1600 = vmatprep.subr.mxu0 0.0
        %1601 = vmatpush1.msra.mxu0 0.0
        %1602 = vmatprep.subr.mxu0 0.0
        %1603 = vmatpush1.msra.mxu0 0.0
        %1604 = vmatprep.subr.mxu0 0.0
        %1605 = vmatpush1.msra.mxu0 0.0
        %1606 = vmatprep.subr.mxu0 0.0
        %1607 = vmatpush1.msra.mxu0 0.0
        %1608 = vmatprep.subr.mxu0 0.0
        %1609 = vmatpush1.msra.mxu0 0.0
        %1610 = vmatprep.subr.mxu0 0.0
        %1611 = vmatpush1.msra.mxu0 0.0
        %1612 = vmatprep.subr.mxu0 0.0
        %1613 = vmatpush1.msra.mxu0 0.0
        %1614 = vmatprep.subr.mxu0 0.0
        %1615 = vmatpush1.msra.mxu0 0.0
        %1616 = vmatprep.subr.mxu0 0.0
        %1617 = vmatpush1.msra.mxu0 0.0
        %1618 = vmatprep.subr.mxu0 0.0
        %1619 = vmatpush1.msra.mxu0 0.0
        %1620 = vmatprep.subr.mxu0 0.0
        %1621 = vmatpush1.msra.mxu0 0.0
        %1622 = vmatprep.subr.mxu0 0.0
        %1623 = vmatpush1.msra.mxu0 0.0
        %1624 = vmatprep.subr.mxu0 0.0
        %1625 = vmatpush1.msra.mxu0 0.0
        %1626 = vmatprep.subr.mxu0 0.0
        %1627 = vmatpush1.msra.mxu0 0.0
        %1628 = vmatprep.subr.mxu0 0.0
        %1629 = vmatpush1.msra.mxu0 %v1447
        %1630 = vmatprep.subr.mxu0 0.0
        %1631 = vmatpush2.msra.mxu0 0.0
        %1632 = vmatprep.subr.mxu0 0.0
        %1633 = vmatpush2.msra.mxu0 0.0
        %1634 = vmatprep.subr.mxu0 0.0
        %1635 = vmatpush2.msra.mxu0 0.0
        %1636 = vmatprep.subr.mxu0 0.0
        %1637 = vmatpush2.msra.mxu0 0.0
        %1638 = vmatprep.subr.mxu0 0.0
        %1639 = vmatpush2.msra.mxu0 0.0
        %1640 = vmatprep.subr.mxu0 0.0
        %1641 = vmatpush2.msra.mxu0 0.0
        %1642 = vmatprep.subr.mxu0 0.0
        %1643 = vmatpush2.msra.mxu0 0.0
        %1644 = vmatprep.subr.mxu0 0.0
        %1645 = vmatpush2.msra.mxu0 0.0
        %1646 = vmatprep.subr.mxu0 0.0
        %1647 = vmatpush2.msra.mxu0 0.0
        %1648 = vmatprep.subr.mxu0 0.0
        %1649 = vmatpush2.msra.mxu0 0.0
        %1650 = vmatprep.subr.mxu0 0.0
        %1651 = vmatpush2.msra.mxu0 0.0
        %1652 = vmatprep.subr.mxu0 0.0
        %1653 = vmatpush2.msra.mxu0 0.0
        %1654 = vmatprep.subr.mxu0 0.0
        %1655 = vmatpush2.msra.mxu0 0.0
        %1656 = vmatprep.subr.mxu0 0.0
        %1657 = vmatpush2.msra.mxu0 0.0
        %1658 = vmatprep.subr.mxu0 0.0
        %1659 = vmatpush2.msra.mxu0 0.0
        %1660 = vmatprep.subr.mxu0 0.0
        %1661 = vmatpush2.msra.mxu0 0.0
        %1662 = vmatprep.mubr.f32.mxu0 0.0
        %1663 = vmatmul.mubr.f32.gmra.mxu0 %v1596
        %v1664 = vpop.f32.mrf.mxu0
        %v1665 = vadd.f32 0.0, %v1664
        %v1666 = vpop.f32.mrf.mxu0
        %1667 = vdwg.mxu0
        %v1668 = vadd.f32 %v1592, %v1665
        %v1670 = vsel %vm812, %v1442, 0
        %1672 = vmatprep.subr.mxu0 0.0
        %1673 = vmatpush1.msra.mxu0 0.0
        %1674 = vmatprep.subr.mxu0 0.0
        %1675 = vmatpush1.msra.mxu0 0.0
        %1676 = vmatprep.subr.mxu0 0.0
        %1677 = vmatpush1.msra.mxu0 0.0
        %1678 = vmatprep.subr.mxu0 0.0
        %1679 = vmatpush1.msra.mxu0 0.0
        %1680 = vmatprep.subr.mxu0 0.0
        %1681 = vmatpush1.msra.mxu0 0.0
        %1682 = vmatprep.subr.mxu0 0.0
        %1683 = vmatpush1.msra.mxu0 0.0
        %1684 = vmatprep.subr.mxu0 0.0
        %1685 = vmatpush1.msra.mxu0 0.0
        %1686 = vmatprep.subr.mxu0 0.0
        %1687 = vmatpush1.msra.mxu0 0.0
        %1688 = vmatprep.subr.mxu0 0.0
        %1689 = vmatpush1.msra.mxu0 0.0
        %1690 = vmatprep.subr.mxu0 0.0
        %1691 = vmatpush1.msra.mxu0 0.0
        %1692 = vmatprep.subr.mxu0 0.0
        %1693 = vmatpush1.msra.mxu0 0.0
        %1694 = vmatprep.subr.mxu0 0.0
        %1695 = vmatpush1.msra.mxu0 0.0
        %1696 = vmatprep.subr.mxu0 0.0
        %1697 = vmatpush1.msra.mxu0 0.0
        %1698 = vmatprep.subr.mxu0 0.0
        %1699 = vmatpush1.msra.mxu0 0.0
        %1700 = vmatprep.subr.mxu0 0.0
        %1701 = vmatpush1.msra.mxu0 0.0
        %1702 = vmatprep.subr.mxu0 0.0
        %1703 = vmatpush1.msra.mxu0 %v1448
        %1704 = vmatprep.subr.mxu0 0.0
        %1705 = vmatpush2.msra.mxu0 0.0
        %1706 = vmatprep.subr.mxu0 0.0
        %1707 = vmatpush2.msra.mxu0 0.0
        %1708 = vmatprep.subr.mxu0 0.0
        %1709 = vmatpush2.msra.mxu0 0.0
        %1710 = vmatprep.subr.mxu0 0.0
        %1711 = vmatpush2.msra.mxu0 0.0
        %1712 = vmatprep.subr.mxu0 0.0
        %1713 = vmatpush2.msra.mxu0 0.0
        %1714 = vmatprep.subr.mxu0 0.0
        %1715 = vmatpush2.msra.mxu0 0.0
        %1716 = vmatprep.subr.mxu0 0.0
        %1717 = vmatpush2.msra.mxu0 0.0
        %1718 = vmatprep.subr.mxu0 0.0
        %1719 = vmatpush2.msra.mxu0 0.0
        %1720 = vmatprep.subr.mxu0 0.0
        %1721 = vmatpush2.msra.mxu0 0.0
        %1722 = vmatprep.subr.mxu0 0.0
        %1723 = vmatpush2.msra.mxu0 0.0
        %1724 = vmatprep.subr.mxu0 0.0
        %1725 = vmatpush2.msra.mxu0 0.0
        %1726 = vmatprep.subr.mxu0 0.0
        %1727 = vmatpush2.msra.mxu0 0.0
        %1728 = vmatprep.subr.mxu0 0.0
        %1729 = vmatpush2.msra.mxu0 0.0
        %1730 = vmatprep.subr.mxu0 0.0
        %1731 = vmatpush2.msra.mxu0 0.0
        %1732 = vmatprep.subr.mxu0 0.0
        %1733 = vmatpush2.msra.mxu0 0.0
        %1734 = vmatprep.subr.mxu0 0.0
        %1735 = vmatpush2.msra.mxu0 0.0
        %1736 = vmatprep.mubr.f32.mxu0 0.0
        %1737 = vmatmul.mubr.f32.gmra.mxu0 %v1670
        %v1738 = vpop.f32.mrf.mxu0
        %v1739 = vadd.f32 0.0, %v1738
        %v1740 = vpop.f32.mrf.mxu0
        %1741 = vdwg.mxu0
        %v1742 = vadd.f32 %v1668, %v1739
        %v1743 = vld [vmem:[%s10] sm:$0x1]
        %v1745 = vlaneseq
        %v1746 = vshrl.u32 %v1745, 7
        %v1747 = vsub.s32 0, %v1746
        %v1748 = vrot.slane %v1743, %v1747
        %v1750 = vadd.f32 %v1742, %v1748
        %1751 = vst.msk [vmem:[%s530] sm:$0xff] %vm545, %v1750
        %s1752 = sand.u32 %s287, 1
        %s1753 = scalar_lea.sflag [#allocation4], %s1752
        %s1754 = sand.u32 %s287, 1
        %s1755 = smul.addr %s1754, 8
        %s1756 = scalar_lea.vmem [#allocation14], %s1755
        // Predicated region
        $region93: #{tpu_custom_call.1} parent=63 // pred_check
          %p1757 = pneg %p297
        $region94: #{tpu_custom_call.1} parent=63 // pred_check_branch
          %1759 = sbr.rel (%p1757) target = $region96
        $region95: #{tpu_custom_call.1} parent=63 // pred_region
          %s1761 = ssub.s32 128, 128
          %1762 = vsyncadd %s1753, %s1761
          %s1763 = smul.addr %s33, 128
          %s1764 = scalar_lea.hbm %s11, %s1763
          %s1766 = sshll.u32 %s1756, 4
          %s1767 = int_to_ptr.vmem [resolvable:$true] %s1766
          %1769 = dma.vmem_to_hbm [thread:$0]  %s1767, 128, %s1764, %s1753
        $region96: #{tpu_custom_call.1} parent=63 // pred_fallthru
          _
      $region64: #{tpu_custom_call.1} parent=5 // pred_fallthru
        _
      %p1770 = scmp.le.s32.totalorder 2, %s28
      // Predicated region
      $region97: #{tpu_custom_call.1} parent=5 // pred_check
        %p1771 = pneg %p1770
      $region98: #{tpu_custom_call.1} parent=5 // pred_check_branch
        %1773 = sbr.rel (%p1771) target = $region100
      $region99: #{tpu_custom_call.1} parent=5 // pred_region
        %s1774 = ssub.s32 %s28, 2
        // Predicated region
        $region101: #{tpu_custom_call.1} parent=99 // pred_check
          %p1775 = pneg %p303
        $region102: #{tpu_custom_call.1} parent=99 // pred_check_branch
          %1777 = sbr.rel (%p1775) target = $region104
        $region103: #{tpu_custom_call.1} parent=99 // pred_region
          %s1778 = sand.u32 %s288, 1
          %s1779 = scalar_lea.sflag [#allocation4], %s1778
          %s1780 = sand.u32 %s288, 1
          %s1781 = smul.addr %s1780, 8
          %s1782 = scalar_lea.vmem [#allocation14], %s1781
          %1783 = dma.done %s1779, 128
        $region104: #{tpu_custom_call.1} parent=99 // pred_fallthru
          _
      $region100: #{tpu_custom_call.1} parent=5 // pred_fallthru
        _
    $region6: #{tpu_custom_call.1} parent=1 // loop_footer
      %s32 = sadd.s32 1, %s28
    $region7: #{tpu_custom_call.1} parent=1 // loop_footer_branch
      %27 = sbr.rel target = $region3
    $region8: #{tpu_custom_call.1} parent=1 // loop_exit
      _
    %1784 = vsyncpa [#allocation3], 1
    %s1785 = scalar_lea.sflag [#allocation3], 1
    %1786 = vsyncpa %s1785, 1
    %1787 = vsyncpa [#allocation6], 1
    %s1788 = scalar_lea.sflag [#allocation6], 1
    %1789 = vsyncpa %s1788, 1
    %1790 = vsyncpa [#allocation9], 1
    %1791 = vsyncpa [#allocation12], 1
    %1792 = vsyncpa [#allocation4], 1
    %s1793 = scalar_lea.sflag [#allocation4], 1
    %1794 = vsyncpa %s1793, 1

// kernel: tpu_custom_call.1
$region0: #{tpu_custom_call.1}
  #allocation0 [shape = 'u32[]', space=smem, size = 0x4, offset = 0x4, fixed_abs, tag = 'smem constant byte address 0x4 - core index']
  #allocation1 [shape = 'u32[144,128]{1,0:T(1,128)}', space=vmem, size = 0x12000, scoped, tag = 'internal scratch']
  %s0 = inlined_call_operand.hbm [shape: f32[2,8,32], index: 0, kind: input, shape index: {}]
  %s1 = inlined_call_operand.hbm [shape: f32[2,8,32], index: 1, kind: input, shape index: {}]
  %s2 = inlined_call_operand.hbm [shape: f32[2,8,32], index: 2, kind: input, shape index: {}]
  %s3 = inlined_call_operand.hbm [shape: f32[32,32], index: 3, kind: input, shape index: {}]
  %s4 = inlined_call_operand.vmem [shape: f32[1,32], index: 4, kind: input, shape index: {}]
  %s5 = inlined_call_operand.hbm [shape: f32[32,32], index: 5, kind: input, shape index: {}]
  %s6 = inlined_call_operand.vmem [shape: f32[1,32], index: 6, kind: input, shape index: {}]
  %s7 = inlined_call_operand.hbm [shape: f32[32,32], index: 7, kind: input, shape index: {}]
  %s8 = inlined_call_operand.vmem [shape: f32[1,32], index: 8, kind: input, shape index: {}]
  %s9 = inlined_call_operand.hbm [shape: f32[32,32], index: 9, kind: input, shape index: {}]
  %s10 = inlined_call_operand.vmem [shape: f32[1,32], index: 10, kind: input, shape index: {}]
  %s11 = inlined_call_operand.hbm [shape: f32[2,8,32], index: 11, kind: output, shape index: {}]
  %s12 = sld [smem:[#allocation0]]
  $region105: #{tpu_custom_call.1} parent=0
    _
  %s14 = ssub.s32 1, %s12
  %s15 = scalar_select 0, %s14, %s12
  $region1: #{tpu_custom_call.1} parent=0
    #allocation2 [shape = 'u8[8192]{0}', space=vmem, size = 0x2000, scoped, tag = 'input window, operand 0']
    #allocation3 [shape = 's32[2]{0}', space=sflag, size = 0x8, scoped, tag = 'scoped memory for tpu_custom_call.1']
    #allocation4 [shape = 's32[2]{0}', space=sflag, size = 0x8, scoped, tag = 'scoped memory for tpu_custom_call.1']
    #allocation5 [shape = 'u8[8192]{0}', space=vmem, size = 0x2000, scoped, tag = 'input window, operand 1']
    #allocation6 [shape = 's32[2]{0}', space=sflag, size = 0x8, scoped, tag = 'scoped memory for tpu_custom_call.1']
    #allocation7 [shape = 'u8[8192]{0}', space=vmem, size = 0x2000, scoped, tag = 'input window, operand 2']
    #allocation8 [shape = 'u8[16384]{0}', space=vmem, size = 0x4000, scoped, tag = 'input window, operand 3, single buffered']
    #allocation9 [shape = 's32[1]{0}', space=sflag, size = 0x4, scoped, tag = 'scoped memory for tpu_custom_call.1']
    #allocation10 [shape = 'u8[16384]{0}', space=vmem, size = 0x4000, scoped, tag = 'input window, operand 5, single buffered']
    #allocation11 [shape = 'u8[16384]{0}', space=vmem, size = 0x4000, scoped, tag = 'input window, operand 7, single buffered']
    #allocation12 [shape = 's32[1]{0}', space=sflag, size = 0x4, scoped, tag = 'scoped memory for tpu_custom_call.1']
    #allocation13 [shape = 'u8[16384]{0}', space=vmem, size = 0x4000, scoped, tag = 'input window, operand 9, single buffered']
    #allocation14 [shape = 'u8[8192]{0}', space=vmem, size = 0x2000, scoped, tag = 'output window, operand 0']
    %16 = vsyncpa [#allocation3], 0
    %s17 = scalar_lea.sflag [#allocation3], 1
    %18 = vsyncpa %s17, 0
    %19 = vsyncpa [#allocation6], 0
    %s20 = scalar_lea.sflag [#allocation6], 1
    %21 = vsyncpa %s20, 0
    %22 = vsyncpa [#allocation9], 0
    %23 = vsyncpa [#allocation12], 0
    %24 = vsyncpa [#allocation4], 0
    %s25 = scalar_lea.sflag [#allocation4], 1
    %26 = vsyncpa %s25, 0
    loop: start=0, step=1, limit=4
    $region2: #{tpu_custom_call.1} parent=1 // loop_pre_header
      _
    $region3: #{tpu_custom_call.1} parent=1 // loop_header
      %s28 = sphi 0, %s32
      %p29 = scmp.ge.s32.totalorder %s28, 4
      %s38 = sphi 0, %s40
      %s41 = sphi 0, %s38
      %s42 = sphi 0, %s41
      %s58 = sphi 0, %s42
      %s64 = sphi 0, %s66
      %s67 = sphi 0, %s64
      %s68 = sphi 0, %s67
      %s84 = sphi 0, %s68
      %s90 = sphi 0, %s92
      %s93 = sphi 0, %s90
      %s94 = sphi 0, %s93
      %s110 = sphi 0, %s94
      %s114 = sphi 0, %s114
      %s116 = sphi 0, %s114
      %s117 = sphi 0, %s116
      %s131 = sphi 0, %s117
      %s135 = sphi 0, %s135
      %s137 = sphi 0, %s135
      %s138 = sphi 0, %s137
      %s152 = sphi 0, %s138
      %s156 = sphi 0, %s156
      %s158 = sphi 0, %s156
      %s159 = sphi 0, %s158
      %s173 = sphi 0, %s159
      %s177 = sphi 0, %s177
      %s179 = sphi 0, %s177
      %s180 = sphi 0, %s179
      %s194 = sphi 0, %s180
      %s198 = sphi 0, %s198
      %s200 = sphi 0, %s198
      %s201 = sphi 0, %s200
      %s215 = sphi 0, %s201
      %s219 = sphi 0, %s219
      %s221 = sphi 0, %s219
      %s222 = sphi 0, %s221
      %s236 = sphi 0, %s222
      %s240 = sphi 0, %s240
      %s242 = sphi 0, %s240
      %s243 = sphi 0, %s242
      %s257 = sphi 0, %s243
      %s261 = sphi 0, %s261
      %s263 = sphi 0, %s261
      %s264 = sphi 0, %s263
      %s278 = sphi 0, %s264
      %s284 = sphi 0, %s286
      %s287 = sphi 0, %s284
      %s288 = sphi 0, %s287
      %s304 = sphi 0, %s288
    $region4: #{tpu_custom_call.1} parent=1 // loop_header_branch
      %31 = sbr.rel (%p29) target = $region8
    $region5: #{tpu_custom_call.1} parent=1 // loop_body
      %s33 = ssub.s32 %s28, 1
      %s34 = ssub.s32 %s28, 2
      %s35 = sadd.s32 %s28, 1
      %s36 = ssub.s32 %s28, %s35
      %p37 = scmp.eq.s32.totalorder %s36, 0
      %s39 = sadd.s32 %s38, 1
      %s40 = scalar_select %p37, %s38, %s39
      %p43 = pneg %p37
      %p44 = scmp.eq.s32.totalorder %s28, 1
      %p45 = por %p43, %p44
      %p46 = scmp.ne.s32.totalorder %s38, %s41
      %p47 = scmp.eq.s32.totalorder %s28, 0
      %p48 = por %p46, %p47
      %p49 = scmp.ne.s32.totalorder %s38, %s41
      %p50 = scmp.eq.s32.totalorder %s33, 1
      %p51 = por %p49, %p50
      %p52 = scmp.ne.s32.totalorder %s41, %s42
      %p53 = scmp.eq.s32.totalorder %s33, 0
      %p54 = por %p52, %p53
      %p55 = scmp.ne.s32.totalorder %s41, %s42
      %p56 = scmp.eq.s32.totalorder %s34, 1
      %p57 = por %p55, %p56
      %p59 = scmp.ne.s32.totalorder %s42, %s58
      %p60 = scmp.eq.s32.totalorder %s34, 0
      %p61 = por %p59, %p60
      %s62 = ssub.s32 %s28, %s35
      %p63 = scmp.eq.s32.totalorder %s62, 0
      %s65 = sadd.s32 %s64, 1
      %s66 = scalar_select %p63, %s64, %s65
      %p69 = pneg %p63
      %p70 = scmp.eq.s32.totalorder %s28, 1
      %p71 = por %p69, %p70
      %p72 = scmp.ne.s32.totalorder %s64, %s67
      %p73 = scmp.eq.s32.totalorder %s28, 0
      %p74 = por %p72, %p73
      %p75 = scmp.ne.s32.totalorder %s64, %s67
      %p76 = scmp.eq.s32.totalorder %s33, 1
      %p77 = por %p75, %p76
      %p78 = scmp.ne.s32.totalorder %s67, %s68
      %p79 = scmp.eq.s32.totalorder %s33, 0
      %p80 = por %p78, %p79
      %p81 = scmp.ne.s32.totalorder %s67, %s68
      %p82 = scmp.eq.s32.totalorder %s34, 1
      %p83 = por %p81, %p82
      %p85 = scmp.ne.s32.totalorder %s68, %s84
      %p86 = scmp.eq.s32.totalorder %s34, 0
      %p87 = por %p85, %p86
      %s88 = ssub.s32 %s28, %s35
      %p89 = scmp.eq.s32.totalorder %s88, 0
      %s91 = sadd.s32 %s90, 1
      %s92 = scalar_select %p89, %s90, %s91
      %p95 = pneg %p89
      %p96 = scmp.eq.s32.totalorder %s28, 1
      %p97 = por %p95, %p96
      %p98 = scmp.ne.s32.totalorder %s90, %s93
      %p99 = scmp.eq.s32.totalorder %s28, 0
      %p100 = por %p98, %p99
      %p101 = scmp.ne.s32.totalorder %s90, %s93
      %p102 = scmp.eq.s32.totalorder %s33, 1
      %p103 = por %p101, %p102
      %p104 = scmp.ne.s32.totalorder %s93, %s94
      %p105 = scmp.eq.s32.totalorder %s33, 0
      %p106 = por %p104, %p105
      %p107 = scmp.ne.s32.totalorder %s93, %s94
      %p108 = scmp.eq.s32.totalorder %s34, 1
      %p109 = por %p107, %p108
      %p111 = scmp.ne.s32.totalorder %s94, %s110
      %p112 = scmp.eq.s32.totalorder %s34, 0
      %p113 = por %p111, %p112
      %s115 = sadd.s32 %s114, 1
      %p118 = scmp.eq.s32.totalorder %s28, 1
      %p119 = scmp.ne.s32.totalorder %s114, %s116
      %p120 = scmp.eq.s32.totalorder %s28, 0
      %p121 = por %p119, %p120
      %p122 = scmp.ne.s32.totalorder %s114, %s116
      %p123 = scmp.eq.s32.totalorder %s33, 1
      %p124 = por %p122, %p123
      %p125 = scmp.ne.s32.totalorder %s116, %s117
      %p126 = scmp.eq.s32.totalorder %s33, 0
      %p127 = por %p125, %p126
      %p128 = scmp.ne.s32.totalorder %s116, %s117
      %p129 = scmp.eq.s32.totalorder %s34, 1
      %p130 = por %p128, %p129
      %p132 = scmp.ne.s32.totalorder %s117, %s131
      %p133 = scmp.eq.s32.totalorder %s34, 0
      %p134 = por %p132, %p133
      %s136 = sadd.s32 %s135, 1
      %p139 = scmp.eq.s32.totalorder %s28, 1
      %p140 = scmp.ne.s32.totalorder %s135, %s137
      %p141 = scmp.eq.s32.totalorder %s28, 0
      %p142 = por %p140, %p141
      %p143 = scmp.ne.s32.totalorder %s135, %s137
      %p144 = scmp.eq.s32.totalorder %s33, 1
      %p145 = por %p143, %p144
      %p146 = scmp.ne.s32.totalorder %s137, %s138
      %p147 = scmp.eq.s32.totalorder %s33, 0
      %p148 = por %p146, %p147
      %p149 = scmp.ne.s32.totalorder %s137, %s138
      %p150 = scmp.eq.s32.totalorder %s34, 1
      %p151 = por %p149, %p150
      %p153 = scmp.ne.s32.totalorder %s138, %s152
      %p154 = scmp.eq.s32.totalorder %s34, 0
      %p155 = por %p153, %p154
      %s157 = sadd.s32 %s156, 1
      %p160 = scmp.eq.s32.totalorder %s28, 1
      %p161 = scmp.ne.s32.totalorder %s156, %s158
      %p162 = scmp.eq.s32.totalorder %s28, 0
      %p163 = por %p161, %p162
      %p164 = scmp.ne.s32.totalorder %s156, %s158
      %p165 = scmp.eq.s32.totalorder %s33, 1
      %p166 = por %p164, %p165
      %p167 = scmp.ne.s32.totalorder %s158, %s159
      %p168 = scmp.eq.s32.totalorder %s33, 0
      %p169 = por %p167, %p168
      %p170 = scmp.ne.s32.totalorder %s158, %s159
      %p171 = scmp.eq.s32.totalorder %s34, 1
      %p172 = por %p170, %p171
      %p174 = scmp.ne.s32.totalorder %s159, %s173
      %p175 = scmp.eq.s32.totalorder %s34, 0
      %p176 = por %p174, %p175
      %s178 = sadd.s32 %s177, 1
      %p181 = scmp.eq.s32.totalorder %s28, 1
      %p182 = scmp.ne.s32.totalorder %s177, %s179
      %p183 = scmp.eq.s32.totalorder %s28, 0
      %p184 = por %p182, %p183
      %p185 = scmp.ne.s32.totalorder %s177, %s179
      %p186 = scmp.eq.s32.totalorder %s33, 1
      %p187 = por %p185, %p186
      %p188 = scmp.ne.s32.totalorder %s179, %s180
      %p189 = scmp.eq.s32.totalorder %s33, 0
      %p190 = por %p188, %p189
      %p191 = scmp.ne.s32.totalorder %s179, %s180
      %p192 = scmp.eq.s32.totalorder %s34, 1
      %p193 = por %p191, %p192
      %p195 = scmp.ne.s32.totalorder %s180, %s194
      %p196 = scmp.eq.s32.totalorder %s34, 0
      %p197 = por %p195, %p196
      %s199 = sadd.s32 %s198, 1
      %p202 = scmp.eq.s32.totalorder %s28, 1
      %p203 = scmp.ne.s32.totalorder %s198, %s200
      %p204 = scmp.eq.s32.totalorder %s28, 0
      %p205 = por %p203, %p204
      %p206 = scmp.ne.s32.totalorder %s198, %s200
      %p207 = scmp.eq.s32.totalorder %s33, 1
      %p208 = por %p206, %p207
      %p209 = scmp.ne.s32.totalorder %s200, %s201
      %p210 = scmp.eq.s32.totalorder %s33, 0
      %p211 = por %p209, %p210
      %p212 = scmp.ne.s32.totalorder %s200, %s201
      %p213 = scmp.eq.s32.totalorder %s34, 1
      %p214 = por %p212, %p213
      %p216 = scmp.ne.s32.totalorder %s201, %s215
      %p217 = scmp.eq.s32.totalorder %s34, 0
      %p218 = por %p216, %p217
      %s220 = sadd.s32 %s219, 1
      %p223 = scmp.eq.s32.totalorder %s28, 1
      %p224 = scmp.ne.s32.totalorder %s219, %s221
      %p225 = scmp.eq.s32.totalorder %s28, 0
      %p226 = por %p224, %p225
      %p227 = scmp.ne.s32.totalorder %s219, %s221
      %p228 = scmp.eq.s32.totalorder %s33, 1
      %p229 = por %p227, %p228
      %p230 = scmp.ne.s32.totalorder %s221, %s222
      %p231 = scmp.eq.s32.totalorder %s33, 0
      %p232 = por %p230, %p231
      %p233 = scmp.ne.s32.totalorder %s221, %s222
      %p234 = scmp.eq.s32.totalorder %s34, 1
      %p235 = por %p233, %p234
      %p237 = scmp.ne.s32.totalorder %s222, %s236
      %p238 = scmp.eq.s32.totalorder %s34, 0
      %p239 = por %p237, %p238
      %s241 = sadd.s32 %s240, 1
      %p244 = scmp.eq.s32.totalorder %s28, 1
      %p245 = scmp.ne.s32.totalorder %s240, %s242
      %p246 = scmp.eq.s32.totalorder %s28, 0
      %p247 = por %p245, %p246
      %p248 = scmp.ne.s32.totalorder %s240, %s242
      %p249 = scmp.eq.s32.totalorder %s33, 1
      %p250 = por %p248, %p249
      %p251 = scmp.ne.s32.totalorder %s242, %s243
      %p252 = scmp.eq.s32.totalorder %s33, 0
      %p253 = por %p251, %p252
      %p254 = scmp.ne.s32.totalorder %s242, %s243
      %p255 = scmp.eq.s32.totalorder %s34, 1
      %p256 = por %p254, %p255
      %p258 = scmp.ne.s32.totalorder %s243, %s257
      %p259 = scmp.eq.s32.totalorder %s34, 0
      %p260 = por %p258, %p259
      %s262 = sadd.s32 %s261, 1
      %p265 = scmp.eq.s32.totalorder %s28, 1
      %p266 = scmp.ne.s32.totalorder %s261, %s263
      %p267 = scmp.eq.s32.totalorder %s28, 0
      %p268 = por %p266, %p267
      %p269 = scmp.ne.s32.totalorder %s261, %s263
      %p270 = scmp.eq.s32.totalorder %s33, 1
      %p271 = por %p269, %p270
      %p272 = scmp.ne.s32.totalorder %s263, %s264
      %p273 = scmp.eq.s32.totalorder %s33, 0
      %p274 = por %p272, %p273
      %p275 = scmp.ne.s32.totalorder %s263, %s264
      %p276 = scmp.eq.s32.totalorder %s34, 1
      %p277 = por %p275, %p276
      %p279 = scmp.ne.s32.totalorder %s264, %s278
      %p280 = scmp.eq.s32.totalorder %s34, 0
      %p281 = por %p279, %p280
      %s282 = ssub.s32 %s28, %s35
      %p283 = scmp.eq.s32.totalorder %s282, 0
      %s285 = sadd.s32 %s284, 1
      %s286 = scalar_select %p283, %s284, %s285
      %p289 = pneg %p283
      %p290 = scmp.eq.s32.totalorder %s28, 1
      %p291 = por %p289, %p290
      %p292 = scmp.ne.s32.totalorder %s284, %s287
      %p293 = scmp.eq.s32.totalorder %s28, 0
      %p294 = por %p292, %p293
      %p295 = scmp.ne.s32.totalorder %s284, %s287
      %p296 = scmp.eq.s32.totalorder %s33, 1
      %p297 = por %p295, %p296
      %p298 = scmp.ne.s32.totalorder %s287, %s288
      %p299 = scmp.eq.s32.totalorder %s33, 0
      %p300 = por %p298, %p299
      %p301 = scmp.ne.s32.totalorder %s287, %s288
      %p302 = scmp.eq.s32.totalorder %s34, 1
      %p303 = por %p301, %p302
      %p305 = scmp.ne.s32.totalorder %s288, %s304
      %p306 = scmp.eq.s32.totalorder %s34, 0
      %p307 = por %p305, %p306
      %p308 = scmp.le.s32.totalorder 1, %s28
      %p309 = scmp.lt.s32.totalorder %s28, 3
      %p310 = pnand %p308, %p309
      %p311 = pneg %p310
      // Predicated region
      $region9: #{tpu_custom_call.1} parent=5 // pred_check
        _
      $region10: #{tpu_custom_call.1} parent=5 // pred_check_branch
        %313 = sbr.rel (%p310) target = $region12
      $region11: #{tpu_custom_call.1} parent=5 // pred_region
        %s314 = ssub.s32 %s28, 1
        // Predicated region
        $region13: #{tpu_custom_call.1} parent=11 // pred_check
          %p315 = pneg %p127
        $region14: #{tpu_custom_call.1} parent=11 // pred_check_branch
          %317 = sbr.rel (%p315) target = $region16
        $region15: #{tpu_custom_call.1} parent=11 // pred_region
          %s319 = ssub.s32 512, 512
          %320 = vsyncadd [#allocation9], %s319
          %s321 = sshll.u32 [#allocation8], 4
          %s322 = int_to_ptr.vmem [resolvable:$true] %s321
          %327 = dma.hbm_to_vmem [thread:$0]  %s3, 512, %s322, [#allocation9], 128, 128, 8
        $region16: #{tpu_custom_call.1} parent=11 // pred_fallthru
          _
        // Predicated region
        $region17: #{tpu_custom_call.1} parent=11 // pred_check
          %p328 = pneg %p148
        $region18: #{tpu_custom_call.1} parent=11 // pred_check_branch
          %330 = sbr.rel (%p328) target = $region20
        $region19: #{tpu_custom_call.1} parent=11 // pred_region
          _
        $region20: #{tpu_custom_call.1} parent=11 // pred_fallthru
          _
        // Predicated region
        $region21: #{tpu_custom_call.1} parent=11 // pred_check
          %p331 = pneg %p169
        $region22: #{tpu_custom_call.1} parent=11 // pred_check_branch
          %333 = sbr.rel (%p331) target = $region24
        $region23: #{tpu_custom_call.1} parent=11 // pred_region
          %s335 = ssub.s32 512, 512
          %336 = vsyncadd [#allocation9], %s335
          %s337 = sshll.u32 [#allocation10], 4
          %s338 = int_to_ptr.vmem [resolvable:$true] %s337
          %343 = dma.hbm_to_vmem [thread:$0]  %s5, 512, %s338, [#allocation9], 128, 128, 8
        $region24: #{tpu_custom_call.1} parent=11 // pred_fallthru
          _
        // Predicated region
        $region25: #{tpu_custom_call.1} parent=11 // pred_check
          %p344 = pneg %p190
        $region26: #{tpu_custom_call.1} parent=11 // pred_check_branch
          %346 = sbr.rel (%p344) target = $region28
        $region27: #{tpu_custom_call.1} parent=11 // pred_region
          _
        $region28: #{tpu_custom_call.1} parent=11 // pred_fallthru
          _
        // Predicated region
        $region29: #{tpu_custom_call.1} parent=11 // pred_check
          %p347 = pneg %p211
        $region30: #{tpu_custom_call.1} parent=11 // pred_check_branch
          %349 = sbr.rel (%p347) target = $region32
        $region31: #{tpu_custom_call.1} parent=11 // pred_region
          %s351 = ssub.s32 512, 512
          %352 = vsyncadd [#allocation12], %s351
          %s353 = sshll.u32 [#allocation11], 4
          %s354 = int_to_ptr.vmem [resolvable:$true] %s353
          %359 = dma.hbm_to_vmem [thread:$0]  %s7, 512, %s354, [#allocation12], 128, 128, 8
        $region32: #{tpu_custom_call.1} parent=11 // pred_fallthru
          _
        // Predicated region
        $region33: #{tpu_custom_call.1} parent=11 // pred_check
          %p360 = pneg %p232
        $region34: #{tpu_custom_call.1} parent=11 // pred_check_branch
          %362 = sbr.rel (%p360) target = $region36
        $region35: #{tpu_custom_call.1} parent=11 // pred_region
          _
        $region36: #{tpu_custom_call.1} parent=11 // pred_fallthru
          _
        // Predicated region
        $region37: #{tpu_custom_call.1} parent=11 // pred_check
          %p363 = pneg %p253
        $region38: #{tpu_custom_call.1} parent=11 // pred_check_branch
          %365 = sbr.rel (%p363) target = $region40
        $region39: #{tpu_custom_call.1} parent=11 // pred_region
          %s367 = ssub.s32 512, 512
          %368 = vsyncadd [#allocation12], %s367
          %s369 = sshll.u32 [#allocation13], 4
          %s370 = int_to_ptr.vmem [resolvable:$true] %s369
          %375 = dma.hbm_to_vmem [thread:$0]  %s9, 512, %s370, [#allocation12], 128, 128, 8
        $region40: #{tpu_custom_call.1} parent=11 // pred_fallthru
          _
        // Predicated region
        $region41: #{tpu_custom_call.1} parent=11 // pred_check
          %p376 = pneg %p274
        $region42: #{tpu_custom_call.1} parent=11 // pred_check_branch
          %378 = sbr.rel (%p376) target = $region44
        $region43: #{tpu_custom_call.1} parent=11 // pred_region
          _
        $region44: #{tpu_custom_call.1} parent=11 // pred_fallthru
          _
      $region12: #{tpu_custom_call.1} parent=5 // pred_fallthru
        _
      %p379 = scmp.lt.s32.totalorder %s28, 2
      // Predicated region
      $region45: #{tpu_custom_call.1} parent=5 // pred_check
        %p380 = pneg %p379
      $region46: #{tpu_custom_call.1} parent=5 // pred_check_branch
        %382 = sbr.rel (%p380) target = $region48
      $region47: #{tpu_custom_call.1} parent=5 // pred_region
        // Predicated region
        $region49: #{tpu_custom_call.1} parent=47 // pred_check
          %p383 = pneg %p48
        $region50: #{tpu_custom_call.1} parent=47 // pred_check_branch
          %385 = sbr.rel (%p383) target = $region52
        $region51: #{tpu_custom_call.1} parent=47 // pred_region
          %s386 = sand.u32 %s38, 1
          %s387 = scalar_lea.sflag [#allocation3], %s386
          %s388 = sand.u32 %s38, 1
          %s389 = smul.addr %s388, 8
          %s390 = scalar_lea.vmem [#allocation2], %s389
          %s392 = ssub.s32 128, 128
          %393 = vsyncadd %s387, %s392
          %s394 = smul.addr %s28, 128
          %s395 = scalar_lea.hbm %s0, %s394
          %s397 = sshll.u32 %s390, 4
          %s398 = int_to_ptr.vmem [resolvable:$true] %s397
          %400 = dma.hbm_to_vmem [thread:$0]  %s395, 128, %s398, %s387
        $region52: #{tpu_custom_call.1} parent=47 // pred_fallthru
          _
        // Predicated region
        $region53: #{tpu_custom_call.1} parent=47 // pred_check
          %p401 = pneg %p74
        $region54: #{tpu_custom_call.1} parent=47 // pred_check_branch
          %403 = sbr.rel (%p401) target = $region56
        $region55: #{tpu_custom_call.1} parent=47 // pred_region
          %s404 = sand.u32 %s28, 1
          %s405 = scalar_lea.sflag [#allocation6], %s404
          %s406 = sand.u32 %s64, 1
          %s407 = smul.addr %s406, 8
          %s408 = scalar_lea.vmem [#allocation5], %s407
          %s410 = ssub.s32 128, 128
          %411 = vsyncadd %s405, %s410
          %s412 = smul.addr %s28, 128
          %s413 = scalar_lea.hbm %s1, %s412
          %s415 = sshll.u32 %s408, 4
          %s416 = int_to_ptr.vmem [resolvable:$true] %s415
          %418 = dma.hbm_to_vmem [thread:$0]  %s413, 128, %s416, %s405
        $region56: #{tpu_custom_call.1} parent=47 // pred_fallthru
          _
        // Predicated region
        $region57: #{tpu_custom_call.1} parent=47 // pred_check
          %p419 = pneg %p100
        $region58: #{tpu_custom_call.1} parent=47 // pred_check_branch
          %421 = sbr.rel (%p419) target = $region60
        $region59: #{tpu_custom_call.1} parent=47 // pred_region
          %s422 = sand.u32 %s28, 1
          %s423 = scalar_lea.sflag [#allocation6], %s422
          %s424 = sand.u32 %s90, 1
          %s425 = smul.addr %s424, 8
          %s426 = scalar_lea.vmem [#allocation7], %s425
          %s428 = ssub.s32 128, 128
          %429 = vsyncadd %s423, %s428
          %s430 = smul.addr %s28, 128
          %s431 = scalar_lea.hbm %s2, %s430
          %s433 = sshll.u32 %s426, 4
          %s434 = int_to_ptr.vmem [resolvable:$true] %s433
          %436 = dma.hbm_to_vmem [thread:$0]  %s431, 128, %s434, %s423
        $region60: #{tpu_custom_call.1} parent=47 // pred_fallthru
          _
      $region48: #{tpu_custom_call.1} parent=5 // pred_fallthru
        _
      %p437 = scmp.le.s32.totalorder 1, %s28
      %p438 = scmp.lt.s32.totalorder %s28, 3
      %p439 = pnand %p437, %p438
      %p440 = pneg %p439
      // Predicated region
      $region61: #{tpu_custom_call.1} parent=5 // pred_check
        _
      $region62: #{tpu_custom_call.1} parent=5 // pred_check_branch
        %442 = sbr.rel (%p439) target = $region64
      $region63: #{tpu_custom_call.1} parent=5 // pred_region
        %s443 = ssub.s32 %s28, 1
        %s444 = sand.u32 %s41, 1
        %s445 = scalar_lea.sflag [#allocation3], %s444
        %s446 = sand.u32 %s41, 1
        %s447 = smul.addr %s446, 8
        %s448 = scalar_lea.vmem [#allocation2], %s447
        // Predicated region
        $region65: #{tpu_custom_call.1} parent=63 // pred_check
          %p449 = pneg %p54
        $region66: #{tpu_custom_call.1} parent=63 // pred_check_branch
          %451 = sbr.rel (%p449) target = $region68
        $region67: #{tpu_custom_call.1} parent=63 // pred_region
          %452 = dma.done %s445, 128
        $region68: #{tpu_custom_call.1} parent=63 // pred_fallthru
          _
        %s453 = sand.u32 %s33, 1
        %s454 = scalar_lea.sflag [#allocation6], %s453
        %s455 = sand.u32 %s67, 1
        %s456 = smul.addr %s455, 8
        %s457 = scalar_lea.vmem [#allocation5], %s456
        // Predicated region
        $region69: #{tpu_custom_call.1} parent=63 // pred_check
          %p458 = pneg %p80
        $region70: #{tpu_custom_call.1} parent=63 // pred_check_branch
          %460 = sbr.rel (%p458) target = $region72
        $region71: #{tpu_custom_call.1} parent=63 // pred_region
          %461 = dma.done %s454, 128
        $region72: #{tpu_custom_call.1} parent=63 // pred_fallthru
          _
        %s462 = sand.u32 %s33, 1
        %s463 = scalar_lea.sflag [#allocation6], %s462
        %s464 = sand.u32 %s93, 1
        %s465 = smul.addr %s464, 8
        %s466 = scalar_lea.vmem [#allocation7], %s465
        // Predicated region
        $region73: #{tpu_custom_call.1} parent=63 // pred_check
          %p467 = pneg %p106
        $region74: #{tpu_custom_call.1} parent=63 // pred_check_branch
          %469 = sbr.rel (%p467) target = $region76
        $region75: #{tpu_custom_call.1} parent=63 // pred_region
          %470 = dma.done %s463, 128
        $region76: #{tpu_custom_call.1} parent=63 // pred_fallthru
          _
        // Predicated region
        $region77: #{tpu_custom_call.1} parent=63 // pred_check
          %p471 = pneg %p127
        $region78: #{tpu_custom_call.1} parent=63 // pred_check_branch
          %473 = sbr.rel (%p471) target = $region80
        $region79: #{tpu_custom_call.1} parent=63 // pred_region
          %474 = dma.done [#allocation9], 512
        $region80: #{tpu_custom_call.1} parent=63 // pred_fallthru
          _
        // Predicated region
        $region81: #{tpu_custom_call.1} parent=63 // pred_check
          %p475 = pneg %p169
        $region82: #{tpu_custom_call.1} parent=63 // pred_check_branch
          %477 = sbr.rel (%p475) target = $region84
        $region83: #{tpu_custom_call.1} parent=63 // pred_region
          %478 = dma.done [#allocation9], 512
        $region84: #{tpu_custom_call.1} parent=63 // pred_fallthru
          _
        // Predicated region
        $region85: #{tpu_custom_call.1} parent=63 // pred_check
          %p479 = pneg %p211
        $region86: #{tpu_custom_call.1} parent=63 // pred_check_branch
          %481 = sbr.rel (%p479) target = $region88
        $region87: #{tpu_custom_call.1} parent=63 // pred_region
          %482 = dma.done [#allocation12], 512
        $region88: #{tpu_custom_call.1} parent=63 // pred_fallthru
          _
        // Predicated region
        $region89: #{tpu_custom_call.1} parent=63 // pred_check
          %p483 = pneg %p253
        $region90: #{tpu_custom_call.1} parent=63 // pred_check_branch
          %485 = sbr.rel (%p483) target = $region92
        $region91: #{tpu_custom_call.1} parent=63 // pred_region
          %486 = dma.done [#allocation12], 512
        $region92: #{tpu_custom_call.1} parent=63 // pred_fallthru
          _
        %s487 = sand.u32 %s41, 1
        %s488 = scalar_lea.sflag [#allocation3], %s487
        %s489 = sand.u32 %s41, 1
        %s490 = smul.addr %s489, 8
        %s491 = scalar_lea.vmem [#allocation2], %s490
        %p492 = pneg %p54
        %p493 = pneg %p51
        %s494 = sand.u32 %s33, 1
        %s495 = scalar_lea.sflag [#allocation6], %s494
        %s496 = sand.u32 %s67, 1
        %s497 = smul.addr %s496, 8
        %s498 = scalar_lea.vmem [#allocation5], %s497
        %p499 = pneg %p80
        %p500 = pneg %p77
        %s501 = sand.u32 %s33, 1
        %s502 = scalar_lea.sflag [#allocation6], %s501
        %s503 = sand.u32 %s93, 1
        %s504 = smul.addr %s503, 8
        %s505 = scalar_lea.vmem [#allocation7], %s504
        %p506 = pneg %p106
        %p507 = pneg %p103
        %p508 = pneg %p127
        %p509 = pneg %p124
        %p510 = pneg %p148
        %p511 = pneg %p145
        %p512 = pneg %p169
        %p513 = pneg %p166
        %p514 = pneg %p190
        %p515 = pneg %p187
        %p516 = pneg %p211
        %p517 = pneg %p208
        %p518 = pneg %p232
        %p519 = pneg %p229
        %p520 = pneg %p253
        %p521 = pneg %p250
        %p522 = pneg %p274
        %p523 = pneg %p271
        %p524 = pneg %p300
        %p525 = pneg %p297
        %s526 = sand.u32 %s287, 1
        %s527 = scalar_lea.sflag [#allocation4], %s526
        %s528 = sand.u32 %s287, 1
        %s529 = smul.addr %s528, 8
        %s530 = scalar_lea.vmem [#allocation14], %s529
        %v531 = vld [vmem:[%s448] sm:$0xff]
        %v532 = vld [vmem:[%s457] sm:$0xff]
        %v533 = vld [vmem:[%s466] sm:$0xff]
        %v534 = vld [vmem:[#allocation8] sm:$0xff]
        %v535 = vld [vmem:[#allocation8 + $0x8] sm:$0xff]
        %v536 = vld [vmem:[#allocation8 + $0x10] sm:$0xff]
        %v537 = vld [vmem:[#allocation8 + $0x18] sm:$0xff]
        %v538 = vld [vmem:[%s4] sm:$0x1]
        %v540 = vlaneseq
        %v541 = vshrl.u32 %v540, 7
        %v542 = vsub.s32 0, %v541
        %v543 = vrot.slane %v538, %v542
        %vm545 = vcmask 261120
        %v547 = vsel %vm545, %v531, 0
        %549 = vmatprep.subr.mxu0 0.0
        %550 = vmatpush1.msra.mxu0 0.0
        %551 = vmatprep.subr.mxu0 0.0
        %552 = vmatpush1.msra.mxu0 0.0
        %553 = vmatprep.subr.mxu0 0.0
        %554 = vmatpush1.msra.mxu0 0.0
        %555 = vmatprep.subr.mxu0 0.0
        %556 = vmatpush1.msra.mxu0 0.0
        %557 = vmatprep.subr.mxu0 0.0
        %558 = vmatpush1.msra.mxu0 0.0
        %559 = vmatprep.subr.mxu0 0.0
        %560 = vmatpush1.msra.mxu0 0.0
        %561 = vmatprep.subr.mxu0 0.0
        %562 = vmatpush1.msra.mxu0 0.0
        %563 = vmatprep.subr.mxu0 0.0
        %564 = vmatpush1.msra.mxu0 0.0
        %565 = vmatprep.subr.mxu0 0.0
        %566 = vmatpush1.msra.mxu0 0.0
        %567 = vmatprep.subr.mxu0 0.0
        %568 = vmatpush1.msra.mxu0 0.0
        %569 = vmatprep.subr.mxu0 0.0
        %570 = vmatpush1.msra.mxu0 0.0
        %571 = vmatprep.subr.mxu0 0.0
        %572 = vmatpush1.msra.mxu0 0.0
        %573 = vmatprep.subr.mxu0 0.0
        %574 = vmatpush1.msra.mxu0 %v537
        %575 = vmatprep.subr.mxu0 0.0
        %576 = vmatpush1.msra.mxu0 %v536
        %577 = vmatprep.subr.mxu0 0.0
        %578 = vmatpush1.msra.mxu0 %v535
        %579 = vmatprep.subr.mxu0 0.0
        %580 = vmatpush1.msra.mxu0 %v534
        %581 = vmatprep.subr.mxu0 0.0
        %582 = vmatpush2.msra.mxu0 0.0
        %583 = vmatprep.subr.mxu0 0.0
        %584 = vmatpush2.msra.mxu0 0.0
        %585 = vmatprep.subr.mxu0 0.0
        %586 = vmatpush2.msra.mxu0 0.0
        %587 = vmatprep.subr.mxu0 0.0
        %588 = vmatpush2.msra.mxu0 0.0
        %589 = vmatprep.subr.mxu0 0.0
        %590 = vmatpush2.msra.mxu0 0.0
        %591 = vmatprep.subr.mxu0 0.0
        %592 = vmatpush2.msra.mxu0 0.0
        %593 = vmatprep.subr.mxu0 0.0
        %594 = vmatpush2.msra.mxu0 0.0
        %595 = vmatprep.subr.mxu0 0.0
        %596 = vmatpush2.msra.mxu0 0.0
        %597 = vmatprep.subr.mxu0 0.0
        %598 = vmatpush2.msra.mxu0 0.0
        %599 = vmatprep.subr.mxu0 0.0
        %600 = vmatpush2.msra.mxu0 0.0
        %601 = vmatprep.subr.mxu0 0.0
        %602 = vmatpush2.msra.mxu0 0.0
        %603 = vmatprep.subr.mxu0 0.0
        %604 = vmatpush2.msra.mxu0 0.0
        %605 = vmatprep.subr.mxu0 0.0
        %606 = vmatpush2.msra.mxu0 0.0
        %607 = vmatprep.subr.mxu0 0.0
        %608 = vmatpush2.msra.mxu0 0.0
        %609 = vmatprep.subr.mxu0 0.0
        %610 = vmatpush2.msra.mxu0 0.0
        %611 = vmatprep.subr.mxu0 0.0
        %612 = vmatpush2.msra.mxu0 0.0
        %613 = vmatprep.mubr.f32.mxu0 0.0
        %614 = vmatmul.mubr.f32.gmra.mxu0 %v547
        %v615 = vpop.f32.mrf.mxu0
        %v616 = vadd.f32 %v543, %v615
        %v617 = vpop.f32.mrf.mxu0
        %618 = vdwg.mxu0
        %v619 = vmul.f32 %v616, 0.35355338
        %v620 = vld [vmem:[#allocation10] sm:$0xff]
        %v621 = vld [vmem:[#allocation10 + $0x8] sm:$0xff]
        %v622 = vld [vmem:[#allocation10 + $0x10] sm:$0xff]
        %v623 = vld [vmem:[#allocation10 + $0x18] sm:$0xff]
        %v624 = vld [vmem:[%s6] sm:$0x1]
        %v626 = vlaneseq
        %v627 = vshrl.u32 %v626, 7
        %v628 = vsub.s32 0, %v627
        %v629 = vrot.slane %v624, %v628
        %v632 = vsel %vm545, %v532, 0
        %634 = vmatprep.subr.mxu0 0.0
        %635 = vmatpush1.msra.mxu0 0.0
        %636 = vmatprep.subr.mxu0 0.0
        %637 = vmatpush1.msra.mxu0 0.0
        %638 = vmatprep.subr.mxu0 0.0
        %639 = vmatpush1.msra.mxu0 0.0
        %640 = vmatprep.subr.mxu0 0.0
        %641 = vmatpush1.msra.mxu0 0.0
        %642 = vmatprep.subr.mxu0 0.0
        %643 = vmatpush1.msra.mxu0 0.0
        %644 = vmatprep.subr.mxu0 0.0
        %645 = vmatpush1.msra.mxu0 0.0
        %646 = vmatprep.subr.mxu0 0.0
        %647 = vmatpush1.msra.mxu0 0.0
        %648 = vmatprep.subr.mxu0 0.0
        %649 = vmatpush1.msra.mxu0 0.0
        %650 = vmatprep.subr.mxu0 0.0
        %651 = vmatpush1.msra.mxu0 0.0
        %652 = vmatprep.subr.mxu0 0.0
        %653 = vmatpush1.msra.mxu0 0.0
        %654 = vmatprep.subr.mxu0 0.0
        %655 = vmatpush1.msra.mxu0 0.0
        %656 = vmatprep.subr.mxu0 0.0
        %657 = vmatpush1.msra.mxu0 0.0
        %658 = vmatprep.subr.mxu0 0.0
        %659 = vmatpush1.msra.mxu0 %v623
        %660 = vmatprep.subr.mxu0 0.0
        %661 = vmatpush1.msra.mxu0 %v622
        %662 = vmatprep.subr.mxu0 0.0
        %663 = vmatpush1.msra.mxu0 %v621
        %664 = vmatprep.subr.mxu0 0.0
        %665 = vmatpush1.msra.mxu0 %v620
        %666 = vmatprep.subr.mxu0 0.0
        %667 = vmatpush2.msra.mxu0 0.0
        %668 = vmatprep.subr.mxu0 0.0
        %669 = vmatpush2.msra.mxu0 0.0
        %670 = vmatprep.subr.mxu0 0.0
        %671 = vmatpush2.msra.mxu0 0.0
        %672 = vmatprep.subr.mxu0 0.0
        %673 = vmatpush2.msra.mxu0 0.0
        %674 = vmatprep.subr.mxu0 0.0
        %675 = vmatpush2.msra.mxu0 0.0
        %676 = vmatprep.subr.mxu0 0.0
        %677 = vmatpush2.msra.mxu0 0.0
        %678 = vmatprep.subr.mxu0 0.0
        %679 = vmatpush2.msra.mxu0 0.0
        %680 = vmatprep.subr.mxu0 0.0
        %681 = vmatpush2.msra.mxu0 0.0
        %682 = vmatprep.subr.mxu0 0.0
        %683 = vmatpush2.msra.mxu0 0.0
        %684 = vmatprep.subr.mxu0 0.0
        %685 = vmatpush2.msra.mxu0 0.0
        %686 = vmatprep.subr.mxu0 0.0
        %687 = vmatpush2.msra.mxu0 0.0
        %688 = vmatprep.subr.mxu0 0.0
        %689 = vmatpush2.msra.mxu0 0.0
        %690 = vmatprep.subr.mxu0 0.0
        %691 = vmatpush2.msra.mxu0 0.0
        %692 = vmatprep.subr.mxu0 0.0
        %693 = vmatpush2.msra.mxu0 0.0
        %694 = vmatprep.subr.mxu0 0.0
        %695 = vmatpush2.msra.mxu0 0.0
        %696 = vmatprep.subr.mxu0 0.0
        %697 = vmatpush2.msra.mxu0 0.0
        %698 = vmatprep.mubr.f32.mxu0 0.0
        %699 = vmatmul.mubr.f32.gmra.mxu0 %v632
        %v700 = vpop.f32.mrf.mxu0
        %v701 = vadd.f32 %v629, %v700
        %v702 = vpop.f32.mrf.mxu0
        %703 = vdwg.mxu0
        %v704 = vld [vmem:[#allocation11] sm:$0xff]
        %v705 = vld [vmem:[#allocation11 + $0x8] sm:$0xff]
        %v706 = vld [vmem:[#allocation11 + $0x10] sm:$0xff]
        %v707 = vld [vmem:[#allocation11 + $0x18] sm:$0xff]
        %v708 = vld [vmem:[%s8] sm:$0x1]
        %v710 = vlaneseq
        %v711 = vshrl.u32 %v710, 7
        %v712 = vsub.s32 0, %v711
        %v713 = vrot.slane %v708, %v712
        %v716 = vsel %vm545, %v533, 0
        %718 = vmatprep.subr.mxu0 0.0
        %719 = vmatpush1.msra.mxu0 0.0
        %720 = vmatprep.subr.mxu0 0.0
        %721 = vmatpush1.msra.mxu0 0.0
        %722 = vmatprep.subr.mxu0 0.0
        %723 = vmatpush1.msra.mxu0 0.0
        %724 = vmatprep.subr.mxu0 0.0
        %725 = vmatpush1.msra.mxu0 0.0
        %726 = vmatprep.subr.mxu0 0.0
        %727 = vmatpush1.msra.mxu0 0.0
        %728 = vmatprep.subr.mxu0 0.0
        %729 = vmatpush1.msra.mxu0 0.0
        %730 = vmatprep.subr.mxu0 0.0
        %731 = vmatpush1.msra.mxu0 0.0
        %732 = vmatprep.subr.mxu0 0.0
        %733 = vmatpush1.msra.mxu0 0.0
        %734 = vmatprep.subr.mxu0 0.0
        %735 = vmatpush1.msra.mxu0 0.0
        %736 = vmatprep.subr.mxu0 0.0
        %737 = vmatpush1.msra.mxu0 0.0
        %738 = vmatprep.subr.mxu0 0.0
        %739 = vmatpush1.msra.mxu0 0.0
        %740 = vmatprep.subr.mxu0 0.0
        %741 = vmatpush1.msra.mxu0 0.0
        %742 = vmatprep.subr.mxu0 0.0
        %743 = vmatpush1.msra.mxu0 %v707
        %744 = vmatprep.subr.mxu0 0.0
        %745 = vmatpush1.msra.mxu0 %v706
        %746 = vmatprep.subr.mxu0 0.0
        %747 = vmatpush1.msra.mxu0 %v705
        %748 = vmatprep.subr.mxu0 0.0
        %749 = vmatpush1.msra.mxu0 %v704
        %750 = vmatprep.subr.mxu0 0.0
        %751 = vmatpush2.msra.mxu0 0.0
        %752 = vmatprep.subr.mxu0 0.0
        %753 = vmatpush2.msra.mxu0 0.0
        %754 = vmatprep.subr.mxu0 0.0
        %755 = vmatpush2.msra.mxu0 0.0
        %756 = vmatprep.subr.mxu0 0.0
        %757 = vmatpush2.msra.mxu0 0.0
        %758 = vmatprep.subr.mxu0 0.0
        %759 = vmatpush2.msra.mxu0 0.0
        %760 = vmatprep.subr.mxu0 0.0
        %761 = vmatpush2.msra.mxu0 0.0
        %762 = vmatprep.subr.mxu0 0.0
        %763 = vmatpush2.msra.mxu0 0.0
        %764 = vmatprep.subr.mxu0 0.0
        %765 = vmatpush2.msra.mxu0 0.0
        %766 = vmatprep.subr.mxu0 0.0
        %767 = vmatpush2.msra.mxu0 0.0
        %768 = vmatprep.subr.mxu0 0.0
        %769 = vmatpush2.msra.mxu0 0.0
        %770 = vmatprep.subr.mxu0 0.0
        %771 = vmatpush2.msra.mxu0 0.0
        %772 = vmatprep.subr.mxu0 0.0
        %773 = vmatpush2.msra.mxu0 0.0
        %774 = vmatprep.subr.mxu0 0.0
        %775 = vmatpush2.msra.mxu0 0.0
        %776 = vmatprep.subr.mxu0 0.0
        %777 = vmatpush2.msra.mxu0 0.0
        %778 = vmatprep.subr.mxu0 0.0
        %779 = vmatpush2.msra.mxu0 0.0
        %780 = vmatprep.subr.mxu0 0.0
        %781 = vmatpush2.msra.mxu0 0.0
        %782 = vmatprep.mubr.f32.mxu0 0.0
        %783 = vmatmul.mubr.f32.gmra.mxu0 %v716
        %v784 = vpop.f32.mrf.mxu0
        %v785 = vadd.f32 %v713, %v784
        %v786 = vpop.f32.mrf.mxu0
        %787 = vdwg.mxu0
        %789 = vrot.lane.b32.xlu0 %v619, 120
        %v790 = vpop.permute.xlu0 %789
        %791 = vrot.lane.b32.xlu0 %v619, 112
        %v792 = vpop.permute.xlu0 %791
        %793 = vrot.lane.b32.xlu0 %v619, 104
        %v794 = vpop.permute.xlu0 %793
        %796 = vrot.lane.b32.xlu0 %v701, 120
        %v797 = vpop.permute.xlu0 %796
        %798 = vrot.lane.b32.xlu0 %v701, 112
        %v799 = vpop.permute.xlu0 %798
        %800 = vrot.lane.b32.xlu0 %v701, 104
        %v801 = vpop.permute.xlu0 %800
        %803 = vrot.lane.b32.xlu0 %v785, 120
        %v804 = vpop.permute.xlu0 %803
        %806 = vrot.lane.b32.xlu0 %v785, 112
        %v807 = vpop.permute.xlu0 %806
        %809 = vrot.lane.b32.xlu0 %v785, 104
        %v810 = vpop.permute.xlu0 %809
        %vm812 = vcmask 64512
        %v813 = vsel %vm812, %v619, 0
        %v815 = vsel %vm812, %v701, 0
        %817 = vmatprep.subr.mxu0 0.0
        %818 = vmatpush1.xpose.msra.mxu0 0.0
        %819 = vmatprep.subr.mxu0 0.0
        %820 = vmatpush1.xpose.msra.mxu0 0.0
        %821 = vmatprep.subr.mxu0 0.0
        %822 = vmatpush1.xpose.msra.mxu0 0.0
        %823 = vmatprep.subr.mxu0 0.0
        %824 = vmatpush1.xpose.msra.mxu0 0.0
        %825 = vmatprep.subr.mxu0 0.0
        %826 = vmatpush1.xpose.msra.mxu0 0.0
        %827 = vmatprep.subr.mxu0 0.0
        %828 = vmatpush1.xpose.msra.mxu0 0.0
        %829 = vmatprep.subr.mxu0 0.0
        %830 = vmatpush1.xpose.msra.mxu0 0.0
        %831 = vmatprep.subr.mxu0 0.0
        %832 = vmatpush1.xpose.msra.mxu0 0.0
        %833 = vmatprep.subr.mxu0 0.0
        %834 = vmatpush1.xpose.msra.mxu0 0.0
        %835 = vmatprep.subr.mxu0 0.0
        %836 = vmatpush1.xpose.msra.mxu0 0.0
        %837 = vmatprep.subr.mxu0 0.0
        %838 = vmatpush1.xpose.msra.mxu0 0.0
        %839 = vmatprep.subr.mxu0 0.0
        %840 = vmatpush1.xpose.msra.mxu0 0.0
        %841 = vmatprep.subr.mxu0 0.0
        %842 = vmatpush1.xpose.msra.mxu0 0.0
        %843 = vmatprep.subr.mxu0 0.0
        %844 = vmatpush1.xpose.msra.mxu0 0.0
        %845 = vmatprep.subr.mxu0 0.0
        %846 = vmatpush1.xpose.msra.mxu0 0.0
        %847 = vmatprep.subr.mxu0 0.0
        %848 = vmatpush1.xpose.msra.mxu0 %v815
        %849 = vmatprep.subr.mxu0 0.0
        %850 = vmatpush2.xpose.msra.mxu0 0.0
        %851 = vmatprep.subr.mxu0 0.0
        %852 = vmatpush2.xpose.msra.mxu0 0.0
        %853 = vmatprep.subr.mxu0 0.0
        %854 = vmatpush2.xpose.msra.mxu0 0.0
        %855 = vmatprep.subr.mxu0 0.0
        %856 = vmatpush2.xpose.msra.mxu0 0.0
        %857 = vmatprep.subr.mxu0 0.0
        %858 = vmatpush2.xpose.msra.mxu0 0.0
        %859 = vmatprep.subr.mxu0 0.0
        %860 = vmatpush2.xpose.msra.mxu0 0.0
        %861 = vmatprep.subr.mxu0 0.0
        %862 = vmatpush2.xpose.msra.mxu0 0.0
        %863 = vmatprep.subr.mxu0 0.0
        %864 = vmatpush2.xpose.msra.mxu0 0.0
        %865 = vmatprep.subr.mxu0 0.0
        %866 = vmatpush2.xpose.msra.mxu0 0.0
        %867 = vmatprep.subr.mxu0 0.0
        %868 = vmatpush2.xpose.msra.mxu0 0.0
        %869 = vmatprep.subr.mxu0 0.0
        %870 = vmatpush2.xpose.msra.mxu0 0.0
        %871 = vmatprep.subr.mxu0 0.0
        %872 = vmatpush2.xpose.msra.mxu0 0.0
        %873 = vmatprep.subr.mxu0 0.0
        %874 = vmatpush2.xpose.msra.mxu0 0.0
        %875 = vmatprep.subr.mxu0 0.0
        %876 = vmatpush2.xpose.msra.mxu0 0.0
        %877 = vmatprep.subr.mxu0 0.0
        %878 = vmatpush2.xpose.msra.mxu0 0.0
        %879 = vmatprep.subr.mxu0 0.0
        %880 = vmatpush2.xpose.msra.mxu0 0.0
        %881 = vmatprep.mubr.f32.mxu0 0.0
        %882 = vmatmul.mubr.f32.gmra.mxu0 %v813
        %v883 = vpop.f32.mrf.mxu0
        %v884 = vadd.f32 0.0, %v883
        %v885 = vpop.f32.mrf.mxu0
        %886 = vdwg.mxu0
        %v887 = vsel %vm812, %v790, 0
        %v889 = vsel %vm812, %v797, 0
        %891 = vmatprep.subr.mxu0 0.0
        %892 = vmatpush1.xpose.msra.mxu0 0.0
        %893 = vmatprep.subr.mxu0 0.0
        %894 = vmatpush1.xpose.msra.mxu0 0.0
        %895 = vmatprep.subr.mxu0 0.0
        %896 = vmatpush1.xpose.msra.mxu0 0.0
        %897 = vmatprep.subr.mxu0 0.0
        %898 = vmatpush1.xpose.msra.mxu0 0.0
        %899 = vmatprep.subr.mxu0 0.0
        %900 = vmatpush1.xpose.msra.mxu0 0.0
        %901 = vmatprep.subr.mxu0 0.0
        %902 = vmatpush1.xpose.msra.mxu0 0.0
        %903 = vmatprep.subr.mxu0 0.0
        %904 = vmatpush1.xpose.msra.mxu0 0.0
        %905 = vmatprep.subr.mxu0 0.0
        %906 = vmatpush1.xpose.msra.mxu0 0.0
        %907 = vmatprep.subr.mxu0 0.0
        %908 = vmatpush1.xpose.msra.mxu0 0.0
        %909 = vmatprep.subr.mxu0 0.0
        %910 = vmatpush1.xpose.msra.mxu0 0.0
        %911 = vmatprep.subr.mxu0 0.0
        %912 = vmatpush1.xpose.msra.mxu0 0.0
        %913 = vmatprep.subr.mxu0 0.0
        %914 = vmatpush1.xpose.msra.mxu0 0.0
        %915 = vmatprep.subr.mxu0 0.0
        %916 = vmatpush1.xpose.msra.mxu0 0.0
        %917 = vmatprep.subr.mxu0 0.0
        %918 = vmatpush1.xpose.msra.mxu0 0.0
        %919 = vmatprep.subr.mxu0 0.0
        %920 = vmatpush1.xpose.msra.mxu0 0.0
        %921 = vmatprep.subr.mxu0 0.0
        %922 = vmatpush1.xpose.msra.mxu0 %v889
        %923 = vmatprep.subr.mxu0 0.0
        %924 = vmatpush2.xpose.msra.mxu0 0.0
        %925 = vmatprep.subr.mxu0 0.0
        %926 = vmatpush2.xpose.msra.mxu0 0.0
        %927 = vmatprep.subr.mxu0 0.0
        %928 = vmatpush2.xpose.msra.mxu0 0.0
        %929 = vmatprep.subr.mxu0 0.0
        %930 = vmatpush2.xpose.msra.mxu0 0.0
        %931 = vmatprep.subr.mxu0 0.0
        %932 = vmatpush2.xpose.msra.mxu0 0.0
        %933 = vmatprep.subr.mxu0 0.0
        %934 = vmatpush2.xpose.msra.mxu0 0.0
        %935 = vmatprep.subr.mxu0 0.0
        %936 = vmatpush2.xpose.msra.mxu0 0.0
        %937 = vmatprep.subr.mxu0 0.0
        %938 = vmatpush2.xpose.msra.mxu0 0.0
        %939 = vmatprep.subr.mxu0 0.0
        %940 = vmatpush2.xpose.msra.mxu0 0.0
        %941 = vmatprep.subr.mxu0 0.0
        %942 = vmatpush2.xpose.msra.mxu0 0.0
        %943 = vmatprep.subr.mxu0 0.0
        %944 = vmatpush2.xpose.msra.mxu0 0.0
        %945 = vmatprep.subr.mxu0 0.0
        %946 = vmatpush2.xpose.msra.mxu0 0.0
        %947 = vmatprep.subr.mxu0 0.0
        %948 = vmatpush2.xpose.msra.mxu0 0.0
        %949 = vmatprep.subr.mxu0 0.0
        %950 = vmatpush2.xpose.msra.mxu0 0.0
        %951 = vmatprep.subr.mxu0 0.0
        %952 = vmatpush2.xpose.msra.mxu0 0.0
        %953 = vmatprep.subr.mxu0 0.0
        %954 = vmatpush2.xpose.msra.mxu0 0.0
        %955 = vmatprep.mubr.f32.mxu0 0.0
        %956 = vmatmul.mubr.f32.gmra.mxu0 %v887
        %v957 = vpop.f32.mrf.mxu0
        %v958 = vadd.f32 0.0, %v957
        %v959 = vpop.f32.mrf.mxu0
        %960 = vdwg.mxu0
        %v961 = vsel %vm812, %v792, 0
        %v963 = vsel %vm812, %v799, 0
        %965 = vmatprep.subr.mxu0 0.0
        %966 = vmatpush1.xpose.msra.mxu0 0.0
        %967 = vmatprep.subr.mxu0 0.0
        %968 = vmatpush1.xpose.msra.mxu0 0.0
        %969 = vmatprep.subr.mxu0 0.0
        %970 = vmatpush1.xpose.msra.mxu0 0.0
        %971 = vmatprep.subr.mxu0 0.0
        %972 = vmatpush1.xpose.msra.mxu0 0.0
        %973 = vmatprep.subr.mxu0 0.0
        %974 = vmatpush1.xpose.msra.mxu0 0.0
        %975 = vmatprep.subr.mxu0 0.0
        %976 = vmatpush1.xpose.msra.mxu0 0.0
        %977 = vmatprep.subr.mxu0 0.0
        %978 = vmatpush1.xpose.msra.mxu0 0.0
        %979 = vmatprep.subr.mxu0 0.0
        %980 = vmatpush1.xpose.msra.mxu0 0.0
        %981 = vmatprep.subr.mxu0 0.0
        %982 = vmatpush1.xpose.msra.mxu0 0.0
        %983 = vmatprep.subr.mxu0 0.0
        %984 = vmatpush1.xpose.msra.mxu0 0.0
        %985 = vmatprep.subr.mxu0 0.0
        %986 = vmatpush1.xpose.msra.mxu0 0.0
        %987 = vmatprep.subr.mxu0 0.0
        %988 = vmatpush1.xpose.msra.mxu0 0.0
        %989 = vmatprep.subr.mxu0 0.0
        %990 = vmatpush1.xpose.msra.mxu0 0.0
        %991 = vmatprep.subr.mxu0 0.0
        %992 = vmatpush1.xpose.msra.mxu0 0.0
        %993 = vmatprep.subr.mxu0 0.0
        %994 = vmatpush1.xpose.msra.mxu0 0.0
        %995 = vmatprep.subr.mxu0 0.0
        %996 = vmatpush1.xpose.msra.mxu0 %v963
        %997 = vmatprep.subr.mxu0 0.0
        %998 = vmatpush2.xpose.msra.mxu0 0.0
        %999 = vmatprep.subr.mxu0 0.0
        %1000 = vmatpush2.xpose.msra.mxu0 0.0
        %1001 = vmatprep.subr.mxu0 0.0
        %1002 = vmatpush2.xpose.msra.mxu0 0.0
        %1003 = vmatprep.subr.mxu0 0.0
        %1004 = vmatpush2.xpose.msra.mxu0 0.0
        %1005 = vmatprep.subr.mxu0 0.0
        %1006 = vmatpush2.xpose.msra.mxu0 0.0
        %1007 = vmatprep.subr.mxu0 0.0
        %1008 = vmatpush2.xpose.msra.mxu0 0.0
        %1009 = vmatprep.subr.mxu0 0.0
        %1010 = vmatpush2.xpose.msra.mxu0 0.0
        %1011 = vmatprep.subr.mxu0 0.0
        %1012 = vmatpush2.xpose.msra.mxu0 0.0
        %1013 = vmatprep.subr.mxu0 0.0
        %1014 = vmatpush2.xpose.msra.mxu0 0.0
        %1015 = vmatprep.subr.mxu0 0.0
        %1016 = vmatpush2.xpose.msra.mxu0 0.0
        %1017 = vmatprep.subr.mxu0 0.0
        %1018 = vmatpush2.xpose.msra.mxu0 0.0
        %1019 = vmatprep.subr.mxu0 0.0
        %1020 = vmatpush2.xpose.msra.mxu0 0.0
        %1021 = vmatprep.subr.mxu0 0.0
        %1022 = vmatpush2.xpose.msra.mxu0 0.0
        %1023 = vmatprep.subr.mxu0 0.0
        %1024 = vmatpush2.xpose.msra.mxu0 0.0
        %1025 = vmatprep.subr.mxu0 0.0
        %1026 = vmatpush2.xpose.msra.mxu0 0.0
        %1027 = vmatprep.subr.mxu0 0.0
        %1028 = vmatpush2.xpose.msra.mxu0 0.0
        %1029 = vmatprep.mubr.f32.mxu0 0.0
        %1030 = vmatmul.mubr.f32.gmra.mxu0 %v961
        %v1031 = vpop.f32.mrf.mxu0
        %v1032 = vadd.f32 0.0, %v1031
        %v1033 = vpop.f32.mrf.mxu0
        %1034 = vdwg.mxu0
        %v1035 = vsel %vm812, %v794, 0
        %v1037 = vsel %vm812, %v801, 0
        %1039 = vmatprep.subr.mxu0 0.0
        %1040 = vmatpush1.xpose.msra.mxu0 0.0
        %1041 = vmatprep.subr.mxu0 0.0
        %1042 = vmatpush1.xpose.msra.mxu0 0.0
        %1043 = vmatprep.subr.mxu0 0.0
        %1044 = vmatpush1.xpose.msra.mxu0 0.0
        %1045 = vmatprep.subr.mxu0 0.0
        %1046 = vmatpush1.xpose.msra.mxu0 0.0
        %1047 = vmatprep.subr.mxu0 0.0
        %1048 = vmatpush1.xpose.msra.mxu0 0.0
        %1049 = vmatprep.subr.mxu0 0.0
        %1050 = vmatpush1.xpose.msra.mxu0 0.0
        %1051 = vmatprep.subr.mxu0 0.0
        %1052 = vmatpush1.xpose.msra.mxu0 0.0
        %1053 = vmatprep.subr.mxu0 0.0
        %1054 = vmatpush1.xpose.msra.mxu0 0.0
        %1055 = vmatprep.subr.mxu0 0.0
        %1056 = vmatpush1.xpose.msra.mxu0 0.0
        %1057 = vmatprep.subr.mxu0 0.0
        %1058 = vmatpush1.xpose.msra.mxu0 0.0
        %1059 = vmatprep.subr.mxu0 0.0
        %1060 = vmatpush1.xpose.msra.mxu0 0.0
        %1061 = vmatprep.subr.mxu0 0.0
        %1062 = vmatpush1.xpose.msra.mxu0 0.0
        %1063 = vmatprep.subr.mxu0 0.0
        %1064 = vmatpush1.xpose.msra.mxu0 0.0
        %1065 = vmatprep.subr.mxu0 0.0
        %1066 = vmatpush1.xpose.msra.mxu0 0.0
        %1067 = vmatprep.subr.mxu0 0.0
        %1068 = vmatpush1.xpose.msra.mxu0 0.0
        %1069 = vmatprep.subr.mxu0 0.0
        %1070 = vmatpush1.xpose.msra.mxu0 %v1037
        %1071 = vmatprep.subr.mxu0 0.0
        %1072 = vmatpush2.xpose.msra.mxu0 0.0
        %1073 = vmatprep.subr.mxu0 0.0
        %1074 = vmatpush2.xpose.msra.mxu0 0.0
        %1075 = vmatprep.subr.mxu0 0.0
        %1076 = vmatpush2.xpose.msra.mxu0 0.0
        %1077 = vmatprep.subr.mxu0 0.0
        %1078 = vmatpush2.xpose.msra.mxu0 0.0
        %1079 = vmatprep.subr.mxu0 0.0
        %1080 = vmatpush2.xpose.msra.mxu0 0.0
        %1081 = vmatprep.subr.mxu0 0.0
        %1082 = vmatpush2.xpose.msra.mxu0 0.0
        %1083 = vmatprep.subr.mxu0 0.0
        %1084 = vmatpush2.xpose.msra.mxu0 0.0
        %1085 = vmatprep.subr.mxu0 0.0
        %1086 = vmatpush2.xpose.msra.mxu0 0.0
        %1087 = vmatprep.subr.mxu0 0.0
        %1088 = vmatpush2.xpose.msra.mxu0 0.0
        %1089 = vmatprep.subr.mxu0 0.0
        %1090 = vmatpush2.xpose.msra.mxu0 0.0
        %1091 = vmatprep.subr.mxu0 0.0
        %1092 = vmatpush2.xpose.msra.mxu0 0.0
        %1093 = vmatprep.subr.mxu0 0.0
        %1094 = vmatpush2.xpose.msra.mxu0 0.0
        %1095 = vmatprep.subr.mxu0 0.0
        %1096 = vmatpush2.xpose.msra.mxu0 0.0
        %1097 = vmatprep.subr.mxu0 0.0
        %1098 = vmatpush2.xpose.msra.mxu0 0.0
        %1099 = vmatprep.subr.mxu0 0.0
        %1100 = vmatpush2.xpose.msra.mxu0 0.0
        %1101 = vmatprep.subr.mxu0 0.0
        %1102 = vmatpush2.xpose.msra.mxu0 0.0
        %1103 = vmatprep.mubr.f32.mxu0 0.0
        %1104 = vmatmul.mubr.f32.gmra.mxu0 %v1035
        %v1105 = vpop.f32.mrf.mxu0
        %v1106 = vadd.f32 0.0, %v1105
        %v1107 = vpop.f32.mrf.mxu0
        %1108 = vdwg.mxu0
        %v1109 = vsel %vm812, %v884, -inf
        %1110 = vmax.xlane.f32.xlu0 %v1109
        %v1111 = vpop.xlane.xlu0 %1110
        %v1112 = vsel %vm812, %v958, -inf
        %1113 = vmax.xlane.f32.xlu0 %v1112
        %v1114 = vpop.xlane.xlu0 %1113
        %v1115 = vsel %vm812, %v1032, -inf
        %1116 = vmax.xlane.f32.xlu0 %v1115
        %v1117 = vpop.xlane.xlu0 %1116
        %v1118 = vsel %vm812, %v1106, -inf
        %1119 = vmax.xlane.f32.xlu0 %v1118
        %v1120 = vpop.xlane.xlu0 %1119
        %v1121 = vsub.f32 %v884, %v1111
        %v1122 = vsub.f32 %v958, %v1114
        %v1123 = vsub.f32 %v1032, %v1117
        %v1124 = vsub.f32 %v1106, %v1120
        %v1125 = vmul.f32 %v1121, 1.442695
        %v1126 = vpow.pop %v1125
        %v1127 = vmul.f32 %v1122, 1.442695
        %v1128 = vpow.pop %v1127
        %v1129 = vmul.f32 %v1123, 1.442695
        %v1130 = vpow.pop %v1129
        %v1131 = vmul.f32 %v1124, 1.442695
        %v1132 = vpow.pop %v1131
        %v1133 = vsel %vm812, %v1126, 0.0
        %1134 = vadd.xlane.f32.xlu0 %v1133
        %v1135 = vpop.xlane.xlu0 %1134
        %v1136 = vsel %vm812, %v1128, 0.0
        %1137 = vadd.xlane.f32.xlu0 %v1136
        %v1138 = vpop.xlane.xlu0 %1137
        %v1139 = vsel %vm812, %v1130, 0.0
        %1140 = vadd.xlane.f32.xlu0 %v1139
        %v1141 = vpop.xlane.xlu0 %1140
        %v1142 = vsel %vm812, %v1132, 0.0
        %1143 = vadd.xlane.f32.xlu0 %v1142
        %v1144 = vpop.xlane.xlu0 %1143
        %v1145 = vrcp.pop %v1135
        %v1146 = vrcp.pop %v1138
        %v1147 = vrcp.pop %v1141
        %v1148 = vrcp.pop %v1144
        %v1149 = vmul.f32 %v1126, %v1145
        %v1150 = vmul.f32 %v1128, %v1146
        %v1151 = vmul.f32 %v1130, %v1147
        %v1152 = vmul.f32 %v1132, %v1148
        %v1154 = vsel %vm812, %v1149, 0
        %1156 = vmatprep.subr.mxu0 0.0
        %1157 = vmatpush1.msra.mxu0 0.0
        %1158 = vmatprep.subr.mxu0 0.0
        %1159 = vmatpush1.msra.mxu0 0.0
        %1160 = vmatprep.subr.mxu0 0.0
        %1161 = vmatpush1.msra.mxu0 0.0
        %1162 = vmatprep.subr.mxu0 0.0
        %1163 = vmatpush1.msra.mxu0 0.0
        %1164 = vmatprep.subr.mxu0 0.0
        %1165 = vmatpush1.msra.mxu0 0.0
        %1166 = vmatprep.subr.mxu0 0.0
        %1167 = vmatpush1.msra.mxu0 0.0
        %1168 = vmatprep.subr.mxu0 0.0
        %1169 = vmatpush1.msra.mxu0 0.0
        %1170 = vmatprep.subr.mxu0 0.0
        %1171 = vmatpush1.msra.mxu0 0.0
        %1172 = vmatprep.subr.mxu0 0.0
        %1173 = vmatpush1.msra.mxu0 0.0
        %1174 = vmatprep.subr.mxu0 0.0
        %1175 = vmatpush1.msra.mxu0 0.0
        %1176 = vmatprep.subr.mxu0 0.0
        %1177 = vmatpush1.msra.mxu0 0.0
        %1178 = vmatprep.subr.mxu0 0.0
        %1179 = vmatpush1.msra.mxu0 0.0
        %1180 = vmatprep.subr.mxu0 0.0
        %1181 = vmatpush1.msra.mxu0 0.0
        %1182 = vmatprep.subr.mxu0 0.0
        %1183 = vmatpush1.msra.mxu0 0.0
        %1184 = vmatprep.subr.mxu0 0.0
        %1185 = vmatpush1.msra.mxu0 0.0
        %1186 = vmatprep.subr.mxu0 0.0
        %1187 = vmatpush1.msra.mxu0 %v785
        %1188 = vmatprep.subr.mxu0 0.0
        %1189 = vmatpush2.msra.mxu0 0.0
        %1190 = vmatprep.subr.mxu0 0.0
        %1191 = vmatpush2.msra.mxu0 0.0
        %1192 = vmatprep.subr.mxu0 0.0
        %1193 = vmatpush2.msra.mxu0 0.0
        %1194 = vmatprep.subr.mxu0 0.0
        %1195 = vmatpush2.msra.mxu0 0.0
        %1196 = vmatprep.subr.mxu0 0.0
        %1197 = vmatpush2.msra.mxu0 0.0
        %1198 = vmatprep.subr.mxu0 0.0
        %1199 = vmatpush2.msra.mxu0 0.0
        %1200 = vmatprep.subr.mxu0 0.0
        %1201 = vmatpush2.msra.mxu0 0.0
        %1202 = vmatprep.subr.mxu0 0.0
        %1203 = vmatpush2.msra.mxu0 0.0
        %1204 = vmatprep.subr.mxu0 0.0
        %1205 = vmatpush2.msra.mxu0 0.0
        %1206 = vmatprep.subr.mxu0 0.0
        %1207 = vmatpush2.msra.mxu0 0.0
        %1208 = vmatprep.subr.mxu0 0.0
        %1209 = vmatpush2.msra.mxu0 0.0
        %1210 = vmatprep.subr.mxu0 0.0
        %1211 = vmatpush2.msra.mxu0 0.0
        %1212 = vmatprep.subr.mxu0 0.0
        %1213 = vmatpush2.msra.mxu0 0.0
        %1214 = vmatprep.subr.mxu0 0.0
        %1215 = vmatpush2.msra.mxu0 0.0
        %1216 = vmatprep.subr.mxu0 0.0
        %1217 = vmatpush2.msra.mxu0 0.0
        %1218 = vmatprep.subr.mxu0 0.0
        %1219 = vmatpush2.msra.mxu0 0.0
        %1220 = vmatprep.mubr.f32.mxu0 0.0
        %1221 = vmatmul.mubr.f32.gmra.mxu0 %v1154
        %v1222 = vpop.f32.mrf.mxu0
        %v1223 = vadd.f32 0.0, %v1222
        %v1224 = vpop.f32.mrf.mxu0
        %1225 = vdwg.mxu0
        %v1227 = vsel %vm812, %v1150, 0
        %1229 = vmatprep.subr.mxu0 0.0
        %1230 = vmatpush1.msra.mxu0 0.0
        %1231 = vmatprep.subr.mxu0 0.0
        %1232 = vmatpush1.msra.mxu0 0.0
        %1233 = vmatprep.subr.mxu0 0.0
        %1234 = vmatpush1.msra.mxu0 0.0
        %1235 = vmatprep.subr.mxu0 0.0
        %1236 = vmatpush1.msra.mxu0 0.0
        %1237 = vmatprep.subr.mxu0 0.0
        %1238 = vmatpush1.msra.mxu0 0.0
        %1239 = vmatprep.subr.mxu0 0.0
        %1240 = vmatpush1.msra.mxu0 0.0
        %1241 = vmatprep.subr.mxu0 0.0
        %1242 = vmatpush1.msra.mxu0 0.0
        %1243 = vmatprep.subr.mxu0 0.0
        %1244 = vmatpush1.msra.mxu0 0.0
        %1245 = vmatprep.subr.mxu0 0.0
        %1246 = vmatpush1.msra.mxu0 0.0
        %1247 = vmatprep.subr.mxu0 0.0
        %1248 = vmatpush1.msra.mxu0 0.0
        %1249 = vmatprep.subr.mxu0 0.0
        %1250 = vmatpush1.msra.mxu0 0.0
        %1251 = vmatprep.subr.mxu0 0.0
        %1252 = vmatpush1.msra.mxu0 0.0
        %1253 = vmatprep.subr.mxu0 0.0
        %1254 = vmatpush1.msra.mxu0 0.0
        %1255 = vmatprep.subr.mxu0 0.0
        %1256 = vmatpush1.msra.mxu0 0.0
        %1257 = vmatprep.subr.mxu0 0.0
        %1258 = vmatpush1.msra.mxu0 0.0
        %1259 = vmatprep.subr.mxu0 0.0
        %1260 = vmatpush1.msra.mxu0 %v804
        %1261 = vmatprep.subr.mxu0 0.0
        %1262 = vmatpush2.msra.mxu0 0.0
        %1263 = vmatprep.subr.mxu0 0.0
        %1264 = vmatpush2.msra.mxu0 0.0
        %1265 = vmatprep.subr.mxu0 0.0
        %1266 = vmatpush2.msra.mxu0 0.0
        %1267 = vmatprep.subr.mxu0 0.0
        %1268 = vmatpush2.msra.mxu0 0.0
        %1269 = vmatprep.subr.mxu0 0.0
        %1270 = vmatpush2.msra.mxu0 0.0
        %1271 = vmatprep.subr.mxu0 0.0
        %1272 = vmatpush2.msra.mxu0 0.0
        %1273 = vmatprep.subr.mxu0 0.0
        %1274 = vmatpush2.msra.mxu0 0.0
        %1275 = vmatprep.subr.mxu0 0.0
        %1276 = vmatpush2.msra.mxu0 0.0
        %1277 = vmatprep.subr.mxu0 0.0
        %1278 = vmatpush2.msra.mxu0 0.0
        %1279 = vmatprep.subr.mxu0 0.0
        %1280 = vmatpush2.msra.mxu0 0.0
        %1281 = vmatprep.subr.mxu0 0.0
        %1282 = vmatpush2.msra.mxu0 0.0
        %1283 = vmatprep.subr.mxu0 0.0
        %1284 = vmatpush2.msra.mxu0 0.0
        %1285 = vmatprep.subr.mxu0 0.0
        %1286 = vmatpush2.msra.mxu0 0.0
        %1287 = vmatprep.subr.mxu0 0.0
        %1288 = vmatpush2.msra.mxu0 0.0
        %1289 = vmatprep.subr.mxu0 0.0
        %1290 = vmatpush2.msra.mxu0 0.0
        %1291 = vmatprep.subr.mxu0 0.0
        %1292 = vmatpush2.msra.mxu0 0.0
        %1293 = vmatprep.mubr.f32.mxu0 0.0
        %1294 = vmatmul.mubr.f32.gmra.mxu0 %v1227
        %v1295 = vpop.f32.mrf.mxu0
        %v1296 = vadd.f32 0.0, %v1295
        %v1297 = vpop.f32.mrf.mxu0
        %1298 = vdwg.mxu0
        %v1300 = vsel %vm812, %v1151, 0
        %1302 = vmatprep.subr.mxu0 0.0
        %1303 = vmatpush1.msra.mxu0 0.0
        %1304 = vmatprep.subr.mxu0 0.0
        %1305 = vmatpush1.msra.mxu0 0.0
        %1306 = vmatprep.subr.mxu0 0.0
        %1307 = vmatpush1.msra.mxu0 0.0
        %1308 = vmatprep.subr.mxu0 0.0
        %1309 = vmatpush1.msra.mxu0 0.0
        %1310 = vmatprep.subr.mxu0 0.0
        %1311 = vmatpush1.msra.mxu0 0.0
        %1312 = vmatprep.subr.mxu0 0.0
        %1313 = vmatpush1.msra.mxu0 0.0
        %1314 = vmatprep.subr.mxu0 0.0
        %1315 = vmatpush1.msra.mxu0 0.0
        %1316 = vmatprep.subr.mxu0 0.0
        %1317 = vmatpush1.msra.mxu0 0.0
        %1318 = vmatprep.subr.mxu0 0.0
        %1319 = vmatpush1.msra.mxu0 0.0
        %1320 = vmatprep.subr.mxu0 0.0
        %1321 = vmatpush1.msra.mxu0 0.0
        %1322 = vmatprep.subr.mxu0 0.0
        %1323 = vmatpush1.msra.mxu0 0.0
        %1324 = vmatprep.subr.mxu0 0.0
        %1325 = vmatpush1.msra.mxu0 0.0
        %1326 = vmatprep.subr.mxu0 0.0
        %1327 = vmatpush1.msra.mxu0 0.0
        %1328 = vmatprep.subr.mxu0 0.0
        %1329 = vmatpush1.msra.mxu0 0.0
        %1330 = vmatprep.subr.mxu0 0.0
        %1331 = vmatpush1.msra.mxu0 0.0
        %1332 = vmatprep.subr.mxu0 0.0
        %1333 = vmatpush1.msra.mxu0 %v807
        %1334 = vmatprep.subr.mxu0 0.0
        %1335 = vmatpush2.msra.mxu0 0.0
        %1336 = vmatprep.subr.mxu0 0.0
        %1337 = vmatpush2.msra.mxu0 0.0
        %1338 = vmatprep.subr.mxu0 0.0
        %1339 = vmatpush2.msra.mxu0 0.0
        %1340 = vmatprep.subr.mxu0 0.0
        %1341 = vmatpush2.msra.mxu0 0.0
        %1342 = vmatprep.subr.mxu0 0.0
        %1343 = vmatpush2.msra.mxu0 0.0
        %1344 = vmatprep.subr.mxu0 0.0
        %1345 = vmatpush2.msra.mxu0 0.0
        %1346 = vmatprep.subr.mxu0 0.0
        %1347 = vmatpush2.msra.mxu0 0.0
        %1348 = vmatprep.subr.mxu0 0.0
        %1349 = vmatpush2.msra.mxu0 0.0
        %1350 = vmatprep.subr.mxu0 0.0
        %1351 = vmatpush2.msra.mxu0 0.0
        %1352 = vmatprep.subr.mxu0 0.0
        %1353 = vmatpush2.msra.mxu0 0.0
        %1354 = vmatprep.subr.mxu0 0.0
        %1355 = vmatpush2.msra.mxu0 0.0
        %1356 = vmatprep.subr.mxu0 0.0
        %1357 = vmatpush2.msra.mxu0 0.0
        %1358 = vmatprep.subr.mxu0 0.0
        %1359 = vmatpush2.msra.mxu0 0.0
        %1360 = vmatprep.subr.mxu0 0.0
        %1361 = vmatpush2.msra.mxu0 0.0
        %1362 = vmatprep.subr.mxu0 0.0
        %1363 = vmatpush2.msra.mxu0 0.0
        %1364 = vmatprep.subr.mxu0 0.0
        %1365 = vmatpush2.msra.mxu0 0.0
        %1366 = vmatprep.mubr.f32.mxu0 0.0
        %1367 = vmatmul.mubr.f32.gmra.mxu0 %v1300
        %v1368 = vpop.f32.mrf.mxu0
        %v1369 = vadd.f32 0.0, %v1368
        %v1370 = vpop.f32.mrf.mxu0
        %1371 = vdwg.mxu0
        %v1373 = vsel %vm812, %v1152, 0
        %1375 = vmatprep.subr.mxu0 0.0
        %1376 = vmatpush1.msra.mxu0 0.0
        %1377 = vmatprep.subr.mxu0 0.0
        %1378 = vmatpush1.msra.mxu0 0.0
        %1379 = vmatprep.subr.mxu0 0.0
        %1380 = vmatpush1.msra.mxu0 0.0
        %1381 = vmatprep.subr.mxu0 0.0
        %1382 = vmatpush1.msra.mxu0 0.0
        %1383 = vmatprep.subr.mxu0 0.0
        %1384 = vmatpush1.msra.mxu0 0.0
        %1385 = vmatprep.subr.mxu0 0.0
        %1386 = vmatpush1.msra.mxu0 0.0
        %1387 = vmatprep.subr.mxu0 0.0
        %1388 = vmatpush1.msra.mxu0 0.0
        %1389 = vmatprep.subr.mxu0 0.0
        %1390 = vmatpush1.msra.mxu0 0.0
        %1391 = vmatprep.subr.mxu0 0.0
        %1392 = vmatpush1.msra.mxu0 0.0
        %1393 = vmatprep.subr.mxu0 0.0
        %1394 = vmatpush1.msra.mxu0 0.0
        %1395 = vmatprep.subr.mxu0 0.0
        %1396 = vmatpush1.msra.mxu0 0.0
        %1397 = vmatprep.subr.mxu0 0.0
        %1398 = vmatpush1.msra.mxu0 0.0
        %1399 = vmatprep.subr.mxu0 0.0
        %1400 = vmatpush1.msra.mxu0 0.0
        %1401 = vmatprep.subr.mxu0 0.0
        %1402 = vmatpush1.msra.mxu0 0.0
        %1403 = vmatprep.subr.mxu0 0.0
        %1404 = vmatpush1.msra.mxu0 0.0
        %1405 = vmatprep.subr.mxu0 0.0
        %1406 = vmatpush1.msra.mxu0 %v810
        %1407 = vmatprep.subr.mxu0 0.0
        %1408 = vmatpush2.msra.mxu0 0.0
        %1409 = vmatprep.subr.mxu0 0.0
        %1410 = vmatpush2.msra.mxu0 0.0
        %1411 = vmatprep.subr.mxu0 0.0
        %1412 = vmatpush2.msra.mxu0 0.0
        %1413 = vmatprep.subr.mxu0 0.0
        %1414 = vmatpush2.msra.mxu0 0.0
        %1415 = vmatprep.subr.mxu0 0.0
        %1416 = vmatpush2.msra.mxu0 0.0
        %1417 = vmatprep.subr.mxu0 0.0
        %1418 = vmatpush2.msra.mxu0 0.0
        %1419 = vmatprep.subr.mxu0 0.0
        %1420 = vmatpush2.msra.mxu0 0.0
        %1421 = vmatprep.subr.mxu0 0.0
        %1422 = vmatpush2.msra.mxu0 0.0
        %1423 = vmatprep.subr.mxu0 0.0
        %1424 = vmatpush2.msra.mxu0 0.0
        %1425 = vmatprep.subr.mxu0 0.0
        %1426 = vmatpush2.msra.mxu0 0.0
        %1427 = vmatprep.subr.mxu0 0.0
        %1428 = vmatpush2.msra.mxu0 0.0
        %1429 = vmatprep.subr.mxu0 0.0
        %1430 = vmatpush2.msra.mxu0 0.0
        %1431 = vmatprep.subr.mxu0 0.0
        %1432 = vmatpush2.msra.mxu0 0.0
        %1433 = vmatprep.subr.mxu0 0.0
        %1434 = vmatpush2.msra.mxu0 0.0
        %1435 = vmatprep.subr.mxu0 0.0
        %1436 = vmatpush2.msra.mxu0 0.0
        %1437 = vmatprep.subr.mxu0 0.0
        %1438 = vmatpush2.msra.mxu0 0.0
        %1439 = vmatprep.mubr.f32.mxu0 0.0
        %1440 = vmatmul.mubr.f32.gmra.mxu0 %v1373
        %v1441 = vpop.f32.mrf.mxu0
        %v1442 = vadd.f32 0.0, %v1441
        %v1443 = vpop.f32.mrf.mxu0
        %1444 = vdwg.mxu0
        %v1445 = vld [vmem:[#allocation13] sm:$0xff]
        %v1446 = vld [vmem:[#allocation13 + $0x8] sm:$0xff]
        %v1447 = vld [vmem:[#allocation13 + $0x10] sm:$0xff]
        %v1448 = vld [vmem:[#allocation13 + $0x18] sm:$0xff]
        %v1450 = vsel %vm812, %v1296, 0
        %1452 = vmatprep.subr.mxu0 0.0
        %1453 = vmatpush1.msra.mxu0 0.0
        %1454 = vmatprep.subr.mxu0 0.0
        %1455 = vmatpush1.msra.mxu0 0.0
        %1456 = vmatprep.subr.mxu0 0.0
        %1457 = vmatpush1.msra.mxu0 0.0
        %1458 = vmatprep.subr.mxu0 0.0
        %1459 = vmatpush1.msra.mxu0 0.0
        %1460 = vmatprep.subr.mxu0 0.0
        %1461 = vmatpush1.msra.mxu0 0.0
        %1462 = vmatprep.subr.mxu0 0.0
        %1463 = vmatpush1.msra.mxu0 0.0
        %1464 = vmatprep.subr.mxu0 0.0
        %1465 = vmatpush1.msra.mxu0 0.0
        %1466 = vmatprep.subr.mxu0 0.0
        %1467 = vmatpush1.msra.mxu0 0.0
        %1468 = vmatprep.subr.mxu0 0.0
        %1469 = vmatpush1.msra.mxu0 0.0
        %1470 = vmatprep.subr.mxu0 0.0
        %1471 = vmatpush1.msra.mxu0 0.0
        %1472 = vmatprep.subr.mxu0 0.0
        %1473 = vmatpush1.msra.mxu0 0.0
        %1474 = vmatprep.subr.mxu0 0.0
        %1475 = vmatpush1.msra.mxu0 0.0
        %1476 = vmatprep.subr.mxu0 0.0
        %1477 = vmatpush1.msra.mxu0 0.0
        %1478 = vmatprep.subr.mxu0 0.0
        %1479 = vmatpush1.msra.mxu0 0.0
        %1480 = vmatprep.subr.mxu0 0.0
        %1481 = vmatpush1.msra.mxu0 0.0
        %1482 = vmatprep.subr.mxu0 0.0
        %1483 = vmatpush1.msra.mxu0 %v1446
        %1484 = vmatprep.subr.mxu0 0.0
        %1485 = vmatpush2.msra.mxu0 0.0
        %1486 = vmatprep.subr.mxu0 0.0
        %1487 = vmatpush2.msra.mxu0 0.0
        %1488 = vmatprep.subr.mxu0 0.0
        %1489 = vmatpush2.msra.mxu0 0.0
        %1490 = vmatprep.subr.mxu0 0.0
        %1491 = vmatpush2.msra.mxu0 0.0
        %1492 = vmatprep.subr.mxu0 0.0
        %1493 = vmatpush2.msra.mxu0 0.0
        %1494 = vmatprep.subr.mxu0 0.0
        %1495 = vmatpush2.msra.mxu0 0.0
        %1496 = vmatprep.subr.mxu0 0.0
        %1497 = vmatpush2.msra.mxu0 0.0
        %1498 = vmatprep.subr.mxu0 0.0
        %1499 = vmatpush2.msra.mxu0 0.0
        %1500 = vmatprep.subr.mxu0 0.0
        %1501 = vmatpush2.msra.mxu0 0.0
        %1502 = vmatprep.subr.mxu0 0.0
        %1503 = vmatpush2.msra.mxu0 0.0
        %1504 = vmatprep.subr.mxu0 0.0
        %1505 = vmatpush2.msra.mxu0 0.0
        %1506 = vmatprep.subr.mxu0 0.0
        %1507 = vmatpush2.msra.mxu0 0.0
        %1508 = vmatprep.subr.mxu0 0.0
        %1509 = vmatpush2.msra.mxu0 0.0
        %1510 = vmatprep.subr.mxu0 0.0
        %1511 = vmatpush2.msra.mxu0 0.0
        %1512 = vmatprep.subr.mxu0 0.0
        %1513 = vmatpush2.msra.mxu0 0.0
        %1514 = vmatprep.subr.mxu0 0.0
        %1515 = vmatpush2.msra.mxu0 0.0
        %1516 = vmatprep.mubr.f32.mxu0 0.0
        %1517 = vmatmul.mubr.f32.gmra.mxu0 %v1450
        %v1518 = vpop.f32.mrf.mxu0
        %v1519 = vadd.f32 0.0, %v1518
        %v1520 = vpop.f32.mrf.mxu0
        %1521 = vdwg.mxu0
        %v1523 = vsel %vm812, %v1223, 0
        %1525 = vmatprep.subr.mxu0 0.0
        %1526 = vmatpush1.msra.mxu0 0.0
        %1527 = vmatprep.subr.mxu0 0.0
        %1528 = vmatpush1.msra.mxu0 0.0
        %1529 = vmatprep.subr.mxu0 0.0
        %1530 = vmatpush1.msra.mxu0 0.0
        %1531 = vmatprep.subr.mxu0 0.0
        %1532 = vmatpush1.msra.mxu0 0.0
        %1533 = vmatprep.subr.mxu0 0.0
        %1534 = vmatpush1.msra.mxu0 0.0
        %1535 = vmatprep.subr.mxu0 0.0
        %1536 = vmatpush1.msra.mxu0 0.0
        %1537 = vmatprep.subr.mxu0 0.0
        %1538 = vmatpush1.msra.mxu0 0.0
        %1539 = vmatprep.subr.mxu0 0.0
        %1540 = vmatpush1.msra.mxu0 0.0
        %1541 = vmatprep.subr.mxu0 0.0
        %1542 = vmatpush1.msra.mxu0 0.0
        %1543 = vmatprep.subr.mxu0 0.0
        %1544 = vmatpush1.msra.mxu0 0.0
        %1545 = vmatprep.subr.mxu0 0.0
        %1546 = vmatpush1.msra.mxu0 0.0
        %1547 = vmatprep.subr.mxu0 0.0
        %1548 = vmatpush1.msra.mxu0 0.0
        %1549 = vmatprep.subr.mxu0 0.0
        %1550 = vmatpush1.msra.mxu0 0.0
        %1551 = vmatprep.subr.mxu0 0.0
        %1552 = vmatpush1.msra.mxu0 0.0
        %1553 = vmatprep.subr.mxu0 0.0
        %1554 = vmatpush1.msra.mxu0 0.0
        %1555 = vmatprep.subr.mxu0 0.0
        %1556 = vmatpush1.msra.mxu0 %v1445
        %1557 = vmatprep.subr.mxu0 0.0
        %1558 = vmatpush2.msra.mxu0 0.0
        %1559 = vmatprep.subr.mxu0 0.0
        %1560 = vmatpush2.msra.mxu0 0.0
        %1561 = vmatprep.subr.mxu0 0.0
        %1562 = vmatpush2.msra.mxu0 0.0
        %1563 = vmatprep.subr.mxu0 0.0
        %1564 = vmatpush2.msra.mxu0 0.0
        %1565 = vmatprep.subr.mxu0 0.0
        %1566 = vmatpush2.msra.mxu0 0.0
        %1567 = vmatprep.subr.mxu0 0.0
        %1568 = vmatpush2.msra.mxu0 0.0
        %1569 = vmatprep.subr.mxu0 0.0
        %1570 = vmatpush2.msra.mxu0 0.0
        %1571 = vmatprep.subr.mxu0 0.0
        %1572 = vmatpush2.msra.mxu0 0.0
        %1573 = vmatprep.subr.mxu0 0.0
        %1574 = vmatpush2.msra.mxu0 0.0
        %1575 = vmatprep.subr.mxu0 0.0
        %1576 = vmatpush2.msra.mxu0 0.0
        %1577 = vmatprep.subr.mxu0 0.0
        %1578 = vmatpush2.msra.mxu0 0.0
        %1579 = vmatprep.subr.mxu0 0.0
        %1580 = vmatpush2.msra.mxu0 0.0
        %1581 = vmatprep.subr.mxu0 0.0
        %1582 = vmatpush2.msra.mxu0 0.0
        %1583 = vmatprep.subr.mxu0 0.0
        %1584 = vmatpush2.msra.mxu0 0.0
        %1585 = vmatprep.subr.mxu0 0.0
        %1586 = vmatpush2.msra.mxu0 0.0
        %1587 = vmatprep.subr.mxu0 0.0
        %1588 = vmatpush2.msra.mxu0 0.0
        %1589 = vmatprep.mubr.f32.mxu0 0.0
        %1590 = vmatmul.mubr.f32.gmra.mxu0 %v1523
        %v1591 = vpop.f32.mrf.mxu0
        %v1592 = vadd.f32 %v1519, %v1591
        %v1593 = vpop.f32.mrf.mxu0
        %1594 = vdwg.mxu0
        %v1596 = vsel %vm812, %v1369, 0
        %1598 = vmatprep.subr.mxu0 0.0
        %1599 = vmatpush1.msra.mxu0 0.0
        %1600 = vmatprep.subr.mxu0 0.0
        %1601 = vmatpush1.msra.mxu0 0.0
        %1602 = vmatprep.subr.mxu0 0.0
        %1603 = vmatpush1.msra.mxu0 0.0
        %1604 = vmatprep.subr.mxu0 0.0
        %1605 = vmatpush1.msra.mxu0 0.0
        %1606 = vmatprep.subr.mxu0 0.0
        %1607 = vmatpush1.msra.mxu0 0.0
        %1608 = vmatprep.subr.mxu0 0.0
        %1609 = vmatpush1.msra.mxu0 0.0
        %1610 = vmatprep.subr.mxu0 0.0
        %1611 = vmatpush1.msra.mxu0 0.0
        %1612 = vmatprep.subr.mxu0 0.0
        %1613 = vmatpush1.msra.mxu0 0.0
        %1614 = vmatprep.subr.mxu0 0.0
        %1615 = vmatpush1.msra.mxu0 0.0
        %1616 = vmatprep.subr.mxu0 0.0
        %1617 = vmatpush1.msra.mxu0 0.0
        %1618 = vmatprep.subr.mxu0 0.0
        %1619 = vmatpush1.msra.mxu0 0.0
        %1620 = vmatprep.subr.mxu0 0.0
        %1621 = vmatpush1.msra.mxu0 0.0
        %1622 = vmatprep.subr.mxu0 0.0
        %1623 = vmatpush1.msra.mxu0 0.0
        %1624 = vmatprep.subr.mxu0 0.0
        %1625 = vmatpush1.msra.mxu0 0.0
        %1626 = vmatprep.subr.mxu0 0.0
        %1627 = vmatpush1.msra.mxu0 0.0
        %1628 = vmatprep.subr.mxu0 0.0
        %1629 = vmatpush1.msra.mxu0 %v1447
        %1630 = vmatprep.subr.mxu0 0.0
        %1631 = vmatpush2.msra.mxu0 0.0
        %1632 = vmatprep.subr.mxu0 0.0
        %1633 = vmatpush2.msra.mxu0 0.0
        %1634 = vmatprep.subr.mxu0 0.0
        %1635 = vmatpush2.msra.mxu0 0.0
        %1636 = vmatprep.subr.mxu0 0.0
        %1637 = vmatpush2.msra.mxu0 0.0
        %1638 = vmatprep.subr.mxu0 0.0
        %1639 = vmatpush2.msra.mxu0 0.0
        %1640 = vmatprep.subr.mxu0 0.0
        %1641 = vmatpush2.msra.mxu0 0.0
        %1642 = vmatprep.subr.mxu0 0.0
        %1643 = vmatpush2.msra.mxu0 0.0
        %1644 = vmatprep.subr.mxu0 0.0
        %1645 = vmatpush2.msra.mxu0 0.0
        %1646 = vmatprep.subr.mxu0 0.0
        %1647 = vmatpush2.msra.mxu0 0.0
        %1648 = vmatprep.subr.mxu0 0.0
        %1649 = vmatpush2.msra.mxu0 0.0
        %1650 = vmatprep.subr.mxu0 0.0
        %1651 = vmatpush2.msra.mxu0 0.0
        %1652 = vmatprep.subr.mxu0 0.0
        %1653 = vmatpush2.msra.mxu0 0.0
        %1654 = vmatprep.subr.mxu0 0.0
        %1655 = vmatpush2.msra.mxu0 0.0
        %1656 = vmatprep.subr.mxu0 0.0
        %1657 = vmatpush2.msra.mxu0 0.0
        %1658 = vmatprep.subr.mxu0 0.0
        %1659 = vmatpush2.msra.mxu0 0.0
        %1660 = vmatprep.subr.mxu0 0.0
        %1661 = vmatpush2.msra.mxu0 0.0
        %1662 = vmatprep.mubr.f32.mxu0 0.0
        %1663 = vmatmul.mubr.f32.gmra.mxu0 %v1596
        %v1664 = vpop.f32.mrf.mxu0
        %v1665 = vadd.f32 0.0, %v1664
        %v1666 = vpop.f32.mrf.mxu0
        %1667 = vdwg.mxu0
        %v1668 = vadd.f32 %v1592, %v1665
        %v1670 = vsel %vm812, %v1442, 0
        %1672 = vmatprep.subr.mxu0 0.0
        %1673 = vmatpush1.msra.mxu0 0.0
        %1674 = vmatprep.subr.mxu0 0.0
        %1675 = vmatpush1.msra.mxu0 0.0
        %1676 = vmatprep.subr.mxu0 0.0
        %1677 = vmatpush1.msra.mxu0 0.0
        %1678 = vmatprep.subr.mxu0 0.0
        %1679 = vmatpush1.msra.mxu0 0.0
        %1680 = vmatprep.subr.mxu0 0.0
        %1681 = vmatpush1.msra.mxu0 0.0
        %1682 = vmatprep.subr.mxu0 0.0
        %1683 = vmatpush1.msra.mxu0 0.0
        %1684 = vmatprep.subr.mxu0 0.0
        %1685 = vmatpush1.msra.mxu0 0.0
        %1686 = vmatprep.subr.mxu0 0.0
        %1687 = vmatpush1.msra.mxu0 0.0
        %1688 = vmatprep.subr.mxu0 0.0
        %1689 = vmatpush1.msra.mxu0 0.0
        %1690 = vmatprep.subr.mxu0 0.0
        %1691 = vmatpush1.msra.mxu0 0.0
        %1692 = vmatprep.subr.mxu0 0.0
        %1693 = vmatpush1.msra.mxu0 0.0
        %1694 = vmatprep.subr.mxu0 0.0
        %1695 = vmatpush1.msra.mxu0 0.0
        %1696 = vmatprep.subr.mxu0 0.0
        %1697 = vmatpush1.msra.mxu0 0.0
        %1698 = vmatprep.subr.mxu0 0.0
        %1699 = vmatpush1.msra.mxu0 0.0
        %1700 = vmatprep.subr.mxu0 0.0
        %1701 = vmatpush1.msra.mxu0 0.0
        %1702 = vmatprep.subr.mxu0 0.0
        %1703 = vmatpush1.msra.mxu0 %v1448
        %1704 = vmatprep.subr.mxu0 0.0
        %1705 = vmatpush2.msra.mxu0 0.0
        %1706 = vmatprep.subr.mxu0 0.0
        %1707 = vmatpush2.msra.mxu0 0.0
        %1708 = vmatprep.subr.mxu0 0.0
        %1709 = vmatpush2.msra.mxu0 0.0
        %1710 = vmatprep.subr.mxu0 0.0
        %1711 = vmatpush2.msra.mxu0 0.0
        %1712 = vmatprep.subr.mxu0 0.0
        %1713 = vmatpush2.msra.mxu0 0.0
        %1714 = vmatprep.subr.mxu0 0.0
        %1715 = vmatpush2.msra.mxu0 0.0
        %1716 = vmatprep.subr.mxu0 0.0
        %1717 = vmatpush2.msra.mxu0 0.0
        %1718 = vmatprep.subr.mxu0 0.0
        %1719 = vmatpush2.msra.mxu0 0.0
        %1720 = vmatprep.subr.mxu0 0.0
        %1721 = vmatpush2.msra.mxu0 0.0
        %1722 = vmatprep.subr.mxu0 0.0
        %1723 = vmatpush2.msra.mxu0 0.0
        %1724 = vmatprep.subr.mxu0 0.0
        %1725 = vmatpush2.msra.mxu0 0.0
        %1726 = vmatprep.subr.mxu0 0.0
        %1727 = vmatpush2.msra.mxu0 0.0
        %1728 = vmatprep.subr.mxu0 0.0
        %1729 = vmatpush2.msra.mxu0 0.0
        %1730 = vmatprep.subr.mxu0 0.0
        %1731 = vmatpush2.msra.mxu0 0.0
        %1732 = vmatprep.subr.mxu0 0.0
        %1733 = vmatpush2.msra.mxu0 0.0
        %1734 = vmatprep.subr.mxu0 0.0
        %1735 = vmatpush2.msra.mxu0 0.0
        %1736 = vmatprep.mubr.f32.mxu0 0.0
        %1737 = vmatmul.mubr.f32.gmra.mxu0 %v1670
        %v1738 = vpop.f32.mrf.mxu0
        %v1739 = vadd.f32 0.0, %v1738
        %v1740 = vpop.f32.mrf.mxu0
        %1741 = vdwg.mxu0
        %v1742 = vadd.f32 %v1668, %v1739
        %v1743 = vld [vmem:[%s10] sm:$0x1]
        %v1745 = vlaneseq
        %v1746 = vshrl.u32 %v1745, 7
        %v1747 = vsub.s32 0, %v1746
        %v1748 = vrot.slane %v1743, %v1747
        %v1750 = vadd.f32 %v1742, %v1748
        %1751 = vst.msk [vmem:[%s530] sm:$0xff] %vm545, %v1750
        %s1752 = sand.u32 %s287, 1
        %s1753 = scalar_lea.sflag [#allocation4], %s1752
        %s1754 = sand.u32 %s287, 1
        %s1755 = smul.addr %s1754, 8
        %s1756 = scalar_lea.vmem [#allocation14], %s1755
        // Predicated region
        $region93: #{tpu_custom_call.1} parent=63 // pred_check
          %p1757 = pneg %p297
        $region94: #{tpu_custom_call.1} parent=63 // pred_check_branch
          %1759 = sbr.rel (%p1757) target = $region96
        $region95: #{tpu_custom_call.1} parent=63 // pred_region
          %s1761 = ssub.s32 128, 128
          %1762 = vsyncadd %s1753, %s1761
          %s1763 = smul.addr %s33, 128
          %s1764 = scalar_lea.hbm %s11, %s1763
          %s1766 = sshll.u32 %s1756, 4
          %s1767 = int_to_ptr.vmem [resolvable:$true] %s1766
          %1769 = dma.vmem_to_hbm [thread:$0]  %s1767, 128, %s1764, %s1753
        $region96: #{tpu_custom_call.1} parent=63 // pred_fallthru
          _
      $region64: #{tpu_custom_call.1} parent=5 // pred_fallthru
        _
      %p1770 = scmp.le.s32.totalorder 2, %s28
      // Predicated region
      $region97: #{tpu_custom_call.1} parent=5 // pred_check
        %p1771 = pneg %p1770
      $region98: #{tpu_custom_call.1} parent=5 // pred_check_branch
        %1773 = sbr.rel (%p1771) target = $region100
      $region99: #{tpu_custom_call.1} parent=5 // pred_region
        %s1774 = ssub.s32 %s28, 2
        // Predicated region
        $region101: #{tpu_custom_call.1} parent=99 // pred_check
          %p1775 = pneg %p303
        $region102: #{tpu_custom_call.1} parent=99 // pred_check_branch
          %1777 = sbr.rel (%p1775) target = $region104
        $region103: #{tpu_custom_call.1} parent=99 // pred_region
          %s1778 = sand.u32 %s288, 1
          %s1779 = scalar_lea.sflag [#allocation4], %s1778
          %s1780 = sand.u32 %s288, 1
          %s1781 = smul.addr %s1780, 8
          %s1782 = scalar_lea.vmem [#allocation14], %s1781
          %1783 = dma.done %s1779, 128
        $region104: #{tpu_custom_call.1} parent=99 // pred_fallthru
          _
      $region100: #{tpu_custom_call.1} parent=5 // pred_fallthru
        _
    $region6: #{tpu_custom_call.1} parent=1 // loop_footer
      %s32 = sadd.s32 1, %s28
    $region7: #{tpu_custom_call.1} parent=1 // loop_footer_branch
      %27 = sbr.rel target = $region3
    $region8: #{tpu_custom_call.1} parent=1 // loop_exit
      _
    %1784 = vsyncpa [#allocation3], 1
    %s1785 = scalar_lea.sflag [#allocation3], 1
    %1786 = vsyncpa %s1785, 1
    %1787 = vsyncpa [#allocation6], 1
    %s1788 = scalar_lea.sflag [#allocation6], 1
    %1789 = vsyncpa %s1788, 1
    %1790 = vsyncpa [#allocation9], 1
    %1791 = vsyncpa [#allocation12], 1
    %1792 = vsyncpa [#allocation4], 1
    %s1793 = scalar_lea.sflag [#allocation4], 1
    %1794 = vsyncpa %s1793, 1

</llo_original>
